<compile_context>
chip_gen: v7x
topology: tpu7x:2x2x1
jax: 0.10.0
libtpu: 0.0.40
codegen_flags: <defaults>
</compile_context>

<pallas_src>
import functools

import jax
import jax.numpy as jnp
from jax.experimental import pallas as pl
from jax.experimental.pallas import tpu as pltpu


def _round_up(x, m):
    return ((x + m - 1) // m) * m


def _cdiv(a, b):
    return (a + b - 1) // b


def adapt_sage_kernel(
    adj_ref,        # [TM, TK]              int8  (0/1 adjacency tile)
    hidden_ref,     # [n_src_p, in_feats]   bf16 (resident)  or [TK, in_feats]
    hs_ref,         # [2, TK]               f32  (row 0: hu, row 1: src_scale)
    dst_ref,        # [TM, 2]               f32  (col 0: hv, col 1: norm_deg_dst)
    w_ref,          # [in_feats, out_feats] bf16 (fc_neigh.weight^T)
    b_ref,          # [1, out_feats]        f32  (fc_neigh.bias)
    out_ref,        # [TM, out_feats]       f32
    *scratch,       # optional VMEM [TM, in_feats] f32 (only if in != out feats)
    tk,
    hidden_resident,
):
    acc_ref = scratch[0] if scratch else out_ref   # out block is k-resident
    k = pl.program_id(1)

    @pl.when(k == 0)
    def _():
        acc_ref[...] = jnp.zeros_like(acc_ref)

    hs = hs_ref[...]                                   # [2, TK] f32
    hu = hs[0:1, :]                                    # [1, TK]
    ss = hs[1:2, :]                                    # [1, TK]  norm_deg_src/(q*E)
    hv = dst_ref[:, 0:1]                               # [TM, 1]

    # Edge attention tile (dst-side scale factored out, 1/(q*E) pre-folded).
    # f32 VPU math (portable across v5e/v6e/v7x), int8 adjacency mask, one
    # cast to bf16 at the MXU boundary.
    att = ss * (jnp.maximum(hu + hv, 0.0) + 0.1)       # [TM, TK] f32
    att = jnp.where(adj_ref[...] != 0, att, 0.0).astype(jnp.bfloat16)

    if hidden_resident:
        start = pl.multiple_of(k * tk, 128)
        hblk = hidden_ref[pl.ds(start, tk), :]         # [TK, in_feats] bf16
    else:
        hblk = hidden_ref[...]

    # Weighted-sum neighbor aggregation (dgl.function.sum), f32 accumulation.
    acc_ref[...] += jnp.dot(att, hblk, preferred_element_type=jnp.float32)

    @pl.when(k == pl.num_programs(1) - 1)
    def _():
        # Apply dst-side degree normalization once, then fc_neigh (+ bias).
        ndd = dst_ref[:, 1:2]                          # [TM, 1]
        neigh = (ndd * acc_ref[...]).astype(jnp.bfloat16)
        out_ref[...] = (jnp.dot(neigh, w_ref[...],
                                preferred_element_type=jnp.float32)
                        + b_ref[...])


@jax.jit
def adapt_sage_conv(adj, hidden_feat, node_feat_src, node_feat_dst,
                    sample_weights, norm_deg_src, norm_deg_dst, q_probs,
                    w_neigh, b_neigh):
    """Dense AdaptSAGEConv forward.

    adj:            [n_dst, n_src] float32 0/1
    hidden_feat:    [n_src, in_feats]
    node_feat_src:  [n_src, f_node]
    node_feat_dst:  [n_dst, f_node]
    sample_weights: [f_node, 2]
    norm_deg_src:   [n_src]
    norm_deg_dst:   [n_dst]
    q_probs:        [n_src]
    w_neigh:        [out_feats, in_feats]   (PyTorch nn.Linear layout)
    b_neigh:        [out_feats]
    returns:        [n_dst, out_feats] float32
    """
    n_dst, n_src = adj.shape
    in_feats = hidden_feat.shape[1]
    out_feats = w_neigh.shape[0]

    # --- host-side (cheap O(n) / O(n*f_node)) precompute -------------------
    hu = node_feat_src @ sample_weights[:, 0]                  # [n_src]
    hv = node_feat_dst @ sample_weights[:, 1]                  # [n_dst]
    n_edges = jnp.maximum(jnp.sum(adj), 1.0)                   # guard for E == 0
    src_scale = norm_deg_src / (q_probs * n_edges)             # fold 1/(q*E)

    # --- tiling: large tiles, padding bounded to one sublane group ---------
    TM_MAX, TK_MAX = 512, 2048
    n_tiles_m = max(1, _cdiv(n_dst, TM_MAX))
    TM = _round_up(_cdiv(n_dst, n_tiles_m), 32)      # mult of 32 (int8 sublanes)
    n_tiles_k = max(1, _cdiv(n_src, TK_MAX))
    TK = _round_up(_cdiv(n_src, n_tiles_k), 128)     # lane-aligned
    n_dst_p = _round_up(n_dst, TM)
    n_src_p = _round_up(n_src, TK)
    pd, ps = n_dst_p - n_dst, n_src_p - n_src
    grid = (n_dst_p // TM, n_src_p // TK)

    # Keep hidden_feat fully resident in VMEM when it fits (removes grid[0]
    # re-streams of the feature matrix from HBM).
    hidden_resident = (n_src_p * in_feats * 2) <= (8 << 20)

    adj_p = jnp.pad(adj, ((0, pd), (0, ps))).astype(jnp.int8)
    hidden_p = jnp.pad(hidden_feat, ((0, ps), (0, 0))).astype(jnp.bfloat16)
    hs_p = jnp.stack([jnp.pad(hu, (0, ps)),
                      jnp.pad(src_scale, (0, ps))], axis=0).astype(jnp.float32)
    dst_p = jnp.stack([jnp.pad(hv, (0, pd)),
                       jnp.pad(norm_deg_dst, (0, pd))], axis=1).astype(jnp.float32)
    w_t = w_neigh.T.astype(jnp.bfloat16)                       # [in_feats, out_feats]
    b = b_neigh.reshape(1, out_feats).astype(jnp.float32)

    if hidden_resident:
        hid_spec = pl.BlockSpec((n_src_p, in_feats), lambda i, k: (0, 0))
        hid_buf_bytes = 2 * n_src_p * in_feats * 2
        hid_hbm_bytes = hidden_p.size * 2
    else:
        hid_spec = pl.BlockSpec((TK, in_feats), lambda i, k: (k, 0))
        hid_buf_bytes = 2 * TK * in_feats * 2
        hid_hbm_bytes = hidden_p.size * 2 * grid[0]

    acc_in_out = (in_feats == out_feats)
    scratch_shapes = [] if acc_in_out else [pltpu.VMEM((TM, in_feats), jnp.float32)]

    # VMEM budget sized to ~2x the double-buffered working set (v7x: 64 MiB/TC).
    est = (2 * TM * TK                      # adj (int8), double-buffered
           + hid_buf_bytes
           + 2 * 2 * TK * 4                 # hu / src_scale
           + 2 * TM * 2 * 4                 # hv / norm_deg_dst
           + 2 * in_feats * out_feats * 2   # W^T
           + 2 * out_feats * 4              # bias
           + 2 * TM * out_feats * 4         # out block
           + (0 if acc_in_out else TM * in_feats * 4))
    vmem_limit = int(min(max(2 * est, 16 << 20), 64 << 20))

    cost = pl.CostEstimate(
        flops=2 * n_dst_p * n_src_p * in_feats
              + 2 * n_dst_p * in_feats * out_feats,
        transcendentals=0,
        bytes_accessed=adj_p.size                       # int8
                       + hid_hbm_bytes
                       + hs_p.size * 4 * grid[0]
                       + dst_p.size * 4
                       + w_t.size * 2 + b.size * 4
                       + n_dst_p * out_feats * 4,
    )

    kernel = functools.partial(adapt_sage_kernel, tk=TK,
                               hidden_resident=hidden_resident)

    out_p = pl.pallas_call(
        kernel,
        out_shape=jax.ShapeDtypeStruct((n_dst_p, out_feats), jnp.float32),
        grid_spec=pltpu.PrefetchScalarGridSpec(
            num_scalar_prefetch=0,
            grid=grid,
            in_specs=[
                pl.BlockSpec((TM, TK), lambda i, k: (i, k)),          # adj (int8)
                hid_spec,                                             # hidden (bf16)
                pl.BlockSpec((2, TK), lambda i, k: (0, k)),           # hu / src_scale
                pl.BlockSpec((TM, 2), lambda i, k: (i, 0)),           # hv / norm_deg_dst
                pl.BlockSpec((in_feats, out_feats), lambda i, k: (0, 0)),  # W^T
                pl.BlockSpec((1, out_feats), lambda i, k: (0, 0)),    # bias
            ],
            out_specs=pl.BlockSpec((TM, out_feats), lambda i, k: (i, 0)),
            scratch_shapes=scratch_shapes,
        ),
        compiler_params=pltpu.CompilerParams(
            dimension_semantics=("parallel", "arbitrary"),
            vmem_limit_bytes=vmem_limit,
        ),
        cost_estimate=cost,
    )(adj_p, hidden_p, hs_p, dst_p, w_t, b)

    return out_p[:n_dst]


def adapt_sage_conv_ref(adj, hidden_feat, node_feat_src, node_feat_dst,
                        sample_weights, norm_deg_src, norm_deg_dst, q_probs,
                        w_neigh, b_neigh):
    """Plain-JAX f32 reference (mirrors the PyTorch edge-wise semantics)."""
    hu = node_feat_src @ sample_weights[:, 0]
    hv = node_feat_dst @ sample_weights[:, 1]
    n_edges = jnp.sum(adj)
    att = (norm_deg_dst[:, None] * norm_deg_src[None, :]
           * (jax.nn.relu(hu[None, :] + hv[:, None]) + 0.1)
           / q_probs[None, :] / n_edges)
    att = adj * att
    neigh = att @ hidden_feat
    return neigh @ w_neigh.T + b_neigh[None, :]


if __name__ == "__main__":
    key = jax.random.PRNGKey(0)
    k = jax.random.split(key, 10)

    # Small synthetic bipartite block (non-multiple dims to exercise padding
    # and the adaptive tile selection).
    n_src, n_dst = 640, 320
    f_node, in_feats, out_feats = 32, 128, 128

    adj = jax.random.bernoulli(k[0], p=0.1, shape=(n_dst, n_src)).astype(jnp.float32)
    hidden_feat = jax.random.normal(k[1], (n_src, in_feats), dtype=jnp.float32)
    node_feat_src = jax.random.normal(k[2], (n_src, f_node), dtype=jnp.float32)
    node_feat_dst = jax.random.normal(k[3], (n_dst, f_node), dtype=jnp.float32)
    sample_weights = jax.random.normal(k[4], (f_node, 2), dtype=jnp.float32)

    # norm_deg = 1/sqrt(in_degree + 1); q_probs are sampling probabilities > 0.
    deg_src = jax.random.randint(k[5], (n_src,), 0, 10).astype(jnp.float32)
    deg_dst = jax.random.randint(k[6], (n_dst,), 0, 10).astype(jnp.float32)
    norm_deg_src = 1.0 / jnp.sqrt(deg_src + 1.0)
    norm_deg_dst = 1.0 / jnp.sqrt(deg_dst + 1.0)
    q_probs = jax.random.uniform(k[7], (n_src,), minval=0.1, maxval=1.0,
                                 dtype=jnp.float32)

    # fc_neigh: xavier_uniform with relu gain (deterministic synthetic init).
    gain = jnp.sqrt(2.0)
    limit = gain * jnp.sqrt(6.0 / (in_feats + out_feats))
    w_neigh = jax.random.uniform(k[8], (out_feats, in_feats),
                                 minval=-limit, maxval=limit, dtype=jnp.float32)
    b_limit = 1.0 / jnp.sqrt(in_feats)
    b_neigh = jax.random.uniform(k[9], (out_feats,),
                                 minval=-b_limit, maxval=b_limit,
                                 dtype=jnp.float32)

    out = adapt_sage_conv(adj, hidden_feat, node_feat_src, node_feat_dst,
                          sample_weights, norm_deg_src, norm_deg_dst, q_probs,
                          w_neigh, b_neigh)
    out = jax.block_until_ready(out)

    ref = adapt_sage_conv_ref(adj, hidden_feat, node_feat_src, node_feat_dst,
                              sample_weights, norm_deg_src, norm_deg_dst,
                              q_probs, w_neigh, b_neigh)
    assert out.shape == (n_dst, out_feats)
    # bf16 MXU inputs with f32 accumulation: compare against the f32 reference
    # at a correspondingly looser tolerance.
    assert jnp.allclose(out, ref, rtol=3e-2, atol=3e-2), (
        float(jnp.max(jnp.abs(out - ref))))

    # TODO(synk): var_loss / norm_adj branch and DGL graph bookkeeping
    # (layer_mappings, in_degrees lookup, block_aux_data) are host-side glue,
    # not kernel work.
    print("KERNEL_OK")
</pallas_src>

<mosaic_0001>
module attributes {stable_mosaic.version = 11 : i64} {
  func.func @adapt_sage_kernel(%arg0: i32, %arg1: i32, %arg2: memref<320x640xi8, #tpu.memory_space<vmem>>, %arg3: memref<640x128xbf16, #tpu.memory_space<vmem>>, %arg4: memref<2x640xf32, #tpu.memory_space<vmem>>, %arg5: memref<320x2xf32, #tpu.memory_space<vmem>>, %arg6: memref<128x128xbf16, #tpu.memory_space<vmem>>, %arg7: memref<1x128xf32, #tpu.memory_space<vmem>>, %arg8: memref<320x128xf32, #tpu.memory_space<vmem>>) attributes {dimension_semantics = [#tpu.dimension_semantics<parallel>, #tpu.dimension_semantics<arbitrary>], iteration_bounds = array<i64: 1, 1>, scalar_prefetch = 0 : i64, scratch_operands = 0 : i64, tpu.core_type = #tpu.core_type<tc>, window_params = [{transform_indices = @transform_0, window_bounds = array<i64: 320, 640>}, {pipeline_mode = #tpu.pipeline_mode<synchronous>, transform_indices = @transform_1, window_bounds = array<i64: 640, 128>}, {transform_indices = @transform_2, window_bounds = array<i64: 2, 640>}, {transform_indices = @transform_3, window_bounds = array<i64: 320, 2>}, {pipeline_mode = #tpu.pipeline_mode<synchronous>, transform_indices = @transform_4, window_bounds = array<i64: 128, 128>}, {pipeline_mode = #tpu.pipeline_mode<synchronous>, transform_indices = @transform_5, window_bounds = array<i64: 1, 128>}, {transform_indices = @transform_6, window_bounds = array<i64: 320, 128>}]} {
    %c0_i32 = arith.constant 0 : i32
    %0 = arith.cmpi eq, %arg1, %c0_i32 : i32
    %1 = arith.extui %0 : i1 to i32
    %c0_i32_0 = arith.constant 0 : i32
    %2 = arith.cmpi ne, %1, %c0_i32_0 : i32
    scf.if %2 {
      %cst_16 = arith.constant 0.000000e+00 : f32
      %33 = vector.broadcast %cst_16 : f32 to vector<320x128xf32>
      %c0_17 = arith.constant 0 : index
      %c0_18 = arith.constant 0 : index
      %34 = vector.load %arg8[%c0_17, %c0_18] : memref<320x128xf32, #tpu.memory_space<vmem>>, vector<320x128xf32>
      tpu.vector_store %arg8[%c0_17, %c0_18], %33 {strides = array<i32>} : memref<320x128xf32, #tpu.memory_space<vmem>>, vector<320x128xf32>,
    } else {
    }
    %c0 = arith.constant 0 : index
    %c0_1 = arith.constant 0 : index
    %3 = vector.load %arg4[%c0, %c0_1] : memref<2x640xf32, #tpu.memory_space<vmem>>, vector<2x640xf32>
    %4 = vector.extract_strided_slice %3 {offsets = [0, 0], sizes = [1, 640], strides = [1, 1]} : vector<2x640xf32> to vector<1x640xf32>
    %5 = vector.extract_strided_slice %3 {offsets = [1, 0], sizes = [1, 640], strides = [1, 1]} : vector<2x640xf32> to vector<1x640xf32>
    %c0_2 = arith.constant 0 : index
    %c0_3 = arith.constant 0 : index
    %6 = vector.load %arg5[%c0_2, %c0_3] : memref<320x2xf32, #tpu.memory_space<vmem>>, vector<320x1xf32>
    %7 = vector.broadcast %4 : vector<1x640xf32> to vector<320x640xf32>
    %8 = vector.broadcast %6 : vector<320x1xf32> to vector<320x640xf32>
    %9 = arith.addf %7, %8 : vector<320x640xf32>
    %cst = arith.constant 0.000000e+00 : f32
    %10 = vector.broadcast %cst : f32 to vector<320x640xf32>
    %11 = arith.maximumf %9, %10 : vector<320x640xf32>
    %cst_4 = arith.constant 1.000000e-01 : f32
    %12 = vector.broadcast %cst_4 : f32 to vector<320x640xf32>
    %13 = arith.addf %11, %12 : vector<320x640xf32>
    %14 = vector.broadcast %5 : vector<1x640xf32> to vector<320x640xf32>
    %15 = arith.mulf %14, %13 : vector<320x640xf32>
    %c0_5 = arith.constant 0 : index
    %c0_6 = arith.constant 0 : index
    %16 = vector.load %arg2[%c0_5, %c0_6] : memref<320x640xi8, #tpu.memory_space<vmem>>, vector<320x640xi8>
    %c0_i8 = arith.constant 0 : i8
    %17 = vector.broadcast %c0_i8 : i8 to vector<320x640xi8>
    %18 = arith.cmpi ne, %16, %17 : vector<320x640xi8>
    %cst_7 = arith.constant 0.000000e+00 : f32
    %19 = vector.broadcast %cst_7 : f32 to vector<320x640xf32>
    %20 = arith.select %18, %15, %19 : vector<320x640xi1>, vector<320x640xf32>
    %21 = arith.truncf %20 : vector<320x640xf32> to vector<320x640xbf16>
    %c640_i32 = arith.constant 640 : i32
    %22 = arith.muli %arg1, %c640_i32 : i32
    %23 = tpu.assume_multiple %22, 128 : i32
    %24 = arith.index_cast %23 : i32 to index
    %c0_8 = arith.constant 0 : index
    %25 = vector.load %arg3[%24, %c0_8] : memref<640x128xbf16, #tpu.memory_space<vmem>>, vector<640x128xbf16>
    %c0_9 = arith.constant 0 : index
    %c0_10 = arith.constant 0 : index
    %26 = vector.load %arg8[%c0_9, %c0_10] : memref<320x128xf32, #tpu.memory_space<vmem>>, vector<320x128xf32>
    %cst_11 = arith.constant dense<0.000000e+00> : vector<320x128xf32>
    %27 = tpu.matmul %21, %25, %cst_11 {dimension_numbers = #tpu.dot_dimension_numbers<[1], [0], [0], [1], [0, 0, 1, 1], [], []>} : vector<320x640xbf16>, vector<640x128xbf16>, vector<320x128xf32> -> vector<320x128xf32>
    %28 = arith.addf %26, %27 : vector<320x128xf32>
    %c0_12 = arith.constant 0 : index
    %c0_13 = arith.constant 0 : index
    %29 = vector.load %arg8[%c0_12, %c0_13] : memref<320x128xf32, #tpu.memory_space<vmem>>, vector<320x128xf32>
    tpu.vector_store %arg8[%c0_12, %c0_13], %28 {strides = array<i32>} : memref<320x128xf32, #tpu.memory_space<vmem>>, vector<320x128xf32>,
    %c0_i32_14 = arith.constant 0 : i32
    %30 = arith.cmpi eq, %arg1, %c0_i32_14 : i32
    %31 = arith.extui %30 : i1 to i32
    %c0_i32_15 = arith.constant 0 : i32
    %32 = arith.cmpi ne, %31, %c0_i32_15 : i32
    scf.if %32 {
      %c0_16 = arith.constant 0 : index
      %c1 = arith.constant 1 : index
      %33 = vector.load %arg5[%c0_16, %c1] : memref<320x2xf32, #tpu.memory_space<vmem>>, vector<320x1xf32>
      %c0_17 = arith.constant 0 : index
      %c0_18 = arith.constant 0 : index
      %34 = vector.load %arg8[%c0_17, %c0_18] : memref<320x128xf32, #tpu.memory_space<vmem>>, vector<320x128xf32>
      %35 = vector.broadcast %33 : vector<320x1xf32> to vector<320x128xf32>
      %36 = arith.mulf %35, %34 : vector<320x128xf32>
      %37 = arith.truncf %36 : vector<320x128xf32> to vector<320x128xbf16>
      %c0_19 = arith.constant 0 : index
      %c0_20 = arith.constant 0 : index
      %38 = vector.load %arg6[%c0_19, %c0_20] : memref<128x128xbf16, #tpu.memory_space<vmem>>, vector<128x128xbf16>
      %cst_21 = arith.constant dense<0.000000e+00> : vector<320x128xf32>
      %39 = tpu.matmul %37, %38, %cst_21 {dimension_numbers = #tpu.dot_dimension_numbers<[1], [0], [0], [1], [0, 0, 1, 1], [], []>} : vector<320x128xbf16>, vector<128x128xbf16>, vector<320x128xf32> -> vector<320x128xf32>
      %c0_22 = arith.constant 0 : index
      %c0_23 = arith.constant 0 : index
      %40 = vector.load %arg7[%c0_22, %c0_23] : memref<1x128xf32, #tpu.memory_space<vmem>>, vector<1x128xf32>
      %41 = vector.broadcast %40 : vector<1x128xf32> to vector<320x128xf32>
      %42 = arith.addf %39, %41 : vector<320x128xf32>
      %c0_24 = arith.constant 0 : index
      %c0_25 = arith.constant 0 : index
      %43 = vector.load %arg8[%c0_24, %c0_25] : memref<320x128xf32, #tpu.memory_space<vmem>>, vector<320x128xf32>
      tpu.vector_store %arg8[%c0_24, %c0_25], %42 {strides = array<i32>} : memref<320x128xf32, #tpu.memory_space<vmem>>, vector<320x128xf32>,
    } else {
    }
    return
  }
  func.func @transform_0(%arg0: i32, %arg1: i32) -> (i32, i32) {
    %c0_i32 = arith.constant 0 : i32
    return %arg0, %arg1 : i32, i32
  }
  func.func @transform_1(%arg0: i32, %arg1: i32) -> (i32, i32) {
    %c0_i32 = arith.constant 0 : i32
    %c0_i32_0 = arith.constant 0 : i32
    %c0_i32_1 = arith.constant 0 : i32
    return %c0_i32, %c0_i32_0 : i32, i32
  }
  func.func @transform_2(%arg0: i32, %arg1: i32) -> (i32, i32) {
    %c0_i32 = arith.constant 0 : i32
    %c0_i32_0 = arith.constant 0 : i32
    return %c0_i32, %arg1 : i32, i32
  }
  func.func @transform_3(%arg0: i32, %arg1: i32) -> (i32, i32) {
    %c0_i32 = arith.constant 0 : i32
    %c0_i32_0 = arith.constant 0 : i32
    return %arg0, %c0_i32 : i32, i32
  }
  func.func @transform_4(%arg0: i32, %arg1: i32) -> (i32, i32) {
    %c0_i32 = arith.constant 0 : i32
    %c0_i32_0 = arith.constant 0 : i32
    %c0_i32_1 = arith.constant 0 : i32
    return %c0_i32, %c0_i32_0 : i32, i32
  }
  func.func @transform_5(%arg0: i32, %arg1: i32) -> (i32, i32) {
    %c0_i32 = arith.constant 0 : i32
    %c0_i32_0 = arith.constant 0 : i32
    %c0_i32_1 = arith.constant 0 : i32
    return %c0_i32, %c0_i32_0 : i32, i32
  }
  func.func @transform_6(%arg0: i32, %arg1: i32) -> (i32, i32) {
    %c0_i32 = arith.constant 0 : i32
    %c0_i32_0 = arith.constant 0 : i32
    return %arg0, %c0_i32 : i32, i32
  }
}

</mosaic_0001>

<llo_original>
// kernel: adapt_sage_conv.1
$region0: #{adapt_sage_conv.1}
  #allocation0 [shape = 'u32[]', space=smem, size = 0x4, offset = 0x4, fixed_abs, tag = 'smem constant byte address 0x4 - core index']
  #allocation1 [shape = 'u32[144,128]{1,0:T(1,128)}', space=vmem, size = 0x12000, scoped, tag = 'internal scratch']
  %s0 = inlined_call_operand.vmem [shape: s8[320,640], index: 0, kind: input, shape index: {}]
  %s1 = inlined_call_operand.vmem [shape: bf16[640,128], index: 1, kind: input, shape index: {}]
  %s2 = inlined_call_operand.vmem [shape: f32[2,640], index: 2, kind: input, shape index: {}]
  %s3 = inlined_call_operand.vmem [shape: f32[320,2], index: 3, kind: input, shape index: {}]
  %s4 = inlined_call_operand.vmem [shape: bf16[128,128], index: 4, kind: input, shape index: {}]
  %s5 = inlined_call_operand.vmem [shape: f32[1,128], index: 5, kind: input, shape index: {}]
  %s6 = inlined_call_operand.hbm [shape: f32[320,128], index: 6, kind: output, shape index: {}]
  %s7 = sld [smem:[#allocation0]]
  $region42: #{adapt_sage_conv.1} parent=0
    _
  %s9 = ssub.s32 1, %s7
  %s10 = scalar_select 0, %s9, %s7
  $region1: #{adapt_sage_conv.1} parent=0
    #allocation2 [shape = 'u8[163840]{0}', space=vmem, size = 0x28000, scoped, tag = 'output window, operand 0, single buffered']
    #allocation3 [shape = 's32[1]{0}', space=sflag, size = 0x4, scoped, tag = 'scoped memory for adapt_sage_conv.1']
    %11 = vsyncpa [#allocation3], 0
    // Predicated region
    $region2: #{adapt_sage_conv.1} parent=1 // pred_check
      _
    $region3: #{adapt_sage_conv.1} parent=1 // pred_check_branch
      %13 = sbr.rel (0) target = $region5
    $region4: #{adapt_sage_conv.1} parent=1 // pred_region
      _
    $region5: #{adapt_sage_conv.1} parent=1 // pred_fallthru
      _
    // Predicated region
    $region6: #{adapt_sage_conv.1} parent=1 // pred_check
      _
    $region7: #{adapt_sage_conv.1} parent=1 // pred_check_branch
      %15 = sbr.rel (0) target = $region9
    $region8: #{adapt_sage_conv.1} parent=1 // pred_region
      _
    $region9: #{adapt_sage_conv.1} parent=1 // pred_fallthru
      _
    // Predicated region
    $region10: #{adapt_sage_conv.1} parent=1 // pred_check
      _
    $region11: #{adapt_sage_conv.1} parent=1 // pred_check_branch
      %17 = sbr.rel (0) target = $region13
    $region12: #{adapt_sage_conv.1} parent=1 // pred_region
      _
    $region13: #{adapt_sage_conv.1} parent=1 // pred_fallthru
      _
    // Predicated region
    $region14: #{adapt_sage_conv.1} parent=1 // pred_check
      _
    $region15: #{adapt_sage_conv.1} parent=1 // pred_check_branch
      %19 = sbr.rel (0) target = $region17
    $region16: #{adapt_sage_conv.1} parent=1 // pred_region
      _
    $region17: #{adapt_sage_conv.1} parent=1 // pred_fallthru
      _
    // Predicated region
    $region18: #{adapt_sage_conv.1} parent=1 // pred_check
      _
    $region19: #{adapt_sage_conv.1} parent=1 // pred_check_branch
      %21 = sbr.rel (0) target = $region21
    $region20: #{adapt_sage_conv.1} parent=1 // pred_region
      _
    $region21: #{adapt_sage_conv.1} parent=1 // pred_fallthru
      _
    // Predicated region
    $region22: #{adapt_sage_conv.1} parent=1 // pred_check
      _
    $region23: #{adapt_sage_conv.1} parent=1 // pred_check_branch
      %23 = sbr.rel (0) target = $region25
    $region24: #{adapt_sage_conv.1} parent=1 // pred_region
      _
    $region25: #{adapt_sage_conv.1} parent=1 // pred_fallthru
      _
    %p27 = scmp.eq.s32.totalorder 0, 0
    // Predicated region
    $region26: #{adapt_sage_conv.1} parent=1 // pred_check
      %p28 = pneg %p27
    $region27: #{adapt_sage_conv.1} parent=1 // pred_check_branch
      %30 = sbr.rel (%p28) target = $region29
    $region28: #{adapt_sage_conv.1} parent=1 // pred_region
      %31 = vst [vmem:[#allocation2] sm:$0xff] 0.0
      %32 = vst [vmem:[#allocation2 + $0x8] sm:$0xff] 0.0
      %33 = vst [vmem:[#allocation2 + $0x10] sm:$0xff] 0.0
      %34 = vst [vmem:[#allocation2 + $0x18] sm:$0xff] 0.0
      %35 = vst [vmem:[#allocation2 + $0x20] sm:$0xff] 0.0
      %36 = vst [vmem:[#allocation2 + $0x28] sm:$0xff] 0.0
      %37 = vst [vmem:[#allocation2 + $0x30] sm:$0xff] 0.0
      %38 = vst [vmem:[#allocation2 + $0x38] sm:$0xff] 0.0
      %39 = vst [vmem:[#allocation2 + $0x40] sm:$0xff] 0.0
      %40 = vst [vmem:[#allocation2 + $0x48] sm:$0xff] 0.0
      %41 = vst [vmem:[#allocation2 + $0x50] sm:$0xff] 0.0
      %42 = vst [vmem:[#allocation2 + $0x58] sm:$0xff] 0.0
      %43 = vst [vmem:[#allocation2 + $0x60] sm:$0xff] 0.0
      %44 = vst [vmem:[#allocation2 + $0x68] sm:$0xff] 0.0
      %45 = vst [vmem:[#allocation2 + $0x70] sm:$0xff] 0.0
      %46 = vst [vmem:[#allocation2 + $0x78] sm:$0xff] 0.0
      %47 = vst [vmem:[#allocation2 + $0x80] sm:$0xff] 0.0
      %48 = vst [vmem:[#allocation2 + $0x88] sm:$0xff] 0.0
      %49 = vst [vmem:[#allocation2 + $0x90] sm:$0xff] 0.0
      %50 = vst [vmem:[#allocation2 + $0x98] sm:$0xff] 0.0
      %51 = vst [vmem:[#allocation2 + $0xa0] sm:$0xff] 0.0
      %52 = vst [vmem:[#allocation2 + $0xa8] sm:$0xff] 0.0
      %53 = vst [vmem:[#allocation2 + $0xb0] sm:$0xff] 0.0
      %54 = vst [vmem:[#allocation2 + $0xb8] sm:$0xff] 0.0
      %55 = vst [vmem:[#allocation2 + $0xc0] sm:$0xff] 0.0
      %56 = vst [vmem:[#allocation2 + $0xc8] sm:$0xff] 0.0
      %57 = vst [vmem:[#allocation2 + $0xd0] sm:$0xff] 0.0
      %58 = vst [vmem:[#allocation2 + $0xd8] sm:$0xff] 0.0
      %59 = vst [vmem:[#allocation2 + $0xe0] sm:$0xff] 0.0
      %60 = vst [vmem:[#allocation2 + $0xe8] sm:$0xff] 0.0
      %61 = vst [vmem:[#allocation2 + $0xf0] sm:$0xff] 0.0
      %62 = vst [vmem:[#allocation2 + $0xf8] sm:$0xff] 0.0
      %63 = vst [vmem:[#allocation2 + $0x100] sm:$0xff] 0.0
      %64 = vst [vmem:[#allocation2 + $0x108] sm:$0xff] 0.0
      %65 = vst [vmem:[#allocation2 + $0x110] sm:$0xff] 0.0
      %66 = vst [vmem:[#allocation2 + $0x118] sm:$0xff] 0.0
      %67 = vst [vmem:[#allocation2 + $0x120] sm:$0xff] 0.0
      %68 = vst [vmem:[#allocation2 + $0x128] sm:$0xff] 0.0
      %69 = vst [vmem:[#allocation2 + $0x130] sm:$0xff] 0.0
      %70 = vst [vmem:[#allocation2 + $0x138] sm:$0xff] 0.0
    $region29: #{adapt_sage_conv.1} parent=1 // pred_fallthru
      _
    %v71 = vld [vmem:[%s2] sm:$0xff]
    %v72 = vld [vmem:[%s2 + $0x8] sm:$0x3]
    %v73 = vld [vmem:[%s3] sm:$0xff]
    %v74 = vld [vmem:[%s3 + $0x8] sm:$0xff]
    %v75 = vld [vmem:[%s3 + $0x10] sm:$0xff]
    %v76 = vld [vmem:[%s3 + $0x18] sm:$0xff]
    %v77 = vld [vmem:[%s3 + $0x20] sm:$0xff]
    %v78 = vld [vmem:[%s3 + $0x28] sm:$0xff]
    %v79 = vld [vmem:[%s3 + $0x30] sm:$0xff]
    %v80 = vld [vmem:[%s3 + $0x38] sm:$0xff]
    %v81 = vld [vmem:[%s3 + $0x40] sm:$0xff]
    %v82 = vld [vmem:[%s3 + $0x48] sm:$0xff]
    %v83 = vld [vmem:[%s3 + $0x50] sm:$0xff]
    %v84 = vld [vmem:[%s3 + $0x58] sm:$0xff]
    %v85 = vld [vmem:[%s3 + $0x60] sm:$0xff]
    %v86 = vld [vmem:[%s3 + $0x68] sm:$0xff]
    %v87 = vld [vmem:[%s3 + $0x70] sm:$0xff]
    %v88 = vld [vmem:[%s3 + $0x78] sm:$0xff]
    %v89 = vld [vmem:[%s3 + $0x80] sm:$0xff]
    %v90 = vld [vmem:[%s3 + $0x88] sm:$0xff]
    %v91 = vld [vmem:[%s3 + $0x90] sm:$0xff]
    %v92 = vld [vmem:[%s3 + $0x98] sm:$0xff]
    %v93 = vld [vmem:[%s3 + $0xa0] sm:$0xff]
    %v94 = vld [vmem:[%s3 + $0xa8] sm:$0xff]
    %v95 = vld [vmem:[%s3 + $0xb0] sm:$0xff]
    %v96 = vld [vmem:[%s3 + $0xb8] sm:$0xff]
    %v97 = vld [vmem:[%s3 + $0xc0] sm:$0xff]
    %v98 = vld [vmem:[%s3 + $0xc8] sm:$0xff]
    %v99 = vld [vmem:[%s3 + $0xd0] sm:$0xff]
    %v100 = vld [vmem:[%s3 + $0xd8] sm:$0xff]
    %v101 = vld [vmem:[%s3 + $0xe0] sm:$0xff]
    %v102 = vld [vmem:[%s3 + $0xe8] sm:$0xff]
    %v103 = vld [vmem:[%s3 + $0xf0] sm:$0xff]
    %v104 = vld [vmem:[%s3 + $0xf8] sm:$0xff]
    %v105 = vld [vmem:[%s3 + $0x100] sm:$0xff]
    %v106 = vld [vmem:[%s3 + $0x108] sm:$0xff]
    %v107 = vld [vmem:[%s3 + $0x110] sm:$0xff]
    %v108 = vld [vmem:[%s3 + $0x118] sm:$0xff]
    %v109 = vld [vmem:[%s3 + $0x120] sm:$0xff]
    %v110 = vld [vmem:[%s3 + $0x128] sm:$0xff]
    %v111 = vld [vmem:[%s3 + $0x130] sm:$0xff]
    %v112 = vld [vmem:[%s3 + $0x138] sm:$0xff]
    %v115 = vlaneseq
    %v116 = vshrl.u32 %v115, 7
    %v117 = vsub.s32 0, %v116
    %v118 = vrot.slane %v71, %v117
    %v119 = vlaneseq
    %v120 = vshrl.u32 %v119, 7
    %v121 = vsub.s32 2, %v120
    %v122 = vrot.slane %v71, %v121
    %v123 = vlaneseq
    %v124 = vshrl.u32 %v123, 7
    %v125 = vsub.s32 4, %v124
    %v126 = vrot.slane %v71, %v125
    %v127 = vlaneseq
    %v128 = vshrl.u32 %v127, 7
    %v129 = vsub.s32 6, %v128
    %v130 = vrot.slane %v71, %v129
    %v131 = vlaneseq
    %v132 = vshrl.u32 %v131, 7
    %v133 = vsub.s32 0, %v132
    %v134 = vrot.slane %v72, %v133
    %v140 = vlaneseq
    %v141 = vshrl.u32 %v140, 7
    %v142 = vsub.s32 0, %v141
    %v143 = vrot.slane %v118, %v142
    %v144 = vlaneseq
    %v145 = vshrl.u32 %v144, 7
    %v146 = vsub.s32 0, %v145
    %v147 = vrot.slane %v122, %v146
    %v148 = vlaneseq
    %v149 = vshrl.u32 %v148, 7
    %v150 = vsub.s32 0, %v149
    %v151 = vrot.slane %v126, %v150
    %v152 = vlaneseq
    %v153 = vshrl.u32 %v152, 7
    %v154 = vsub.s32 0, %v153
    %v155 = vrot.slane %v130, %v154
    %v156 = vlaneseq
    %v157 = vshrl.u32 %v156, 7
    %v158 = vsub.s32 0, %v157
    %v159 = vrot.slane %v134, %v158
    %161 = vset.pattern.permute.xlu0 0
    %162 = vperm.xlu0 %161, %v73
    %v163 = vpop.permute.xlu0 %162
    %166 = vset.pattern.permute.xlu0 0
    %167 = vperm.xlu0 %166, %v74
    %v168 = vpop.permute.xlu0 %167
    %171 = vset.pattern.permute.xlu0 0
    %172 = vperm.xlu0 %171, %v75
    %v173 = vpop.permute.xlu0 %172
    %176 = vset.pattern.permute.xlu0 0
    %177 = vperm.xlu0 %176, %v76
    %v178 = vpop.permute.xlu0 %177
    %181 = vset.pattern.permute.xlu0 0
    %182 = vperm.xlu0 %181, %v77
    %v183 = vpop.permute.xlu0 %182
    %186 = vset.pattern.permute.xlu0 0
    %187 = vperm.xlu0 %186, %v78
    %v188 = vpop.permute.xlu0 %187
    %191 = vset.pattern.permute.xlu0 0
    %192 = vperm.xlu0 %191, %v79
    %v193 = vpop.permute.xlu0 %192
    %196 = vset.pattern.permute.xlu0 0
    %197 = vperm.xlu0 %196, %v80
    %v198 = vpop.permute.xlu0 %197
    %201 = vset.pattern.permute.xlu0 0
    %202 = vperm.xlu0 %201, %v81
    %v203 = vpop.permute.xlu0 %202
    %206 = vset.pattern.permute.xlu0 0
    %207 = vperm.xlu0 %206, %v82
    %v208 = vpop.permute.xlu0 %207
    %211 = vset.pattern.permute.xlu0 0
    %212 = vperm.xlu0 %211, %v83
    %v213 = vpop.permute.xlu0 %212
    %216 = vset.pattern.permute.xlu0 0
    %217 = vperm.xlu0 %216, %v84
    %v218 = vpop.permute.xlu0 %217
    %221 = vset.pattern.permute.xlu0 0
    %222 = vperm.xlu0 %221, %v85
    %v223 = vpop.permute.xlu0 %222
    %226 = vset.pattern.permute.xlu0 0
    %227 = vperm.xlu0 %226, %v86
    %v228 = vpop.permute.xlu0 %227
    %231 = vset.pattern.permute.xlu0 0
    %232 = vperm.xlu0 %231, %v87
    %v233 = vpop.permute.xlu0 %232
    %236 = vset.pattern.permute.xlu0 0
    %237 = vperm.xlu0 %236, %v88
    %v238 = vpop.permute.xlu0 %237
    %241 = vset.pattern.permute.xlu0 0
    %242 = vperm.xlu0 %241, %v89
    %v243 = vpop.permute.xlu0 %242
    %246 = vset.pattern.permute.xlu0 0
    %247 = vperm.xlu0 %246, %v90
    %v248 = vpop.permute.xlu0 %247
    %251 = vset.pattern.permute.xlu0 0
    %252 = vperm.xlu0 %251, %v91
    %v253 = vpop.permute.xlu0 %252
    %256 = vset.pattern.permute.xlu0 0
    %257 = vperm.xlu0 %256, %v92
    %v258 = vpop.permute.xlu0 %257
    %261 = vset.pattern.permute.xlu0 0
    %262 = vperm.xlu0 %261, %v93
    %v263 = vpop.permute.xlu0 %262
    %266 = vset.pattern.permute.xlu0 0
    %267 = vperm.xlu0 %266, %v94
    %v268 = vpop.permute.xlu0 %267
    %271 = vset.pattern.permute.xlu0 0
    %272 = vperm.xlu0 %271, %v95
    %v273 = vpop.permute.xlu0 %272
    %276 = vset.pattern.permute.xlu0 0
    %277 = vperm.xlu0 %276, %v96
    %v278 = vpop.permute.xlu0 %277
    %281 = vset.pattern.permute.xlu0 0
    %282 = vperm.xlu0 %281, %v97
    %v283 = vpop.permute.xlu0 %282
    %286 = vset.pattern.permute.xlu0 0
    %287 = vperm.xlu0 %286, %v98
    %v288 = vpop.permute.xlu0 %287
    %291 = vset.pattern.permute.xlu0 0
    %292 = vperm.xlu0 %291, %v99
    %v293 = vpop.permute.xlu0 %292
    %296 = vset.pattern.permute.xlu0 0
    %297 = vperm.xlu0 %296, %v100
    %v298 = vpop.permute.xlu0 %297
    %301 = vset.pattern.permute.xlu0 0
    %302 = vperm.xlu0 %301, %v101
    %v303 = vpop.permute.xlu0 %302
    %306 = vset.pattern.permute.xlu0 0
    %307 = vperm.xlu0 %306, %v102
    %v308 = vpop.permute.xlu0 %307
    %311 = vset.pattern.permute.xlu0 0
    %312 = vperm.xlu0 %311, %v103
    %v313 = vpop.permute.xlu0 %312
    %316 = vset.pattern.permute.xlu0 0
    %317 = vperm.xlu0 %316, %v104
    %v318 = vpop.permute.xlu0 %317
    %321 = vset.pattern.permute.xlu0 0
    %322 = vperm.xlu0 %321, %v105
    %v323 = vpop.permute.xlu0 %322
    %326 = vset.pattern.permute.xlu0 0
    %327 = vperm.xlu0 %326, %v106
    %v328 = vpop.permute.xlu0 %327
    %331 = vset.pattern.permute.xlu0 0
    %332 = vperm.xlu0 %331, %v107
    %v333 = vpop.permute.xlu0 %332
    %336 = vset.pattern.permute.xlu0 0
    %337 = vperm.xlu0 %336, %v108
    %v338 = vpop.permute.xlu0 %337
    %341 = vset.pattern.permute.xlu0 0
    %342 = vperm.xlu0 %341, %v109
    %v343 = vpop.permute.xlu0 %342
    %346 = vset.pattern.permute.xlu0 0
    %347 = vperm.xlu0 %346, %v110
    %v348 = vpop.permute.xlu0 %347
    %351 = vset.pattern.permute.xlu0 0
    %352 = vperm.xlu0 %351, %v111
    %v353 = vpop.permute.xlu0 %352
    %356 = vset.pattern.permute.xlu0 0
    %357 = vperm.xlu0 %356, %v112
    %v358 = vpop.permute.xlu0 %357
    %v360 = vadd.f32 %v143, %v163
    %v361 = vadd.f32 %v147, %v163
    %v362 = vadd.f32 %v151, %v163
    %v363 = vadd.f32 %v155, %v163
    %v364 = vadd.f32 %v159, %v163
    %v365 = vadd.f32 %v143, %v168
    %v366 = vadd.f32 %v147, %v168
    %v367 = vadd.f32 %v151, %v168
    %v368 = vadd.f32 %v155, %v168
    %v369 = vadd.f32 %v159, %v168
    %v370 = vadd.f32 %v143, %v173
    %v371 = vadd.f32 %v147, %v173
    %v372 = vadd.f32 %v151, %v173
    %v373 = vadd.f32 %v155, %v173
    %v374 = vadd.f32 %v159, %v173
    %v375 = vadd.f32 %v143, %v178
    %v376 = vadd.f32 %v147, %v178
    %v377 = vadd.f32 %v151, %v178
    %v378 = vadd.f32 %v155, %v178
    %v379 = vadd.f32 %v159, %v178
    %v380 = vadd.f32 %v143, %v183
    %v381 = vadd.f32 %v147, %v183
    %v382 = vadd.f32 %v151, %v183
    %v383 = vadd.f32 %v155, %v183
    %v384 = vadd.f32 %v159, %v183
    %v385 = vadd.f32 %v143, %v188
    %v386 = vadd.f32 %v147, %v188
    %v387 = vadd.f32 %v151, %v188
    %v388 = vadd.f32 %v155, %v188
    %v389 = vadd.f32 %v159, %v188
    %v390 = vadd.f32 %v143, %v193
    %v391 = vadd.f32 %v147, %v193
    %v392 = vadd.f32 %v151, %v193
    %v393 = vadd.f32 %v155, %v193
    %v394 = vadd.f32 %v159, %v193
    %v395 = vadd.f32 %v143, %v198
    %v396 = vadd.f32 %v147, %v198
    %v397 = vadd.f32 %v151, %v198
    %v398 = vadd.f32 %v155, %v198
    %v399 = vadd.f32 %v159, %v198
    %v400 = vadd.f32 %v143, %v203
    %v401 = vadd.f32 %v147, %v203
    %v402 = vadd.f32 %v151, %v203
    %v403 = vadd.f32 %v155, %v203
    %v404 = vadd.f32 %v159, %v203
    %v405 = vadd.f32 %v143, %v208
    %v406 = vadd.f32 %v147, %v208
    %v407 = vadd.f32 %v151, %v208
    %v408 = vadd.f32 %v155, %v208
    %v409 = vadd.f32 %v159, %v208
    %v410 = vadd.f32 %v143, %v213
    %v411 = vadd.f32 %v147, %v213
    %v412 = vadd.f32 %v151, %v213
    %v413 = vadd.f32 %v155, %v213
    %v414 = vadd.f32 %v159, %v213
    %v415 = vadd.f32 %v143, %v218
    %v416 = vadd.f32 %v147, %v218
    %v417 = vadd.f32 %v151, %v218
    %v418 = vadd.f32 %v155, %v218
    %v419 = vadd.f32 %v159, %v218
    %v420 = vadd.f32 %v143, %v223
    %v421 = vadd.f32 %v147, %v223
    %v422 = vadd.f32 %v151, %v223
    %v423 = vadd.f32 %v155, %v223
    %v424 = vadd.f32 %v159, %v223
    %v425 = vadd.f32 %v143, %v228
    %v426 = vadd.f32 %v147, %v228
    %v427 = vadd.f32 %v151, %v228
    %v428 = vadd.f32 %v155, %v228
    %v429 = vadd.f32 %v159, %v228
    %v430 = vadd.f32 %v143, %v233
    %v431 = vadd.f32 %v147, %v233
    %v432 = vadd.f32 %v151, %v233
    %v433 = vadd.f32 %v155, %v233
    %v434 = vadd.f32 %v159, %v233
    %v435 = vadd.f32 %v143, %v238
    %v436 = vadd.f32 %v147, %v238
    %v437 = vadd.f32 %v151, %v238
    %v438 = vadd.f32 %v155, %v238
    %v439 = vadd.f32 %v159, %v238
    %v440 = vadd.f32 %v143, %v243
    %v441 = vadd.f32 %v147, %v243
    %v442 = vadd.f32 %v151, %v243
    %v443 = vadd.f32 %v155, %v243
    %v444 = vadd.f32 %v159, %v243
    %v445 = vadd.f32 %v143, %v248
    %v446 = vadd.f32 %v147, %v248
    %v447 = vadd.f32 %v151, %v248
    %v448 = vadd.f32 %v155, %v248
    %v449 = vadd.f32 %v159, %v248
    %v450 = vadd.f32 %v143, %v253
    %v451 = vadd.f32 %v147, %v253
    %v452 = vadd.f32 %v151, %v253
    %v453 = vadd.f32 %v155, %v253
    %v454 = vadd.f32 %v159, %v253
    %v455 = vadd.f32 %v143, %v258
    %v456 = vadd.f32 %v147, %v258
    %v457 = vadd.f32 %v151, %v258
    %v458 = vadd.f32 %v155, %v258
    %v459 = vadd.f32 %v159, %v258
    %v460 = vadd.f32 %v143, %v263
    %v461 = vadd.f32 %v147, %v263
    %v462 = vadd.f32 %v151, %v263
    %v463 = vadd.f32 %v155, %v263
    %v464 = vadd.f32 %v159, %v263
    %v465 = vadd.f32 %v143, %v268
    %v466 = vadd.f32 %v147, %v268
    %v467 = vadd.f32 %v151, %v268
    %v468 = vadd.f32 %v155, %v268
    %v469 = vadd.f32 %v159, %v268
    %v470 = vadd.f32 %v143, %v273
    %v471 = vadd.f32 %v147, %v273
    %v472 = vadd.f32 %v151, %v273
    %v473 = vadd.f32 %v155, %v273
    %v474 = vadd.f32 %v159, %v273
    %v475 = vadd.f32 %v143, %v278
    %v476 = vadd.f32 %v147, %v278
    %v477 = vadd.f32 %v151, %v278
    %v478 = vadd.f32 %v155, %v278
    %v479 = vadd.f32 %v159, %v278
    %v480 = vadd.f32 %v143, %v283
    %v481 = vadd.f32 %v147, %v283
    %v482 = vadd.f32 %v151, %v283
    %v483 = vadd.f32 %v155, %v283
    %v484 = vadd.f32 %v159, %v283
    %v485 = vadd.f32 %v143, %v288
    %v486 = vadd.f32 %v147, %v288
    %v487 = vadd.f32 %v151, %v288
    %v488 = vadd.f32 %v155, %v288
    %v489 = vadd.f32 %v159, %v288
    %v490 = vadd.f32 %v143, %v293
    %v491 = vadd.f32 %v147, %v293
    %v492 = vadd.f32 %v151, %v293
    %v493 = vadd.f32 %v155, %v293
    %v494 = vadd.f32 %v159, %v293
    %v495 = vadd.f32 %v143, %v298
    %v496 = vadd.f32 %v147, %v298
    %v497 = vadd.f32 %v151, %v298
    %v498 = vadd.f32 %v155, %v298
    %v499 = vadd.f32 %v159, %v298
    %v500 = vadd.f32 %v143, %v303
    %v501 = vadd.f32 %v147, %v303
    %v502 = vadd.f32 %v151, %v303
    %v503 = vadd.f32 %v155, %v303
    %v504 = vadd.f32 %v159, %v303
    %v505 = vadd.f32 %v143, %v308
    %v506 = vadd.f32 %v147, %v308
    %v507 = vadd.f32 %v151, %v308
    %v508 = vadd.f32 %v155, %v308
    %v509 = vadd.f32 %v159, %v308
    %v510 = vadd.f32 %v143, %v313
    %v511 = vadd.f32 %v147, %v313
    %v512 = vadd.f32 %v151, %v313
    %v513 = vadd.f32 %v155, %v313
    %v514 = vadd.f32 %v159, %v313
    %v515 = vadd.f32 %v143, %v318
    %v516 = vadd.f32 %v147, %v318
    %v517 = vadd.f32 %v151, %v318
    %v518 = vadd.f32 %v155, %v318
    %v519 = vadd.f32 %v159, %v318
    %v520 = vadd.f32 %v143, %v323
    %v521 = vadd.f32 %v147, %v323
    %v522 = vadd.f32 %v151, %v323
    %v523 = vadd.f32 %v155, %v323
    %v524 = vadd.f32 %v159, %v323
    %v525 = vadd.f32 %v143, %v328
    %v526 = vadd.f32 %v147, %v328
    %v527 = vadd.f32 %v151, %v328
    %v528 = vadd.f32 %v155, %v328
    %v529 = vadd.f32 %v159, %v328
    %v530 = vadd.f32 %v143, %v333
    %v531 = vadd.f32 %v147, %v333
    %v532 = vadd.f32 %v151, %v333
    %v533 = vadd.f32 %v155, %v333
    %v534 = vadd.f32 %v159, %v333
    %v535 = vadd.f32 %v143, %v338
    %v536 = vadd.f32 %v147, %v338
    %v537 = vadd.f32 %v151, %v338
    %v538 = vadd.f32 %v155, %v338
    %v539 = vadd.f32 %v159, %v338
    %v540 = vadd.f32 %v143, %v343
    %v541 = vadd.f32 %v147, %v343
    %v542 = vadd.f32 %v151, %v343
    %v543 = vadd.f32 %v155, %v343
    %v544 = vadd.f32 %v159, %v343
    %v545 = vadd.f32 %v143, %v348
    %v546 = vadd.f32 %v147, %v348
    %v547 = vadd.f32 %v151, %v348
    %v548 = vadd.f32 %v155, %v348
    %v549 = vadd.f32 %v159, %v348
    %v550 = vadd.f32 %v143, %v353
    %v551 = vadd.f32 %v147, %v353
    %v552 = vadd.f32 %v151, %v353
    %v553 = vadd.f32 %v155, %v353
    %v554 = vadd.f32 %v159, %v353
    %v555 = vadd.f32 %v143, %v358
    %v556 = vadd.f32 %v147, %v358
    %v557 = vadd.f32 %v151, %v358
    %v558 = vadd.f32 %v155, %v358
    %v559 = vadd.f32 %v159, %v358
    %v560 = vmax.f32 %v360, 0.0
    %v561 = vmax.f32 %v361, 0.0
    %v562 = vmax.f32 %v362, 0.0
    %v563 = vmax.f32 %v363, 0.0
    %v564 = vmax.f32 %v364, 0.0
    %v565 = vmax.f32 %v365, 0.0
    %v566 = vmax.f32 %v366, 0.0
    %v567 = vmax.f32 %v367, 0.0
    %v568 = vmax.f32 %v368, 0.0
    %v569 = vmax.f32 %v369, 0.0
    %v570 = vmax.f32 %v370, 0.0
    %v571 = vmax.f32 %v371, 0.0
    %v572 = vmax.f32 %v372, 0.0
    %v573 = vmax.f32 %v373, 0.0
    %v574 = vmax.f32 %v374, 0.0
    %v575 = vmax.f32 %v375, 0.0
    %v576 = vmax.f32 %v376, 0.0
    %v577 = vmax.f32 %v377, 0.0
    %v578 = vmax.f32 %v378, 0.0
    %v579 = vmax.f32 %v379, 0.0
    %v580 = vmax.f32 %v380, 0.0
    %v581 = vmax.f32 %v381, 0.0
    %v582 = vmax.f32 %v382, 0.0
    %v583 = vmax.f32 %v383, 0.0
    %v584 = vmax.f32 %v384, 0.0
    %v585 = vmax.f32 %v385, 0.0
    %v586 = vmax.f32 %v386, 0.0
    %v587 = vmax.f32 %v387, 0.0
    %v588 = vmax.f32 %v388, 0.0
    %v589 = vmax.f32 %v389, 0.0
    %v590 = vmax.f32 %v390, 0.0
    %v591 = vmax.f32 %v391, 0.0
    %v592 = vmax.f32 %v392, 0.0
    %v593 = vmax.f32 %v393, 0.0
    %v594 = vmax.f32 %v394, 0.0
    %v595 = vmax.f32 %v395, 0.0
    %v596 = vmax.f32 %v396, 0.0
    %v597 = vmax.f32 %v397, 0.0
    %v598 = vmax.f32 %v398, 0.0
    %v599 = vmax.f32 %v399, 0.0
    %v600 = vmax.f32 %v400, 0.0
    %v601 = vmax.f32 %v401, 0.0
    %v602 = vmax.f32 %v402, 0.0
    %v603 = vmax.f32 %v403, 0.0
    %v604 = vmax.f32 %v404, 0.0
    %v605 = vmax.f32 %v405, 0.0
    %v606 = vmax.f32 %v406, 0.0
    %v607 = vmax.f32 %v407, 0.0
    %v608 = vmax.f32 %v408, 0.0
    %v609 = vmax.f32 %v409, 0.0
    %v610 = vmax.f32 %v410, 0.0
    %v611 = vmax.f32 %v411, 0.0
    %v612 = vmax.f32 %v412, 0.0
    %v613 = vmax.f32 %v413, 0.0
    %v614 = vmax.f32 %v414, 0.0
    %v615 = vmax.f32 %v415, 0.0
    %v616 = vmax.f32 %v416, 0.0
    %v617 = vmax.f32 %v417, 0.0
    %v618 = vmax.f32 %v418, 0.0
    %v619 = vmax.f32 %v419, 0.0
    %v620 = vmax.f32 %v420, 0.0
    %v621 = vmax.f32 %v421, 0.0
    %v622 = vmax.f32 %v422, 0.0
    %v623 = vmax.f32 %v423, 0.0
    %v624 = vmax.f32 %v424, 0.0
    %v625 = vmax.f32 %v425, 0.0
    %v626 = vmax.f32 %v426, 0.0
    %v627 = vmax.f32 %v427, 0.0
    %v628 = vmax.f32 %v428, 0.0
    %v629 = vmax.f32 %v429, 0.0
    %v630 = vmax.f32 %v430, 0.0
    %v631 = vmax.f32 %v431, 0.0
    %v632 = vmax.f32 %v432, 0.0
    %v633 = vmax.f32 %v433, 0.0
    %v634 = vmax.f32 %v434, 0.0
    %v635 = vmax.f32 %v435, 0.0
    %v636 = vmax.f32 %v436, 0.0
    %v637 = vmax.f32 %v437, 0.0
    %v638 = vmax.f32 %v438, 0.0
    %v639 = vmax.f32 %v439, 0.0
    %v640 = vmax.f32 %v440, 0.0
    %v641 = vmax.f32 %v441, 0.0
    %v642 = vmax.f32 %v442, 0.0
    %v643 = vmax.f32 %v443, 0.0
    %v644 = vmax.f32 %v444, 0.0
    %v645 = vmax.f32 %v445, 0.0
    %v646 = vmax.f32 %v446, 0.0
    %v647 = vmax.f32 %v447, 0.0
    %v648 = vmax.f32 %v448, 0.0
    %v649 = vmax.f32 %v449, 0.0
    %v650 = vmax.f32 %v450, 0.0
    %v651 = vmax.f32 %v451, 0.0
    %v652 = vmax.f32 %v452, 0.0
    %v653 = vmax.f32 %v453, 0.0
    %v654 = vmax.f32 %v454, 0.0
    %v655 = vmax.f32 %v455, 0.0
    %v656 = vmax.f32 %v456, 0.0
    %v657 = vmax.f32 %v457, 0.0
    %v658 = vmax.f32 %v458, 0.0
    %v659 = vmax.f32 %v459, 0.0
    %v660 = vmax.f32 %v460, 0.0
    %v661 = vmax.f32 %v461, 0.0
    %v662 = vmax.f32 %v462, 0.0
    %v663 = vmax.f32 %v463, 0.0
    %v664 = vmax.f32 %v464, 0.0
    %v665 = vmax.f32 %v465, 0.0
    %v666 = vmax.f32 %v466, 0.0
    %v667 = vmax.f32 %v467, 0.0
    %v668 = vmax.f32 %v468, 0.0
    %v669 = vmax.f32 %v469, 0.0
    %v670 = vmax.f32 %v470, 0.0
    %v671 = vmax.f32 %v471, 0.0
    %v672 = vmax.f32 %v472, 0.0
    %v673 = vmax.f32 %v473, 0.0
    %v674 = vmax.f32 %v474, 0.0
    %v675 = vmax.f32 %v475, 0.0
    %v676 = vmax.f32 %v476, 0.0
    %v677 = vmax.f32 %v477, 0.0
    %v678 = vmax.f32 %v478, 0.0
    %v679 = vmax.f32 %v479, 0.0
    %v680 = vmax.f32 %v480, 0.0
    %v681 = vmax.f32 %v481, 0.0
    %v682 = vmax.f32 %v482, 0.0
    %v683 = vmax.f32 %v483, 0.0
    %v684 = vmax.f32 %v484, 0.0
    %v685 = vmax.f32 %v485, 0.0
    %v686 = vmax.f32 %v486, 0.0
    %v687 = vmax.f32 %v487, 0.0
    %v688 = vmax.f32 %v488, 0.0
    %v689 = vmax.f32 %v489, 0.0
    %v690 = vmax.f32 %v490, 0.0
    %v691 = vmax.f32 %v491, 0.0
    %v692 = vmax.f32 %v492, 0.0
    %v693 = vmax.f32 %v493, 0.0
    %v694 = vmax.f32 %v494, 0.0
    %v695 = vmax.f32 %v495, 0.0
    %v696 = vmax.f32 %v496, 0.0
    %v697 = vmax.f32 %v497, 0.0
    %v698 = vmax.f32 %v498, 0.0
    %v699 = vmax.f32 %v499, 0.0
    %v700 = vmax.f32 %v500, 0.0
    %v701 = vmax.f32 %v501, 0.0
    %v702 = vmax.f32 %v502, 0.0
    %v703 = vmax.f32 %v503, 0.0
    %v704 = vmax.f32 %v504, 0.0
    %v705 = vmax.f32 %v505, 0.0
    %v706 = vmax.f32 %v506, 0.0
    %v707 = vmax.f32 %v507, 0.0
    %v708 = vmax.f32 %v508, 0.0
    %v709 = vmax.f32 %v509, 0.0
    %v710 = vmax.f32 %v510, 0.0
    %v711 = vmax.f32 %v511, 0.0
    %v712 = vmax.f32 %v512, 0.0
    %v713 = vmax.f32 %v513, 0.0
    %v714 = vmax.f32 %v514, 0.0
    %v715 = vmax.f32 %v515, 0.0
    %v716 = vmax.f32 %v516, 0.0
    %v717 = vmax.f32 %v517, 0.0
    %v718 = vmax.f32 %v518, 0.0
    %v719 = vmax.f32 %v519, 0.0
    %v720 = vmax.f32 %v520, 0.0
    %v721 = vmax.f32 %v521, 0.0
    %v722 = vmax.f32 %v522, 0.0
    %v723 = vmax.f32 %v523, 0.0
    %v724 = vmax.f32 %v524, 0.0
    %v725 = vmax.f32 %v525, 0.0
    %v726 = vmax.f32 %v526, 0.0
    %v727 = vmax.f32 %v527, 0.0
    %v728 = vmax.f32 %v528, 0.0
    %v729 = vmax.f32 %v529, 0.0
    %v730 = vmax.f32 %v530, 0.0
    %v731 = vmax.f32 %v531, 0.0
    %v732 = vmax.f32 %v532, 0.0
    %v733 = vmax.f32 %v533, 0.0
    %v734 = vmax.f32 %v534, 0.0
    %v735 = vmax.f32 %v535, 0.0
    %v736 = vmax.f32 %v536, 0.0
    %v737 = vmax.f32 %v537, 0.0
    %v738 = vmax.f32 %v538, 0.0
    %v739 = vmax.f32 %v539, 0.0
    %v740 = vmax.f32 %v540, 0.0
    %v741 = vmax.f32 %v541, 0.0
    %v742 = vmax.f32 %v542, 0.0
    %v743 = vmax.f32 %v543, 0.0
    %v744 = vmax.f32 %v544, 0.0
    %v745 = vmax.f32 %v545, 0.0
    %v746 = vmax.f32 %v546, 0.0
    %v747 = vmax.f32 %v547, 0.0
    %v748 = vmax.f32 %v548, 0.0
    %v749 = vmax.f32 %v549, 0.0
    %v750 = vmax.f32 %v550, 0.0
    %v751 = vmax.f32 %v551, 0.0
    %v752 = vmax.f32 %v552, 0.0
    %v753 = vmax.f32 %v553, 0.0
    %v754 = vmax.f32 %v554, 0.0
    %v755 = vmax.f32 %v555, 0.0
    %v756 = vmax.f32 %v556, 0.0
    %v757 = vmax.f32 %v557, 0.0
    %v758 = vmax.f32 %v558, 0.0
    %v759 = vmax.f32 %v559, 0.0
    %v760 = vadd.f32 %v560, 0.1
    %v761 = vadd.f32 %v561, 0.1
    %v762 = vadd.f32 %v562, 0.1
    %v763 = vadd.f32 %v563, 0.1
    %v764 = vadd.f32 %v564, 0.1
    %v765 = vadd.f32 %v565, 0.1
    %v766 = vadd.f32 %v566, 0.1
    %v767 = vadd.f32 %v567, 0.1
    %v768 = vadd.f32 %v568, 0.1
    %v769 = vadd.f32 %v569, 0.1
    %v770 = vadd.f32 %v570, 0.1
    %v771 = vadd.f32 %v571, 0.1
    %v772 = vadd.f32 %v572, 0.1
    %v773 = vadd.f32 %v573, 0.1
    %v774 = vadd.f32 %v574, 0.1
    %v775 = vadd.f32 %v575, 0.1
    %v776 = vadd.f32 %v576, 0.1
    %v777 = vadd.f32 %v577, 0.1
    %v778 = vadd.f32 %v578, 0.1
    %v779 = vadd.f32 %v579, 0.1
    %v780 = vadd.f32 %v580, 0.1
    %v781 = vadd.f32 %v581, 0.1
    %v782 = vadd.f32 %v582, 0.1
    %v783 = vadd.f32 %v583, 0.1
    %v784 = vadd.f32 %v584, 0.1
    %v785 = vadd.f32 %v585, 0.1
    %v786 = vadd.f32 %v586, 0.1
    %v787 = vadd.f32 %v587, 0.1
    %v788 = vadd.f32 %v588, 0.1
    %v789 = vadd.f32 %v589, 0.1
    %v790 = vadd.f32 %v590, 0.1
    %v791 = vadd.f32 %v591, 0.1
    %v792 = vadd.f32 %v592, 0.1
    %v793 = vadd.f32 %v593, 0.1
    %v794 = vadd.f32 %v594, 0.1
    %v795 = vadd.f32 %v595, 0.1
    %v796 = vadd.f32 %v596, 0.1
    %v797 = vadd.f32 %v597, 0.1
    %v798 = vadd.f32 %v598, 0.1
    %v799 = vadd.f32 %v599, 0.1
    %v800 = vadd.f32 %v600, 0.1
    %v801 = vadd.f32 %v601, 0.1
    %v802 = vadd.f32 %v602, 0.1
    %v803 = vadd.f32 %v603, 0.1
    %v804 = vadd.f32 %v604, 0.1
    %v805 = vadd.f32 %v605, 0.1
    %v806 = vadd.f32 %v606, 0.1
    %v807 = vadd.f32 %v607, 0.1
    %v808 = vadd.f32 %v608, 0.1
    %v809 = vadd.f32 %v609, 0.1
    %v810 = vadd.f32 %v610, 0.1
    %v811 = vadd.f32 %v611, 0.1
    %v812 = vadd.f32 %v612, 0.1
    %v813 = vadd.f32 %v613, 0.1
    %v814 = vadd.f32 %v614, 0.1
    %v815 = vadd.f32 %v615, 0.1
    %v816 = vadd.f32 %v616, 0.1
    %v817 = vadd.f32 %v617, 0.1
    %v818 = vadd.f32 %v618, 0.1
    %v819 = vadd.f32 %v619, 0.1
    %v820 = vadd.f32 %v620, 0.1
    %v821 = vadd.f32 %v621, 0.1
    %v822 = vadd.f32 %v622, 0.1
    %v823 = vadd.f32 %v623, 0.1
    %v824 = vadd.f32 %v624, 0.1
    %v825 = vadd.f32 %v625, 0.1
    %v826 = vadd.f32 %v626, 0.1
    %v827 = vadd.f32 %v627, 0.1
    %v828 = vadd.f32 %v628, 0.1
    %v829 = vadd.f32 %v629, 0.1
    %v830 = vadd.f32 %v630, 0.1
    %v831 = vadd.f32 %v631, 0.1
    %v832 = vadd.f32 %v632, 0.1
    %v833 = vadd.f32 %v633, 0.1
    %v834 = vadd.f32 %v634, 0.1
    %v835 = vadd.f32 %v635, 0.1
    %v836 = vadd.f32 %v636, 0.1
    %v837 = vadd.f32 %v637, 0.1
    %v838 = vadd.f32 %v638, 0.1
    %v839 = vadd.f32 %v639, 0.1
    %v840 = vadd.f32 %v640, 0.1
    %v841 = vadd.f32 %v641, 0.1
    %v842 = vadd.f32 %v642, 0.1
    %v843 = vadd.f32 %v643, 0.1
    %v844 = vadd.f32 %v644, 0.1
    %v845 = vadd.f32 %v645, 0.1
    %v846 = vadd.f32 %v646, 0.1
    %v847 = vadd.f32 %v647, 0.1
    %v848 = vadd.f32 %v648, 0.1
    %v849 = vadd.f32 %v649, 0.1
    %v850 = vadd.f32 %v650, 0.1
    %v851 = vadd.f32 %v651, 0.1
    %v852 = vadd.f32 %v652, 0.1
    %v853 = vadd.f32 %v653, 0.1
    %v854 = vadd.f32 %v654, 0.1
    %v855 = vadd.f32 %v655, 0.1
    %v856 = vadd.f32 %v656, 0.1
    %v857 = vadd.f32 %v657, 0.1
    %v858 = vadd.f32 %v658, 0.1
    %v859 = vadd.f32 %v659, 0.1
    %v860 = vadd.f32 %v660, 0.1
    %v861 = vadd.f32 %v661, 0.1
    %v862 = vadd.f32 %v662, 0.1
    %v863 = vadd.f32 %v663, 0.1
    %v864 = vadd.f32 %v664, 0.1
    %v865 = vadd.f32 %v665, 0.1
    %v866 = vadd.f32 %v666, 0.1
    %v867 = vadd.f32 %v667, 0.1
    %v868 = vadd.f32 %v668, 0.1
    %v869 = vadd.f32 %v669, 0.1
    %v870 = vadd.f32 %v670, 0.1
    %v871 = vadd.f32 %v671, 0.1
    %v872 = vadd.f32 %v672, 0.1
    %v873 = vadd.f32 %v673, 0.1
    %v874 = vadd.f32 %v674, 0.1
    %v875 = vadd.f32 %v675, 0.1
    %v876 = vadd.f32 %v676, 0.1
    %v877 = vadd.f32 %v677, 0.1
    %v878 = vadd.f32 %v678, 0.1
    %v879 = vadd.f32 %v679, 0.1
    %v880 = vadd.f32 %v680, 0.1
    %v881 = vadd.f32 %v681, 0.1
    %v882 = vadd.f32 %v682, 0.1
    %v883 = vadd.f32 %v683, 0.1
    %v884 = vadd.f32 %v684, 0.1
    %v885 = vadd.f32 %v685, 0.1
    %v886 = vadd.f32 %v686, 0.1
    %v887 = vadd.f32 %v687, 0.1
    %v888 = vadd.f32 %v688, 0.1
    %v889 = vadd.f32 %v689, 0.1
    %v890 = vadd.f32 %v690, 0.1
    %v891 = vadd.f32 %v691, 0.1
    %v892 = vadd.f32 %v692, 0.1
    %v893 = vadd.f32 %v693, 0.1
    %v894 = vadd.f32 %v694, 0.1
    %v895 = vadd.f32 %v695, 0.1
    %v896 = vadd.f32 %v696, 0.1
    %v897 = vadd.f32 %v697, 0.1
    %v898 = vadd.f32 %v698, 0.1
    %v899 = vadd.f32 %v699, 0.1
    %v900 = vadd.f32 %v700, 0.1
    %v901 = vadd.f32 %v701, 0.1
    %v902 = vadd.f32 %v702, 0.1
    %v903 = vadd.f32 %v703, 0.1
    %v904 = vadd.f32 %v704, 0.1
    %v905 = vadd.f32 %v705, 0.1
    %v906 = vadd.f32 %v706, 0.1
    %v907 = vadd.f32 %v707, 0.1
    %v908 = vadd.f32 %v708, 0.1
    %v909 = vadd.f32 %v709, 0.1
    %v910 = vadd.f32 %v710, 0.1
    %v911 = vadd.f32 %v711, 0.1
    %v912 = vadd.f32 %v712, 0.1
    %v913 = vadd.f32 %v713, 0.1
    %v914 = vadd.f32 %v714, 0.1
    %v915 = vadd.f32 %v715, 0.1
    %v916 = vadd.f32 %v716, 0.1
    %v917 = vadd.f32 %v717, 0.1
    %v918 = vadd.f32 %v718, 0.1
    %v919 = vadd.f32 %v719, 0.1
    %v920 = vadd.f32 %v720, 0.1
    %v921 = vadd.f32 %v721, 0.1
    %v922 = vadd.f32 %v722, 0.1
    %v923 = vadd.f32 %v723, 0.1
    %v924 = vadd.f32 %v724, 0.1
    %v925 = vadd.f32 %v725, 0.1
    %v926 = vadd.f32 %v726, 0.1
    %v927 = vadd.f32 %v727, 0.1
    %v928 = vadd.f32 %v728, 0.1
    %v929 = vadd.f32 %v729, 0.1
    %v930 = vadd.f32 %v730, 0.1
    %v931 = vadd.f32 %v731, 0.1
    %v932 = vadd.f32 %v732, 0.1
    %v933 = vadd.f32 %v733, 0.1
    %v934 = vadd.f32 %v734, 0.1
    %v935 = vadd.f32 %v735, 0.1
    %v936 = vadd.f32 %v736, 0.1
    %v937 = vadd.f32 %v737, 0.1
    %v938 = vadd.f32 %v738, 0.1
    %v939 = vadd.f32 %v739, 0.1
    %v940 = vadd.f32 %v740, 0.1
    %v941 = vadd.f32 %v741, 0.1
    %v942 = vadd.f32 %v742, 0.1
    %v943 = vadd.f32 %v743, 0.1
    %v944 = vadd.f32 %v744, 0.1
    %v945 = vadd.f32 %v745, 0.1
    %v946 = vadd.f32 %v746, 0.1
    %v947 = vadd.f32 %v747, 0.1
    %v948 = vadd.f32 %v748, 0.1
    %v949 = vadd.f32 %v749, 0.1
    %v950 = vadd.f32 %v750, 0.1
    %v951 = vadd.f32 %v751, 0.1
    %v952 = vadd.f32 %v752, 0.1
    %v953 = vadd.f32 %v753, 0.1
    %v954 = vadd.f32 %v754, 0.1
    %v955 = vadd.f32 %v755, 0.1
    %v956 = vadd.f32 %v756, 0.1
    %v957 = vadd.f32 %v757, 0.1
    %v958 = vadd.f32 %v758, 0.1
    %v959 = vadd.f32 %v759, 0.1
    %v960 = vlaneseq
    %v961 = vshrl.u32 %v960, 7
    %v962 = vsub.s32 1, %v961
    %v963 = vrot.slane %v71, %v962
    %v964 = vlaneseq
    %v965 = vshrl.u32 %v964, 7
    %v966 = vsub.s32 3, %v965
    %v967 = vrot.slane %v71, %v966
    %v968 = vlaneseq
    %v969 = vshrl.u32 %v968, 7
    %v970 = vsub.s32 5, %v969
    %v971 = vrot.slane %v71, %v970
    %v972 = vlaneseq
    %v973 = vshrl.u32 %v972, 7
    %v974 = vsub.s32 7, %v973
    %v975 = vrot.slane %v71, %v974
    %v976 = vlaneseq
    %v977 = vshrl.u32 %v976, 7
    %v978 = vsub.s32 1, %v977
    %v979 = vrot.slane %v72, %v978
    %v985 = vlaneseq
    %v986 = vshrl.u32 %v985, 7
    %v987 = vsub.s32 1, %v986
    %v988 = vrot.slane %v963, %v987
    %v989 = vlaneseq
    %v990 = vshrl.u32 %v989, 7
    %v991 = vsub.s32 1, %v990
    %v992 = vrot.slane %v967, %v991
    %v993 = vlaneseq
    %v994 = vshrl.u32 %v993, 7
    %v995 = vsub.s32 1, %v994
    %v996 = vrot.slane %v971, %v995
    %v997 = vlaneseq
    %v998 = vshrl.u32 %v997, 7
    %v999 = vsub.s32 1, %v998
    %v1000 = vrot.slane %v975, %v999
    %v1001 = vlaneseq
    %v1002 = vshrl.u32 %v1001, 7
    %v1003 = vsub.s32 1, %v1002
    %v1004 = vrot.slane %v979, %v1003
    %v1005 = vmul.f32 %v988, %v760
    %v1006 = vmul.f32 %v992, %v761
    %v1007 = vmul.f32 %v996, %v762
    %v1008 = vmul.f32 %v1000, %v763
    %v1009 = vmul.f32 %v1004, %v764
    %v1010 = vmul.f32 %v988, %v765
    %v1011 = vmul.f32 %v992, %v766
    %v1012 = vmul.f32 %v996, %v767
    %v1013 = vmul.f32 %v1000, %v768
    %v1014 = vmul.f32 %v1004, %v769
    %v1015 = vmul.f32 %v988, %v770
    %v1016 = vmul.f32 %v992, %v771
    %v1017 = vmul.f32 %v996, %v772
    %v1018 = vmul.f32 %v1000, %v773
    %v1019 = vmul.f32 %v1004, %v774
    %v1020 = vmul.f32 %v988, %v775
    %v1021 = vmul.f32 %v992, %v776
    %v1022 = vmul.f32 %v996, %v777
    %v1023 = vmul.f32 %v1000, %v778
    %v1024 = vmul.f32 %v1004, %v779
    %v1025 = vmul.f32 %v988, %v780
    %v1026 = vmul.f32 %v992, %v781
    %v1027 = vmul.f32 %v996, %v782
    %v1028 = vmul.f32 %v1000, %v783
    %v1029 = vmul.f32 %v1004, %v784
    %v1030 = vmul.f32 %v988, %v785
    %v1031 = vmul.f32 %v992, %v786
    %v1032 = vmul.f32 %v996, %v787
    %v1033 = vmul.f32 %v1000, %v788
    %v1034 = vmul.f32 %v1004, %v789
    %v1035 = vmul.f32 %v988, %v790
    %v1036 = vmul.f32 %v992, %v791
    %v1037 = vmul.f32 %v996, %v792
    %v1038 = vmul.f32 %v1000, %v793
    %v1039 = vmul.f32 %v1004, %v794
    %v1040 = vmul.f32 %v988, %v795
    %v1041 = vmul.f32 %v992, %v796
    %v1042 = vmul.f32 %v996, %v797
    %v1043 = vmul.f32 %v1000, %v798
    %v1044 = vmul.f32 %v1004, %v799
    %v1045 = vmul.f32 %v988, %v800
    %v1046 = vmul.f32 %v992, %v801
    %v1047 = vmul.f32 %v996, %v802
    %v1048 = vmul.f32 %v1000, %v803
    %v1049 = vmul.f32 %v1004, %v804
    %v1050 = vmul.f32 %v988, %v805
    %v1051 = vmul.f32 %v992, %v806
    %v1052 = vmul.f32 %v996, %v807
    %v1053 = vmul.f32 %v1000, %v808
    %v1054 = vmul.f32 %v1004, %v809
    %v1055 = vmul.f32 %v988, %v810
    %v1056 = vmul.f32 %v992, %v811
    %v1057 = vmul.f32 %v996, %v812
    %v1058 = vmul.f32 %v1000, %v813
    %v1059 = vmul.f32 %v1004, %v814
    %v1060 = vmul.f32 %v988, %v815
    %v1061 = vmul.f32 %v992, %v816
    %v1062 = vmul.f32 %v996, %v817
    %v1063 = vmul.f32 %v1000, %v818
    %v1064 = vmul.f32 %v1004, %v819
    %v1065 = vmul.f32 %v988, %v820
    %v1066 = vmul.f32 %v992, %v821
    %v1067 = vmul.f32 %v996, %v822
    %v1068 = vmul.f32 %v1000, %v823
    %v1069 = vmul.f32 %v1004, %v824
    %v1070 = vmul.f32 %v988, %v825
    %v1071 = vmul.f32 %v992, %v826
    %v1072 = vmul.f32 %v996, %v827
    %v1073 = vmul.f32 %v1000, %v828
    %v1074 = vmul.f32 %v1004, %v829
    %v1075 = vmul.f32 %v988, %v830
    %v1076 = vmul.f32 %v992, %v831
    %v1077 = vmul.f32 %v996, %v832
    %v1078 = vmul.f32 %v1000, %v833
    %v1079 = vmul.f32 %v1004, %v834
    %v1080 = vmul.f32 %v988, %v835
    %v1081 = vmul.f32 %v992, %v836
    %v1082 = vmul.f32 %v996, %v837
    %v1083 = vmul.f32 %v1000, %v838
    %v1084 = vmul.f32 %v1004, %v839
    %v1085 = vmul.f32 %v988, %v840
    %v1086 = vmul.f32 %v992, %v841
    %v1087 = vmul.f32 %v996, %v842
    %v1088 = vmul.f32 %v1000, %v843
    %v1089 = vmul.f32 %v1004, %v844
    %v1090 = vmul.f32 %v988, %v845
    %v1091 = vmul.f32 %v992, %v846
    %v1092 = vmul.f32 %v996, %v847
    %v1093 = vmul.f32 %v1000, %v848
    %v1094 = vmul.f32 %v1004, %v849
    %v1095 = vmul.f32 %v988, %v850
    %v1096 = vmul.f32 %v992, %v851
    %v1097 = vmul.f32 %v996, %v852
    %v1098 = vmul.f32 %v1000, %v853
    %v1099 = vmul.f32 %v1004, %v854
    %v1100 = vmul.f32 %v988, %v855
    %v1101 = vmul.f32 %v992, %v856
    %v1102 = vmul.f32 %v996, %v857
    %v1103 = vmul.f32 %v1000, %v858
    %v1104 = vmul.f32 %v1004, %v859
    %v1105 = vmul.f32 %v988, %v860
    %v1106 = vmul.f32 %v992, %v861
    %v1107 = vmul.f32 %v996, %v862
    %v1108 = vmul.f32 %v1000, %v863
    %v1109 = vmul.f32 %v1004, %v864
    %v1110 = vmul.f32 %v988, %v865
    %v1111 = vmul.f32 %v992, %v866
    %v1112 = vmul.f32 %v996, %v867
    %v1113 = vmul.f32 %v1000, %v868
    %v1114 = vmul.f32 %v1004, %v869
    %v1115 = vmul.f32 %v988, %v870
    %v1116 = vmul.f32 %v992, %v871
    %v1117 = vmul.f32 %v996, %v872
    %v1118 = vmul.f32 %v1000, %v873
    %v1119 = vmul.f32 %v1004, %v874
    %v1120 = vmul.f32 %v988, %v875
    %v1121 = vmul.f32 %v992, %v876
    %v1122 = vmul.f32 %v996, %v877
    %v1123 = vmul.f32 %v1000, %v878
    %v1124 = vmul.f32 %v1004, %v879
    %v1125 = vmul.f32 %v988, %v880
    %v1126 = vmul.f32 %v992, %v881
    %v1127 = vmul.f32 %v996, %v882
    %v1128 = vmul.f32 %v1000, %v883
    %v1129 = vmul.f32 %v1004, %v884
    %v1130 = vmul.f32 %v988, %v885
    %v1131 = vmul.f32 %v992, %v886
    %v1132 = vmul.f32 %v996, %v887
    %v1133 = vmul.f32 %v1000, %v888
    %v1134 = vmul.f32 %v1004, %v889
    %v1135 = vmul.f32 %v988, %v890
    %v1136 = vmul.f32 %v992, %v891
    %v1137 = vmul.f32 %v996, %v892
    %v1138 = vmul.f32 %v1000, %v893
    %v1139 = vmul.f32 %v1004, %v894
    %v1140 = vmul.f32 %v988, %v895
    %v1141 = vmul.f32 %v992, %v896
    %v1142 = vmul.f32 %v996, %v897
    %v1143 = vmul.f32 %v1000, %v898
    %v1144 = vmul.f32 %v1004, %v899
    %v1145 = vmul.f32 %v988, %v900
    %v1146 = vmul.f32 %v992, %v901
    %v1147 = vmul.f32 %v996, %v902
    %v1148 = vmul.f32 %v1000, %v903
    %v1149 = vmul.f32 %v1004, %v904
    %v1150 = vmul.f32 %v988, %v905
    %v1151 = vmul.f32 %v992, %v906
    %v1152 = vmul.f32 %v996, %v907
    %v1153 = vmul.f32 %v1000, %v908
    %v1154 = vmul.f32 %v1004, %v909
    %v1155 = vmul.f32 %v988, %v910
    %v1156 = vmul.f32 %v992, %v911
    %v1157 = vmul.f32 %v996, %v912
    %v1158 = vmul.f32 %v1000, %v913
    %v1159 = vmul.f32 %v1004, %v914
    %v1160 = vmul.f32 %v988, %v915
    %v1161 = vmul.f32 %v992, %v916
    %v1162 = vmul.f32 %v996, %v917
    %v1163 = vmul.f32 %v1000, %v918
    %v1164 = vmul.f32 %v1004, %v919
    %v1165 = vmul.f32 %v988, %v920
    %v1166 = vmul.f32 %v992, %v921
    %v1167 = vmul.f32 %v996, %v922
    %v1168 = vmul.f32 %v1000, %v923
    %v1169 = vmul.f32 %v1004, %v924
    %v1170 = vmul.f32 %v988, %v925
    %v1171 = vmul.f32 %v992, %v926
    %v1172 = vmul.f32 %v996, %v927
    %v1173 = vmul.f32 %v1000, %v928
    %v1174 = vmul.f32 %v1004, %v929
    %v1175 = vmul.f32 %v988, %v930
    %v1176 = vmul.f32 %v992, %v931
    %v1177 = vmul.f32 %v996, %v932
    %v1178 = vmul.f32 %v1000, %v933
    %v1179 = vmul.f32 %v1004, %v934
    %v1180 = vmul.f32 %v988, %v935
    %v1181 = vmul.f32 %v992, %v936
    %v1182 = vmul.f32 %v996, %v937
    %v1183 = vmul.f32 %v1000, %v938
    %v1184 = vmul.f32 %v1004, %v939
    %v1185 = vmul.f32 %v988, %v940
    %v1186 = vmul.f32 %v992, %v941
    %v1187 = vmul.f32 %v996, %v942
    %v1188 = vmul.f32 %v1000, %v943
    %v1189 = vmul.f32 %v1004, %v944
    %v1190 = vmul.f32 %v988, %v945
    %v1191 = vmul.f32 %v992, %v946
    %v1192 = vmul.f32 %v996, %v947
    %v1193 = vmul.f32 %v1000, %v948
    %v1194 = vmul.f32 %v1004, %v949
    %v1195 = vmul.f32 %v988, %v950
    %v1196 = vmul.f32 %v992, %v951
    %v1197 = vmul.f32 %v996, %v952
    %v1198 = vmul.f32 %v1000, %v953
    %v1199 = vmul.f32 %v1004, %v954
    %v1200 = vmul.f32 %v988, %v955
    %v1201 = vmul.f32 %v992, %v956
    %v1202 = vmul.f32 %v996, %v957
    %v1203 = vmul.f32 %v1000, %v958
    %v1204 = vmul.f32 %v1004, %v959
    %v1205 = vld [vmem:[%s0] sm:$0xff]
    %v1206 = vld [vmem:[%s0 + $0x8] sm:$0xff]
    %v1207 = vld [vmem:[%s0 + $0x10] sm:$0xff]
    %v1208 = vld [vmem:[%s0 + $0x18] sm:$0xff]
    %v1209 = vld [vmem:[%s0 + $0x20] sm:$0xff]
    %v1210 = vld [vmem:[%s0 + $0x28] sm:$0xff]
    %v1211 = vld [vmem:[%s0 + $0x30] sm:$0xff]
    %v1212 = vld [vmem:[%s0 + $0x38] sm:$0xff]
    %v1213 = vld [vmem:[%s0 + $0x40] sm:$0xff]
    %v1214 = vld [vmem:[%s0 + $0x48] sm:$0xff]
    %v1215 = vld [vmem:[%s0 + $0x50] sm:$0xff]
    %v1216 = vld [vmem:[%s0 + $0x58] sm:$0xff]
    %v1217 = vld [vmem:[%s0 + $0x60] sm:$0xff]
    %v1218 = vld [vmem:[%s0 + $0x68] sm:$0xff]
    %v1219 = vld [vmem:[%s0 + $0x70] sm:$0xff]
    %v1220 = vld [vmem:[%s0 + $0x78] sm:$0xff]
    %v1221 = vld [vmem:[%s0 + $0x80] sm:$0xff]
    %v1222 = vld [vmem:[%s0 + $0x88] sm:$0xff]
    %v1223 = vld [vmem:[%s0 + $0x90] sm:$0xff]
    %v1224 = vld [vmem:[%s0 + $0x98] sm:$0xff]
    %v1225 = vld [vmem:[%s0 + $0xa0] sm:$0xff]
    %v1226 = vld [vmem:[%s0 + $0xa8] sm:$0xff]
    %v1227 = vld [vmem:[%s0 + $0xb0] sm:$0xff]
    %v1228 = vld [vmem:[%s0 + $0xb8] sm:$0xff]
    %v1229 = vld [vmem:[%s0 + $0xc0] sm:$0xff]
    %v1230 = vld [vmem:[%s0 + $0xc8] sm:$0xff]
    %v1231 = vld [vmem:[%s0 + $0xd0] sm:$0xff]
    %v1232 = vld [vmem:[%s0 + $0xd8] sm:$0xff]
    %v1233 = vld [vmem:[%s0 + $0xe0] sm:$0xff]
    %v1234 = vld [vmem:[%s0 + $0xe8] sm:$0xff]
    %v1235 = vld [vmem:[%s0 + $0xf0] sm:$0xff]
    %v1236 = vld [vmem:[%s0 + $0xf8] sm:$0xff]
    %v1237 = vld [vmem:[%s0 + $0x100] sm:$0xff]
    %v1238 = vld [vmem:[%s0 + $0x108] sm:$0xff]
    %v1239 = vld [vmem:[%s0 + $0x110] sm:$0xff]
    %v1240 = vld [vmem:[%s0 + $0x118] sm:$0xff]
    %v1241 = vld [vmem:[%s0 + $0x120] sm:$0xff]
    %v1242 = vld [vmem:[%s0 + $0x128] sm:$0xff]
    %v1243 = vld [vmem:[%s0 + $0x130] sm:$0xff]
    %v1244 = vld [vmem:[%s0 + $0x138] sm:$0xff]
    %v1245 = vld [vmem:[%s0 + $0x140] sm:$0xff]
    %v1246 = vld [vmem:[%s0 + $0x148] sm:$0xff]
    %v1247 = vld [vmem:[%s0 + $0x150] sm:$0xff]
    %v1248 = vld [vmem:[%s0 + $0x158] sm:$0xff]
    %v1249 = vld [vmem:[%s0 + $0x160] sm:$0xff]
    %v1250 = vld [vmem:[%s0 + $0x168] sm:$0xff]
    %v1251 = vld [vmem:[%s0 + $0x170] sm:$0xff]
    %v1252 = vld [vmem:[%s0 + $0x178] sm:$0xff]
    %v1253 = vld [vmem:[%s0 + $0x180] sm:$0xff]
    %v1254 = vld [vmem:[%s0 + $0x188] sm:$0xff]
    %vm1255 = vnez %v1205
    %vm1256 = vnez %v1206
    %vm1257 = vnez %v1207
    %vm1258 = vnez %v1208
    %vm1259 = vnez %v1209
    %vm1260 = vnez %v1210
    %vm1261 = vnez %v1211
    %vm1262 = vnez %v1212
    %vm1263 = vnez %v1213
    %vm1264 = vnez %v1214
    %vm1265 = vnez %v1215
    %vm1266 = vnez %v1216
    %vm1267 = vnez %v1217
    %vm1268 = vnez %v1218
    %vm1269 = vnez %v1219
    %vm1270 = vnez %v1220
    %vm1271 = vnez %v1221
    %vm1272 = vnez %v1222
    %vm1273 = vnez %v1223
    %vm1274 = vnez %v1224
    %vm1275 = vnez %v1225
    %vm1276 = vnez %v1226
    %vm1277 = vnez %v1227
    %vm1278 = vnez %v1228
    %vm1279 = vnez %v1229
    %vm1280 = vnez %v1230
    %vm1281 = vnez %v1231
    %vm1282 = vnez %v1232
    %vm1283 = vnez %v1233
    %vm1284 = vnez %v1234
    %vm1285 = vnez %v1235
    %vm1286 = vnez %v1236
    %vm1287 = vnez %v1237
    %vm1288 = vnez %v1238
    %vm1289 = vnez %v1239
    %vm1290 = vnez %v1240
    %vm1291 = vnez %v1241
    %vm1292 = vnez %v1242
    %vm1293 = vnez %v1243
    %vm1294 = vnez %v1244
    %vm1295 = vnez %v1245
    %vm1296 = vnez %v1246
    %vm1297 = vnez %v1247
    %vm1298 = vnez %v1248
    %vm1299 = vnez %v1249
    %vm1300 = vnez %v1250
    %vm1301 = vnez %v1251
    %vm1302 = vnez %v1252
    %vm1303 = vnez %v1253
    %vm1304 = vnez %v1254
    %v1305 = vsel %vm1255, 16843009, 0
    %v1306 = vsel %vm1256, 16843009, 0
    %v1307 = vsel %vm1257, 16843009, 0
    %v1308 = vsel %vm1258, 16843009, 0
    %v1309 = vsel %vm1259, 16843009, 0
    %v1310 = vsel %vm1260, 16843009, 0
    %v1311 = vsel %vm1261, 16843009, 0
    %v1312 = vsel %vm1262, 16843009, 0
    %v1313 = vsel %vm1263, 16843009, 0
    %v1314 = vsel %vm1264, 16843009, 0
    %v1315 = vsel %vm1265, 16843009, 0
    %v1316 = vsel %vm1266, 16843009, 0
    %v1317 = vsel %vm1267, 16843009, 0
    %v1318 = vsel %vm1268, 16843009, 0
    %v1319 = vsel %vm1269, 16843009, 0
    %v1320 = vsel %vm1270, 16843009, 0
    %v1321 = vsel %vm1271, 16843009, 0
    %v1322 = vsel %vm1272, 16843009, 0
    %v1323 = vsel %vm1273, 16843009, 0
    %v1324 = vsel %vm1274, 16843009, 0
    %v1325 = vsel %vm1275, 16843009, 0
    %v1326 = vsel %vm1276, 16843009, 0
    %v1327 = vsel %vm1277, 16843009, 0
    %v1328 = vsel %vm1278, 16843009, 0
    %v1329 = vsel %vm1279, 16843009, 0
    %v1330 = vsel %vm1280, 16843009, 0
    %v1331 = vsel %vm1281, 16843009, 0
    %v1332 = vsel %vm1282, 16843009, 0
    %v1333 = vsel %vm1283, 16843009, 0
    %v1334 = vsel %vm1284, 16843009, 0
    %v1335 = vsel %vm1285, 16843009, 0
    %v1336 = vsel %vm1286, 16843009, 0
    %v1337 = vsel %vm1287, 16843009, 0
    %v1338 = vsel %vm1288, 16843009, 0
    %v1339 = vsel %vm1289, 16843009, 0
    %v1340 = vsel %vm1290, 16843009, 0
    %v1341 = vsel %vm1291, 16843009, 0
    %v1342 = vsel %vm1292, 16843009, 0
    %v1343 = vsel %vm1293, 16843009, 0
    %v1344 = vsel %vm1294, 16843009, 0
    %v1345 = vsel %vm1295, 16843009, 0
    %v1346 = vsel %vm1296, 16843009, 0
    %v1347 = vsel %vm1297, 16843009, 0
    %v1348 = vsel %vm1298, 16843009, 0
    %v1349 = vsel %vm1299, 16843009, 0
    %v1350 = vsel %vm1300, 16843009, 0
    %v1351 = vsel %vm1301, 16843009, 0
    %v1352 = vsel %vm1302, 16843009, 0
    %v1353 = vsel %vm1303, 16843009, 0
    %v1354 = vsel %vm1304, 16843009, 0
    %v1355 = vunpack.c.0.s8 %v1305
    %v1356 = vunpack.c.0.s8 %v1306
    %v1357 = vunpack.c.0.s8 %v1307
    %v1358 = vunpack.c.0.s8 %v1308
    %v1359 = vunpack.c.0.s8 %v1309
    %v1360 = vunpack.c.1.s8 %v1305
    %v1361 = vunpack.c.1.s8 %v1306
    %v1362 = vunpack.c.1.s8 %v1307
    %v1363 = vunpack.c.1.s8 %v1308
    %v1364 = vunpack.c.1.s8 %v1309
    %v1365 = vunpack.c.2.s8 %v1305
    %v1366 = vunpack.c.2.s8 %v1306
    %v1367 = vunpack.c.2.s8 %v1307
    %v1368 = vunpack.c.2.s8 %v1308
    %v1369 = vunpack.c.2.s8 %v1309
    %v1370 = vunpack.c.3.s8 %v1305
    %v1371 = vunpack.c.3.s8 %v1306
    %v1372 = vunpack.c.3.s8 %v1307
    %v1373 = vunpack.c.3.s8 %v1308
    %v1374 = vunpack.c.3.s8 %v1309
    %v1375 = vunpack.c.0.s8 %v1310
    %v1376 = vunpack.c.0.s8 %v1311
    %v1377 = vunpack.c.0.s8 %v1312
    %v1378 = vunpack.c.0.s8 %v1313
    %v1379 = vunpack.c.0.s8 %v1314
    %v1380 = vunpack.c.1.s8 %v1310
    %v1381 = vunpack.c.1.s8 %v1311
    %v1382 = vunpack.c.1.s8 %v1312
    %v1383 = vunpack.c.1.s8 %v1313
    %v1384 = vunpack.c.1.s8 %v1314
    %v1385 = vunpack.c.2.s8 %v1310
    %v1386 = vunpack.c.2.s8 %v1311
    %v1387 = vunpack.c.2.s8 %v1312
    %v1388 = vunpack.c.2.s8 %v1313
    %v1389 = vunpack.c.2.s8 %v1314
    %v1390 = vunpack.c.3.s8 %v1310
    %v1391 = vunpack.c.3.s8 %v1311
    %v1392 = vunpack.c.3.s8 %v1312
    %v1393 = vunpack.c.3.s8 %v1313
    %v1394 = vunpack.c.3.s8 %v1314
    %v1395 = vunpack.c.0.s8 %v1315
    %v1396 = vunpack.c.0.s8 %v1316
    %v1397 = vunpack.c.0.s8 %v1317
    %v1398 = vunpack.c.0.s8 %v1318
    %v1399 = vunpack.c.0.s8 %v1319
    %v1400 = vunpack.c.1.s8 %v1315
    %v1401 = vunpack.c.1.s8 %v1316
    %v1402 = vunpack.c.1.s8 %v1317
    %v1403 = vunpack.c.1.s8 %v1318
    %v1404 = vunpack.c.1.s8 %v1319
    %v1405 = vunpack.c.2.s8 %v1315
    %v1406 = vunpack.c.2.s8 %v1316
    %v1407 = vunpack.c.2.s8 %v1317
    %v1408 = vunpack.c.2.s8 %v1318
    %v1409 = vunpack.c.2.s8 %v1319
    %v1410 = vunpack.c.3.s8 %v1315
    %v1411 = vunpack.c.3.s8 %v1316
    %v1412 = vunpack.c.3.s8 %v1317
    %v1413 = vunpack.c.3.s8 %v1318
    %v1414 = vunpack.c.3.s8 %v1319
    %v1415 = vunpack.c.0.s8 %v1320
    %v1416 = vunpack.c.0.s8 %v1321
    %v1417 = vunpack.c.0.s8 %v1322
    %v1418 = vunpack.c.0.s8 %v1323
    %v1419 = vunpack.c.0.s8 %v1324
    %v1420 = vunpack.c.1.s8 %v1320
    %v1421 = vunpack.c.1.s8 %v1321
    %v1422 = vunpack.c.1.s8 %v1322
    %v1423 = vunpack.c.1.s8 %v1323
    %v1424 = vunpack.c.1.s8 %v1324
    %v1425 = vunpack.c.2.s8 %v1320
    %v1426 = vunpack.c.2.s8 %v1321
    %v1427 = vunpack.c.2.s8 %v1322
    %v1428 = vunpack.c.2.s8 %v1323
    %v1429 = vunpack.c.2.s8 %v1324
    %v1430 = vunpack.c.3.s8 %v1320
    %v1431 = vunpack.c.3.s8 %v1321
    %v1432 = vunpack.c.3.s8 %v1322
    %v1433 = vunpack.c.3.s8 %v1323
    %v1434 = vunpack.c.3.s8 %v1324
    %v1435 = vunpack.c.0.s8 %v1325
    %v1436 = vunpack.c.0.s8 %v1326
    %v1437 = vunpack.c.0.s8 %v1327
    %v1438 = vunpack.c.0.s8 %v1328
    %v1439 = vunpack.c.0.s8 %v1329
    %v1440 = vunpack.c.1.s8 %v1325
    %v1441 = vunpack.c.1.s8 %v1326
    %v1442 = vunpack.c.1.s8 %v1327
    %v1443 = vunpack.c.1.s8 %v1328
    %v1444 = vunpack.c.1.s8 %v1329
    %v1445 = vunpack.c.2.s8 %v1325
    %v1446 = vunpack.c.2.s8 %v1326
    %v1447 = vunpack.c.2.s8 %v1327
    %v1448 = vunpack.c.2.s8 %v1328
    %v1449 = vunpack.c.2.s8 %v1329
    %v1450 = vunpack.c.3.s8 %v1325
    %v1451 = vunpack.c.3.s8 %v1326
    %v1452 = vunpack.c.3.s8 %v1327
    %v1453 = vunpack.c.3.s8 %v1328
    %v1454 = vunpack.c.3.s8 %v1329
    %v1455 = vunpack.c.0.s8 %v1330
    %v1456 = vunpack.c.0.s8 %v1331
    %v1457 = vunpack.c.0.s8 %v1332
    %v1458 = vunpack.c.0.s8 %v1333
    %v1459 = vunpack.c.0.s8 %v1334
    %v1460 = vunpack.c.1.s8 %v1330
    %v1461 = vunpack.c.1.s8 %v1331
    %v1462 = vunpack.c.1.s8 %v1332
    %v1463 = vunpack.c.1.s8 %v1333
    %v1464 = vunpack.c.1.s8 %v1334
    %v1465 = vunpack.c.2.s8 %v1330
    %v1466 = vunpack.c.2.s8 %v1331
    %v1467 = vunpack.c.2.s8 %v1332
    %v1468 = vunpack.c.2.s8 %v1333
    %v1469 = vunpack.c.2.s8 %v1334
    %v1470 = vunpack.c.3.s8 %v1330
    %v1471 = vunpack.c.3.s8 %v1331
    %v1472 = vunpack.c.3.s8 %v1332
    %v1473 = vunpack.c.3.s8 %v1333
    %v1474 = vunpack.c.3.s8 %v1334
    %v1475 = vunpack.c.0.s8 %v1335
    %v1476 = vunpack.c.0.s8 %v1336
    %v1477 = vunpack.c.0.s8 %v1337
    %v1478 = vunpack.c.0.s8 %v1338
    %v1479 = vunpack.c.0.s8 %v1339
    %v1480 = vunpack.c.1.s8 %v1335
    %v1481 = vunpack.c.1.s8 %v1336
    %v1482 = vunpack.c.1.s8 %v1337
    %v1483 = vunpack.c.1.s8 %v1338
    %v1484 = vunpack.c.1.s8 %v1339
    %v1485 = vunpack.c.2.s8 %v1335
    %v1486 = vunpack.c.2.s8 %v1336
    %v1487 = vunpack.c.2.s8 %v1337
    %v1488 = vunpack.c.2.s8 %v1338
    %v1489 = vunpack.c.2.s8 %v1339
    %v1490 = vunpack.c.3.s8 %v1335
    %v1491 = vunpack.c.3.s8 %v1336
    %v1492 = vunpack.c.3.s8 %v1337
    %v1493 = vunpack.c.3.s8 %v1338
    %v1494 = vunpack.c.3.s8 %v1339
    %v1495 = vunpack.c.0.s8 %v1340
    %v1496 = vunpack.c.0.s8 %v1341
    %v1497 = vunpack.c.0.s8 %v1342
    %v1498 = vunpack.c.0.s8 %v1343
    %v1499 = vunpack.c.0.s8 %v1344
    %v1500 = vunpack.c.1.s8 %v1340
    %v1501 = vunpack.c.1.s8 %v1341
    %v1502 = vunpack.c.1.s8 %v1342
    %v1503 = vunpack.c.1.s8 %v1343
    %v1504 = vunpack.c.1.s8 %v1344
    %v1505 = vunpack.c.2.s8 %v1340
    %v1506 = vunpack.c.2.s8 %v1341
    %v1507 = vunpack.c.2.s8 %v1342
    %v1508 = vunpack.c.2.s8 %v1343
    %v1509 = vunpack.c.2.s8 %v1344
    %v1510 = vunpack.c.3.s8 %v1340
    %v1511 = vunpack.c.3.s8 %v1341
    %v1512 = vunpack.c.3.s8 %v1342
    %v1513 = vunpack.c.3.s8 %v1343
    %v1514 = vunpack.c.3.s8 %v1344
    %v1515 = vunpack.c.0.s8 %v1345
    %v1516 = vunpack.c.0.s8 %v1346
    %v1517 = vunpack.c.0.s8 %v1347
    %v1518 = vunpack.c.0.s8 %v1348
    %v1519 = vunpack.c.0.s8 %v1349
    %v1520 = vunpack.c.1.s8 %v1345
    %v1521 = vunpack.c.1.s8 %v1346
    %v1522 = vunpack.c.1.s8 %v1347
    %v1523 = vunpack.c.1.s8 %v1348
    %v1524 = vunpack.c.1.s8 %v1349
    %v1525 = vunpack.c.2.s8 %v1345
    %v1526 = vunpack.c.2.s8 %v1346
    %v1527 = vunpack.c.2.s8 %v1347
    %v1528 = vunpack.c.2.s8 %v1348
    %v1529 = vunpack.c.2.s8 %v1349
    %v1530 = vunpack.c.3.s8 %v1345
    %v1531 = vunpack.c.3.s8 %v1346
    %v1532 = vunpack.c.3.s8 %v1347
    %v1533 = vunpack.c.3.s8 %v1348
    %v1534 = vunpack.c.3.s8 %v1349
    %v1535 = vunpack.c.0.s8 %v1350
    %v1536 = vunpack.c.0.s8 %v1351
    %v1537 = vunpack.c.0.s8 %v1352
    %v1538 = vunpack.c.0.s8 %v1353
    %v1539 = vunpack.c.0.s8 %v1354
    %v1540 = vunpack.c.1.s8 %v1350
    %v1541 = vunpack.c.1.s8 %v1351
    %v1542 = vunpack.c.1.s8 %v1352
    %v1543 = vunpack.c.1.s8 %v1353
    %v1544 = vunpack.c.1.s8 %v1354
    %v1545 = vunpack.c.2.s8 %v1350
    %v1546 = vunpack.c.2.s8 %v1351
    %v1547 = vunpack.c.2.s8 %v1352
    %v1548 = vunpack.c.2.s8 %v1353
    %v1549 = vunpack.c.2.s8 %v1354
    %v1550 = vunpack.c.3.s8 %v1350
    %v1551 = vunpack.c.3.s8 %v1351
    %v1552 = vunpack.c.3.s8 %v1352
    %v1553 = vunpack.c.3.s8 %v1353
    %v1554 = vunpack.c.3.s8 %v1354
    %v1555 = vpack.c.b16 %v1356, %v1355
    %v1556 = vpack.c.b16 %v1358, %v1357
    %v1557 = vpack.c.b8 %v1556, %v1555
    %v1558 = vpack.c.b16 %v1359, %v1359
    %v1559 = vpack.c.b8 %v1558, %v1558
    %v1560 = vpack.c.b16 %v1361, %v1360
    %v1561 = vpack.c.b16 %v1363, %v1362
    %v1562 = vpack.c.b8 %v1561, %v1560
    %v1563 = vpack.c.b16 %v1364, %v1364
    %v1564 = vpack.c.b8 %v1563, %v1563
    %v1565 = vpack.c.b16 %v1366, %v1365
    %v1566 = vpack.c.b16 %v1368, %v1367
    %v1567 = vpack.c.b8 %v1566, %v1565
    %v1568 = vpack.c.b16 %v1369, %v1369
    %v1569 = vpack.c.b8 %v1568, %v1568
    %v1570 = vpack.c.b16 %v1371, %v1370
    %v1571 = vpack.c.b16 %v1373, %v1372
    %v1572 = vpack.c.b8 %v1571, %v1570
    %v1573 = vpack.c.b16 %v1374, %v1374
    %v1574 = vpack.c.b8 %v1573, %v1573
    %v1575 = vpack.c.b16 %v1376, %v1375
    %v1576 = vpack.c.b16 %v1378, %v1377
    %v1577 = vpack.c.b8 %v1576, %v1575
    %v1578 = vpack.c.b16 %v1379, %v1379
    %v1579 = vpack.c.b8 %v1578, %v1578
    %v1580 = vpack.c.b16 %v1381, %v1380
    %v1581 = vpack.c.b16 %v1383, %v1382
    %v1582 = vpack.c.b8 %v1581, %v1580
    %v1583 = vpack.c.b16 %v1384, %v1384
    %v1584 = vpack.c.b8 %v1583, %v1583
    %v1585 = vpack.c.b16 %v1386, %v1385
    %v1586 = vpack.c.b16 %v1388, %v1387
    %v1587 = vpack.c.b8 %v1586, %v1585
    %v1588 = vpack.c.b16 %v1389, %v1389
    %v1589 = vpack.c.b8 %v1588, %v1588
    %v1590 = vpack.c.b16 %v1391, %v1390
    %v1591 = vpack.c.b16 %v1393, %v1392
    %v1592 = vpack.c.b8 %v1591, %v1590
    %v1593 = vpack.c.b16 %v1394, %v1394
    %v1594 = vpack.c.b8 %v1593, %v1593
    %v1595 = vpack.c.b16 %v1396, %v1395
    %v1596 = vpack.c.b16 %v1398, %v1397
    %v1597 = vpack.c.b8 %v1596, %v1595
    %v1598 = vpack.c.b16 %v1399, %v1399
    %v1599 = vpack.c.b8 %v1598, %v1598
    %v1600 = vpack.c.b16 %v1401, %v1400
    %v1601 = vpack.c.b16 %v1403, %v1402
    %v1602 = vpack.c.b8 %v1601, %v1600
    %v1603 = vpack.c.b16 %v1404, %v1404
    %v1604 = vpack.c.b8 %v1603, %v1603
    %v1605 = vpack.c.b16 %v1406, %v1405
    %v1606 = vpack.c.b16 %v1408, %v1407
    %v1607 = vpack.c.b8 %v1606, %v1605
    %v1608 = vpack.c.b16 %v1409, %v1409
    %v1609 = vpack.c.b8 %v1608, %v1608
    %v1610 = vpack.c.b16 %v1411, %v1410
    %v1611 = vpack.c.b16 %v1413, %v1412
    %v1612 = vpack.c.b8 %v1611, %v1610
    %v1613 = vpack.c.b16 %v1414, %v1414
    %v1614 = vpack.c.b8 %v1613, %v1613
    %v1615 = vpack.c.b16 %v1416, %v1415
    %v1616 = vpack.c.b16 %v1418, %v1417
    %v1617 = vpack.c.b8 %v1616, %v1615
    %v1618 = vpack.c.b16 %v1419, %v1419
    %v1619 = vpack.c.b8 %v1618, %v1618
    %v1620 = vpack.c.b16 %v1421, %v1420
    %v1621 = vpack.c.b16 %v1423, %v1422
    %v1622 = vpack.c.b8 %v1621, %v1620
    %v1623 = vpack.c.b16 %v1424, %v1424
    %v1624 = vpack.c.b8 %v1623, %v1623
    %v1625 = vpack.c.b16 %v1426, %v1425
    %v1626 = vpack.c.b16 %v1428, %v1427
    %v1627 = vpack.c.b8 %v1626, %v1625
    %v1628 = vpack.c.b16 %v1429, %v1429
    %v1629 = vpack.c.b8 %v1628, %v1628
    %v1630 = vpack.c.b16 %v1431, %v1430
    %v1631 = vpack.c.b16 %v1433, %v1432
    %v1632 = vpack.c.b8 %v1631, %v1630
    %v1633 = vpack.c.b16 %v1434, %v1434
    %v1634 = vpack.c.b8 %v1633, %v1633
    %v1635 = vpack.c.b16 %v1436, %v1435
    %v1636 = vpack.c.b16 %v1438, %v1437
    %v1637 = vpack.c.b8 %v1636, %v1635
    %v1638 = vpack.c.b16 %v1439, %v1439
    %v1639 = vpack.c.b8 %v1638, %v1638
    %v1640 = vpack.c.b16 %v1441, %v1440
    %v1641 = vpack.c.b16 %v1443, %v1442
    %v1642 = vpack.c.b8 %v1641, %v1640
    %v1643 = vpack.c.b16 %v1444, %v1444
    %v1644 = vpack.c.b8 %v1643, %v1643
    %v1645 = vpack.c.b16 %v1446, %v1445
    %v1646 = vpack.c.b16 %v1448, %v1447
    %v1647 = vpack.c.b8 %v1646, %v1645
    %v1648 = vpack.c.b16 %v1449, %v1449
    %v1649 = vpack.c.b8 %v1648, %v1648
    %v1650 = vpack.c.b16 %v1451, %v1450
    %v1651 = vpack.c.b16 %v1453, %v1452
    %v1652 = vpack.c.b8 %v1651, %v1650
    %v1653 = vpack.c.b16 %v1454, %v1454
    %v1654 = vpack.c.b8 %v1653, %v1653
    %v1655 = vpack.c.b16 %v1456, %v1455
    %v1656 = vpack.c.b16 %v1458, %v1457
    %v1657 = vpack.c.b8 %v1656, %v1655
    %v1658 = vpack.c.b16 %v1459, %v1459
    %v1659 = vpack.c.b8 %v1658, %v1658
    %v1660 = vpack.c.b16 %v1461, %v1460
    %v1661 = vpack.c.b16 %v1463, %v1462
    %v1662 = vpack.c.b8 %v1661, %v1660
    %v1663 = vpack.c.b16 %v1464, %v1464
    %v1664 = vpack.c.b8 %v1663, %v1663
    %v1665 = vpack.c.b16 %v1466, %v1465
    %v1666 = vpack.c.b16 %v1468, %v1467
    %v1667 = vpack.c.b8 %v1666, %v1665
    %v1668 = vpack.c.b16 %v1469, %v1469
    %v1669 = vpack.c.b8 %v1668, %v1668
    %v1670 = vpack.c.b16 %v1471, %v1470
    %v1671 = vpack.c.b16 %v1473, %v1472
    %v1672 = vpack.c.b8 %v1671, %v1670
    %v1673 = vpack.c.b16 %v1474, %v1474
    %v1674 = vpack.c.b8 %v1673, %v1673
    %v1675 = vpack.c.b16 %v1476, %v1475
    %v1676 = vpack.c.b16 %v1478, %v1477
    %v1677 = vpack.c.b8 %v1676, %v1675
    %v1678 = vpack.c.b16 %v1479, %v1479
    %v1679 = vpack.c.b8 %v1678, %v1678
    %v1680 = vpack.c.b16 %v1481, %v1480
    %v1681 = vpack.c.b16 %v1483, %v1482
    %v1682 = vpack.c.b8 %v1681, %v1680
    %v1683 = vpack.c.b16 %v1484, %v1484
    %v1684 = vpack.c.b8 %v1683, %v1683
    %v1685 = vpack.c.b16 %v1486, %v1485
    %v1686 = vpack.c.b16 %v1488, %v1487
    %v1687 = vpack.c.b8 %v1686, %v1685
    %v1688 = vpack.c.b16 %v1489, %v1489
    %v1689 = vpack.c.b8 %v1688, %v1688
    %v1690 = vpack.c.b16 %v1491, %v1490
    %v1691 = vpack.c.b16 %v1493, %v1492
    %v1692 = vpack.c.b8 %v1691, %v1690
    %v1693 = vpack.c.b16 %v1494, %v1494
    %v1694 = vpack.c.b8 %v1693, %v1693
    %v1695 = vpack.c.b16 %v1496, %v1495
    %v1696 = vpack.c.b16 %v1498, %v1497
    %v1697 = vpack.c.b8 %v1696, %v1695
    %v1698 = vpack.c.b16 %v1499, %v1499
    %v1699 = vpack.c.b8 %v1698, %v1698
    %v1700 = vpack.c.b16 %v1501, %v1500
    %v1701 = vpack.c.b16 %v1503, %v1502
    %v1702 = vpack.c.b8 %v1701, %v1700
    %v1703 = vpack.c.b16 %v1504, %v1504
    %v1704 = vpack.c.b8 %v1703, %v1703
    %v1705 = vpack.c.b16 %v1506, %v1505
    %v1706 = vpack.c.b16 %v1508, %v1507
    %v1707 = vpack.c.b8 %v1706, %v1705
    %v1708 = vpack.c.b16 %v1509, %v1509
    %v1709 = vpack.c.b8 %v1708, %v1708
    %v1710 = vpack.c.b16 %v1511, %v1510
    %v1711 = vpack.c.b16 %v1513, %v1512
    %v1712 = vpack.c.b8 %v1711, %v1710
    %v1713 = vpack.c.b16 %v1514, %v1514
    %v1714 = vpack.c.b8 %v1713, %v1713
    %v1715 = vpack.c.b16 %v1516, %v1515
    %v1716 = vpack.c.b16 %v1518, %v1517
    %v1717 = vpack.c.b8 %v1716, %v1715
    %v1718 = vpack.c.b16 %v1519, %v1519
    %v1719 = vpack.c.b8 %v1718, %v1718
    %v1720 = vpack.c.b16 %v1521, %v1520
    %v1721 = vpack.c.b16 %v1523, %v1522
    %v1722 = vpack.c.b8 %v1721, %v1720
    %v1723 = vpack.c.b16 %v1524, %v1524
    %v1724 = vpack.c.b8 %v1723, %v1723
    %v1725 = vpack.c.b16 %v1526, %v1525
    %v1726 = vpack.c.b16 %v1528, %v1527
    %v1727 = vpack.c.b8 %v1726, %v1725
    %v1728 = vpack.c.b16 %v1529, %v1529
    %v1729 = vpack.c.b8 %v1728, %v1728
    %v1730 = vpack.c.b16 %v1531, %v1530
    %v1731 = vpack.c.b16 %v1533, %v1532
    %v1732 = vpack.c.b8 %v1731, %v1730
    %v1733 = vpack.c.b16 %v1534, %v1534
    %v1734 = vpack.c.b8 %v1733, %v1733
    %v1735 = vpack.c.b16 %v1536, %v1535
    %v1736 = vpack.c.b16 %v1538, %v1537
    %v1737 = vpack.c.b8 %v1736, %v1735
    %v1738 = vpack.c.b16 %v1539, %v1539
    %v1739 = vpack.c.b8 %v1738, %v1738
    %v1740 = vpack.c.b16 %v1541, %v1540
    %v1741 = vpack.c.b16 %v1543, %v1542
    %v1742 = vpack.c.b8 %v1741, %v1740
    %v1743 = vpack.c.b16 %v1544, %v1544
    %v1744 = vpack.c.b8 %v1743, %v1743
    %v1745 = vpack.c.b16 %v1546, %v1545
    %v1746 = vpack.c.b16 %v1548, %v1547
    %v1747 = vpack.c.b8 %v1746, %v1745
    %v1748 = vpack.c.b16 %v1549, %v1549
    %v1749 = vpack.c.b8 %v1748, %v1748
    %v1750 = vpack.c.b16 %v1551, %v1550
    %v1751 = vpack.c.b16 %v1553, %v1552
    %v1752 = vpack.c.b8 %v1751, %v1750
    %v1753 = vpack.c.b16 %v1554, %v1554
    %v1754 = vpack.c.b8 %v1753, %v1753
    %vm1755 = vnez %v1557
    %vm1756 = vnez %v1559
    %vm1757 = vnez %v1562
    %vm1758 = vnez %v1564
    %vm1759 = vnez %v1567
    %vm1760 = vnez %v1569
    %vm1761 = vnez %v1572
    %vm1762 = vnez %v1574
    %vm1763 = vnez %v1577
    %vm1764 = vnez %v1579
    %vm1765 = vnez %v1582
    %vm1766 = vnez %v1584
    %vm1767 = vnez %v1587
    %vm1768 = vnez %v1589
    %vm1769 = vnez %v1592
    %vm1770 = vnez %v1594
    %vm1771 = vnez %v1597
    %vm1772 = vnez %v1599
    %vm1773 = vnez %v1602
    %vm1774 = vnez %v1604
    %vm1775 = vnez %v1607
    %vm1776 = vnez %v1609
    %vm1777 = vnez %v1612
    %vm1778 = vnez %v1614
    %vm1779 = vnez %v1617
    %vm1780 = vnez %v1619
    %vm1781 = vnez %v1622
    %vm1782 = vnez %v1624
    %vm1783 = vnez %v1627
    %vm1784 = vnez %v1629
    %vm1785 = vnez %v1632
    %vm1786 = vnez %v1634
    %vm1787 = vnez %v1637
    %vm1788 = vnez %v1639
    %vm1789 = vnez %v1642
    %vm1790 = vnez %v1644
    %vm1791 = vnez %v1647
    %vm1792 = vnez %v1649
    %vm1793 = vnez %v1652
    %vm1794 = vnez %v1654
    %vm1795 = vnez %v1657
    %vm1796 = vnez %v1659
    %vm1797 = vnez %v1662
    %vm1798 = vnez %v1664
    %vm1799 = vnez %v1667
    %vm1800 = vnez %v1669
    %vm1801 = vnez %v1672
    %vm1802 = vnez %v1674
    %vm1803 = vnez %v1677
    %vm1804 = vnez %v1679
    %vm1805 = vnez %v1682
    %vm1806 = vnez %v1684
    %vm1807 = vnez %v1687
    %vm1808 = vnez %v1689
    %vm1809 = vnez %v1692
    %vm1810 = vnez %v1694
    %vm1811 = vnez %v1697
    %vm1812 = vnez %v1699
    %vm1813 = vnez %v1702
    %vm1814 = vnez %v1704
    %vm1815 = vnez %v1707
    %vm1816 = vnez %v1709
    %vm1817 = vnez %v1712
    %vm1818 = vnez %v1714
    %vm1819 = vnez %v1717
    %vm1820 = vnez %v1719
    %vm1821 = vnez %v1722
    %vm1822 = vnez %v1724
    %vm1823 = vnez %v1727
    %vm1824 = vnez %v1729
    %vm1825 = vnez %v1732
    %vm1826 = vnez %v1734
    %vm1827 = vnez %v1737
    %vm1828 = vnez %v1739
    %vm1829 = vnez %v1742
    %vm1830 = vnez %v1744
    %vm1831 = vnez %v1747
    %vm1832 = vnez %v1749
    %vm1833 = vnez %v1752
    %vm1834 = vnez %v1754
    %v1835 = vsel %vm1755, 16843009, 0
    %v1836 = vsel %vm1756, 16843009, 0
    %v1837 = vsel %vm1757, 16843009, 0
    %v1838 = vsel %vm1758, 16843009, 0
    %v1839 = vsel %vm1759, 16843009, 0
    %v1840 = vsel %vm1760, 16843009, 0
    %v1841 = vsel %vm1761, 16843009, 0
    %v1842 = vsel %vm1762, 16843009, 0
    %v1843 = vsel %vm1763, 16843009, 0
    %v1844 = vsel %vm1764, 16843009, 0
    %v1845 = vsel %vm1765, 16843009, 0
    %v1846 = vsel %vm1766, 16843009, 0
    %v1847 = vsel %vm1767, 16843009, 0
    %v1848 = vsel %vm1768, 16843009, 0
    %v1849 = vsel %vm1769, 16843009, 0
    %v1850 = vsel %vm1770, 16843009, 0
    %v1851 = vsel %vm1771, 16843009, 0
    %v1852 = vsel %vm1772, 16843009, 0
    %v1853 = vsel %vm1773, 16843009, 0
    %v1854 = vsel %vm1774, 16843009, 0
    %v1855 = vsel %vm1775, 16843009, 0
    %v1856 = vsel %vm1776, 16843009, 0
    %v1857 = vsel %vm1777, 16843009, 0
    %v1858 = vsel %vm1778, 16843009, 0
    %v1859 = vsel %vm1779, 16843009, 0
    %v1860 = vsel %vm1780, 16843009, 0
    %v1861 = vsel %vm1781, 16843009, 0
    %v1862 = vsel %vm1782, 16843009, 0
    %v1863 = vsel %vm1783, 16843009, 0
    %v1864 = vsel %vm1784, 16843009, 0
    %v1865 = vsel %vm1785, 16843009, 0
    %v1866 = vsel %vm1786, 16843009, 0
    %v1867 = vsel %vm1787, 16843009, 0
    %v1868 = vsel %vm1788, 16843009, 0
    %v1869 = vsel %vm1789, 16843009, 0
    %v1870 = vsel %vm1790, 16843009, 0
    %v1871 = vsel %vm1791, 16843009, 0
    %v1872 = vsel %vm1792, 16843009, 0
    %v1873 = vsel %vm1793, 16843009, 0
    %v1874 = vsel %vm1794, 16843009, 0
    %v1875 = vsel %vm1795, 16843009, 0
    %v1876 = vsel %vm1796, 16843009, 0
    %v1877 = vsel %vm1797, 16843009, 0
    %v1878 = vsel %vm1798, 16843009, 0
    %v1879 = vsel %vm1799, 16843009, 0
    %v1880 = vsel %vm1800, 16843009, 0
    %v1881 = vsel %vm1801, 16843009, 0
    %v1882 = vsel %vm1802, 16843009, 0
    %v1883 = vsel %vm1803, 16843009, 0
    %v1884 = vsel %vm1804, 16843009, 0
    %v1885 = vsel %vm1805, 16843009, 0
    %v1886 = vsel %vm1806, 16843009, 0
    %v1887 = vsel %vm1807, 16843009, 0
    %v1888 = vsel %vm1808, 16843009, 0
    %v1889 = vsel %vm1809, 16843009, 0
    %v1890 = vsel %vm1810, 16843009, 0
    %v1891 = vsel %vm1811, 16843009, 0
    %v1892 = vsel %vm1812, 16843009, 0
    %v1893 = vsel %vm1813, 16843009, 0
    %v1894 = vsel %vm1814, 16843009, 0
    %v1895 = vsel %vm1815, 16843009, 0
    %v1896 = vsel %vm1816, 16843009, 0
    %v1897 = vsel %vm1817, 16843009, 0
    %v1898 = vsel %vm1818, 16843009, 0
    %v1899 = vsel %vm1819, 16843009, 0
    %v1900 = vsel %vm1820, 16843009, 0
    %v1901 = vsel %vm1821, 16843009, 0
    %v1902 = vsel %vm1822, 16843009, 0
    %v1903 = vsel %vm1823, 16843009, 0
    %v1904 = vsel %vm1824, 16843009, 0
    %v1905 = vsel %vm1825, 16843009, 0
    %v1906 = vsel %vm1826, 16843009, 0
    %v1907 = vsel %vm1827, 16843009, 0
    %v1908 = vsel %vm1828, 16843009, 0
    %v1909 = vsel %vm1829, 16843009, 0
    %v1910 = vsel %vm1830, 16843009, 0
    %v1911 = vsel %vm1831, 16843009, 0
    %v1912 = vsel %vm1832, 16843009, 0
    %v1913 = vsel %vm1833, 16843009, 0
    %v1914 = vsel %vm1834, 16843009, 0
    %v1915 = vunpack.c.0.s8 %v1835
    %v1916 = vunpack.c.1.s8 %v1835
    %v1917 = vunpack.c.2.s8 %v1835
    %v1918 = vunpack.c.3.s8 %v1835
    %v1919 = vunpack.c.0.s8 %v1836
    %v1920 = vunpack.c.0.s8 %v1837
    %v1921 = vunpack.c.1.s8 %v1837
    %v1922 = vunpack.c.2.s8 %v1837
    %v1923 = vunpack.c.3.s8 %v1837
    %v1924 = vunpack.c.0.s8 %v1838
    %v1925 = vunpack.c.0.s8 %v1839
    %v1926 = vunpack.c.1.s8 %v1839
    %v1927 = vunpack.c.2.s8 %v1839
    %v1928 = vunpack.c.3.s8 %v1839
    %v1929 = vunpack.c.0.s8 %v1840
    %v1930 = vunpack.c.0.s8 %v1841
    %v1931 = vunpack.c.1.s8 %v1841
    %v1932 = vunpack.c.2.s8 %v1841
    %v1933 = vunpack.c.3.s8 %v1841
    %v1934 = vunpack.c.0.s8 %v1842
    %v1935 = vunpack.c.0.s8 %v1843
    %v1936 = vunpack.c.1.s8 %v1843
    %v1937 = vunpack.c.2.s8 %v1843
    %v1938 = vunpack.c.3.s8 %v1843
    %v1939 = vunpack.c.0.s8 %v1844
    %v1940 = vunpack.c.0.s8 %v1845
    %v1941 = vunpack.c.1.s8 %v1845
    %v1942 = vunpack.c.2.s8 %v1845
    %v1943 = vunpack.c.3.s8 %v1845
    %v1944 = vunpack.c.0.s8 %v1846
    %v1945 = vunpack.c.0.s8 %v1847
    %v1946 = vunpack.c.1.s8 %v1847
    %v1947 = vunpack.c.2.s8 %v1847
    %v1948 = vunpack.c.3.s8 %v1847
    %v1949 = vunpack.c.0.s8 %v1848
    %v1950 = vunpack.c.0.s8 %v1849
    %v1951 = vunpack.c.1.s8 %v1849
    %v1952 = vunpack.c.2.s8 %v1849
    %v1953 = vunpack.c.3.s8 %v1849
    %v1954 = vunpack.c.0.s8 %v1850
    %v1955 = vunpack.c.0.s8 %v1851
    %v1956 = vunpack.c.1.s8 %v1851
    %v1957 = vunpack.c.2.s8 %v1851
    %v1958 = vunpack.c.3.s8 %v1851
    %v1959 = vunpack.c.0.s8 %v1852
    %v1960 = vunpack.c.0.s8 %v1853
    %v1961 = vunpack.c.1.s8 %v1853
    %v1962 = vunpack.c.2.s8 %v1853
    %v1963 = vunpack.c.3.s8 %v1853
    %v1964 = vunpack.c.0.s8 %v1854
    %v1965 = vunpack.c.0.s8 %v1855
    %v1966 = vunpack.c.1.s8 %v1855
    %v1967 = vunpack.c.2.s8 %v1855
    %v1968 = vunpack.c.3.s8 %v1855
    %v1969 = vunpack.c.0.s8 %v1856
    %v1970 = vunpack.c.0.s8 %v1857
    %v1971 = vunpack.c.1.s8 %v1857
    %v1972 = vunpack.c.2.s8 %v1857
    %v1973 = vunpack.c.3.s8 %v1857
    %v1974 = vunpack.c.0.s8 %v1858
    %v1975 = vunpack.c.0.s8 %v1859
    %v1976 = vunpack.c.1.s8 %v1859
    %v1977 = vunpack.c.2.s8 %v1859
    %v1978 = vunpack.c.3.s8 %v1859
    %v1979 = vunpack.c.0.s8 %v1860
    %v1980 = vunpack.c.0.s8 %v1861
    %v1981 = vunpack.c.1.s8 %v1861
    %v1982 = vunpack.c.2.s8 %v1861
    %v1983 = vunpack.c.3.s8 %v1861
    %v1984 = vunpack.c.0.s8 %v1862
    %v1985 = vunpack.c.0.s8 %v1863
    %v1986 = vunpack.c.1.s8 %v1863
    %v1987 = vunpack.c.2.s8 %v1863
    %v1988 = vunpack.c.3.s8 %v1863
    %v1989 = vunpack.c.0.s8 %v1864
    %v1990 = vunpack.c.0.s8 %v1865
    %v1991 = vunpack.c.1.s8 %v1865
    %v1992 = vunpack.c.2.s8 %v1865
    %v1993 = vunpack.c.3.s8 %v1865
    %v1994 = vunpack.c.0.s8 %v1866
    %v1995 = vunpack.c.0.s8 %v1867
    %v1996 = vunpack.c.1.s8 %v1867
    %v1997 = vunpack.c.2.s8 %v1867
    %v1998 = vunpack.c.3.s8 %v1867
    %v1999 = vunpack.c.0.s8 %v1868
    %v2000 = vunpack.c.0.s8 %v1869
    %v2001 = vunpack.c.1.s8 %v1869
    %v2002 = vunpack.c.2.s8 %v1869
    %v2003 = vunpack.c.3.s8 %v1869
    %v2004 = vunpack.c.0.s8 %v1870
    %v2005 = vunpack.c.0.s8 %v1871
    %v2006 = vunpack.c.1.s8 %v1871
    %v2007 = vunpack.c.2.s8 %v1871
    %v2008 = vunpack.c.3.s8 %v1871
    %v2009 = vunpack.c.0.s8 %v1872
    %v2010 = vunpack.c.0.s8 %v1873
    %v2011 = vunpack.c.1.s8 %v1873
    %v2012 = vunpack.c.2.s8 %v1873
    %v2013 = vunpack.c.3.s8 %v1873
    %v2014 = vunpack.c.0.s8 %v1874
    %v2015 = vunpack.c.0.s8 %v1875
    %v2016 = vunpack.c.1.s8 %v1875
    %v2017 = vunpack.c.2.s8 %v1875
    %v2018 = vunpack.c.3.s8 %v1875
    %v2019 = vunpack.c.0.s8 %v1876
    %v2020 = vunpack.c.0.s8 %v1877
    %v2021 = vunpack.c.1.s8 %v1877
    %v2022 = vunpack.c.2.s8 %v1877
    %v2023 = vunpack.c.3.s8 %v1877
    %v2024 = vunpack.c.0.s8 %v1878
    %v2025 = vunpack.c.0.s8 %v1879
    %v2026 = vunpack.c.1.s8 %v1879
    %v2027 = vunpack.c.2.s8 %v1879
    %v2028 = vunpack.c.3.s8 %v1879
    %v2029 = vunpack.c.0.s8 %v1880
    %v2030 = vunpack.c.0.s8 %v1881
    %v2031 = vunpack.c.1.s8 %v1881
    %v2032 = vunpack.c.2.s8 %v1881
    %v2033 = vunpack.c.3.s8 %v1881
    %v2034 = vunpack.c.0.s8 %v1882
    %v2035 = vunpack.c.0.s8 %v1883
    %v2036 = vunpack.c.1.s8 %v1883
    %v2037 = vunpack.c.2.s8 %v1883
    %v2038 = vunpack.c.3.s8 %v1883
    %v2039 = vunpack.c.0.s8 %v1884
    %v2040 = vunpack.c.0.s8 %v1885
    %v2041 = vunpack.c.1.s8 %v1885
    %v2042 = vunpack.c.2.s8 %v1885
    %v2043 = vunpack.c.3.s8 %v1885
    %v2044 = vunpack.c.0.s8 %v1886
    %v2045 = vunpack.c.0.s8 %v1887
    %v2046 = vunpack.c.1.s8 %v1887
    %v2047 = vunpack.c.2.s8 %v1887
    %v2048 = vunpack.c.3.s8 %v1887
    %v2049 = vunpack.c.0.s8 %v1888
    %v2050 = vunpack.c.0.s8 %v1889
    %v2051 = vunpack.c.1.s8 %v1889
    %v2052 = vunpack.c.2.s8 %v1889
    %v2053 = vunpack.c.3.s8 %v1889
    %v2054 = vunpack.c.0.s8 %v1890
    %v2055 = vunpack.c.0.s8 %v1891
    %v2056 = vunpack.c.1.s8 %v1891
    %v2057 = vunpack.c.2.s8 %v1891
    %v2058 = vunpack.c.3.s8 %v1891
    %v2059 = vunpack.c.0.s8 %v1892
    %v2060 = vunpack.c.0.s8 %v1893
    %v2061 = vunpack.c.1.s8 %v1893
    %v2062 = vunpack.c.2.s8 %v1893
    %v2063 = vunpack.c.3.s8 %v1893
    %v2064 = vunpack.c.0.s8 %v1894
    %v2065 = vunpack.c.0.s8 %v1895
    %v2066 = vunpack.c.1.s8 %v1895
    %v2067 = vunpack.c.2.s8 %v1895
    %v2068 = vunpack.c.3.s8 %v1895
    %v2069 = vunpack.c.0.s8 %v1896
    %v2070 = vunpack.c.0.s8 %v1897
    %v2071 = vunpack.c.1.s8 %v1897
    %v2072 = vunpack.c.2.s8 %v1897
    %v2073 = vunpack.c.3.s8 %v1897
    %v2074 = vunpack.c.0.s8 %v1898
    %v2075 = vunpack.c.0.s8 %v1899
    %v2076 = vunpack.c.1.s8 %v1899
    %v2077 = vunpack.c.2.s8 %v1899
    %v2078 = vunpack.c.3.s8 %v1899
    %v2079 = vunpack.c.0.s8 %v1900
    %v2080 = vunpack.c.0.s8 %v1901
    %v2081 = vunpack.c.1.s8 %v1901
    %v2082 = vunpack.c.2.s8 %v1901
    %v2083 = vunpack.c.3.s8 %v1901
    %v2084 = vunpack.c.0.s8 %v1902
    %v2085 = vunpack.c.0.s8 %v1903
    %v2086 = vunpack.c.1.s8 %v1903
    %v2087 = vunpack.c.2.s8 %v1903
    %v2088 = vunpack.c.3.s8 %v1903
    %v2089 = vunpack.c.0.s8 %v1904
    %v2090 = vunpack.c.0.s8 %v1905
    %v2091 = vunpack.c.1.s8 %v1905
    %v2092 = vunpack.c.2.s8 %v1905
    %v2093 = vunpack.c.3.s8 %v1905
    %v2094 = vunpack.c.0.s8 %v1906
    %v2095 = vunpack.c.0.s8 %v1907
    %v2096 = vunpack.c.1.s8 %v1907
    %v2097 = vunpack.c.2.s8 %v1907
    %v2098 = vunpack.c.3.s8 %v1907
    %v2099 = vunpack.c.0.s8 %v1908
    %v2100 = vunpack.c.0.s8 %v1909
    %v2101 = vunpack.c.1.s8 %v1909
    %v2102 = vunpack.c.2.s8 %v1909
    %v2103 = vunpack.c.3.s8 %v1909
    %v2104 = vunpack.c.0.s8 %v1910
    %v2105 = vunpack.c.0.s8 %v1911
    %v2106 = vunpack.c.1.s8 %v1911
    %v2107 = vunpack.c.2.s8 %v1911
    %v2108 = vunpack.c.3.s8 %v1911
    %v2109 = vunpack.c.0.s8 %v1912
    %v2110 = vunpack.c.0.s8 %v1913
    %v2111 = vunpack.c.1.s8 %v1913
    %v2112 = vunpack.c.2.s8 %v1913
    %v2113 = vunpack.c.3.s8 %v1913
    %v2114 = vunpack.c.0.s8 %v1914
    %vm2115 = vcmp.ne.s32.totalorder %v1915, 0
    %vm2116 = vcmp.ne.s32.totalorder %v1916, 0
    %vm2117 = vcmp.ne.s32.totalorder %v1917, 0
    %vm2118 = vcmp.ne.s32.totalorder %v1918, 0
    %vm2119 = vcmp.ne.s32.totalorder %v1919, 0
    %vm2120 = vcmp.ne.s32.totalorder %v1920, 0
    %vm2121 = vcmp.ne.s32.totalorder %v1921, 0
    %vm2122 = vcmp.ne.s32.totalorder %v1922, 0
    %vm2123 = vcmp.ne.s32.totalorder %v1923, 0
    %vm2124 = vcmp.ne.s32.totalorder %v1924, 0
    %vm2125 = vcmp.ne.s32.totalorder %v1925, 0
    %vm2126 = vcmp.ne.s32.totalorder %v1926, 0
    %vm2127 = vcmp.ne.s32.totalorder %v1927, 0
    %vm2128 = vcmp.ne.s32.totalorder %v1928, 0
    %vm2129 = vcmp.ne.s32.totalorder %v1929, 0
    %vm2130 = vcmp.ne.s32.totalorder %v1930, 0
    %vm2131 = vcmp.ne.s32.totalorder %v1931, 0
    %vm2132 = vcmp.ne.s32.totalorder %v1932, 0
    %vm2133 = vcmp.ne.s32.totalorder %v1933, 0
    %vm2134 = vcmp.ne.s32.totalorder %v1934, 0
    %vm2135 = vcmp.ne.s32.totalorder %v1935, 0
    %vm2136 = vcmp.ne.s32.totalorder %v1936, 0
    %vm2137 = vcmp.ne.s32.totalorder %v1937, 0
    %vm2138 = vcmp.ne.s32.totalorder %v1938, 0
    %vm2139 = vcmp.ne.s32.totalorder %v1939, 0
    %vm2140 = vcmp.ne.s32.totalorder %v1940, 0
    %vm2141 = vcmp.ne.s32.totalorder %v1941, 0
    %vm2142 = vcmp.ne.s32.totalorder %v1942, 0
    %vm2143 = vcmp.ne.s32.totalorder %v1943, 0
    %vm2144 = vcmp.ne.s32.totalorder %v1944, 0
    %vm2145 = vcmp.ne.s32.totalorder %v1945, 0
    %vm2146 = vcmp.ne.s32.totalorder %v1946, 0
    %vm2147 = vcmp.ne.s32.totalorder %v1947, 0
    %vm2148 = vcmp.ne.s32.totalorder %v1948, 0
    %vm2149 = vcmp.ne.s32.totalorder %v1949, 0
    %vm2150 = vcmp.ne.s32.totalorder %v1950, 0
    %vm2151 = vcmp.ne.s32.totalorder %v1951, 0
    %vm2152 = vcmp.ne.s32.totalorder %v1952, 0
    %vm2153 = vcmp.ne.s32.totalorder %v1953, 0
    %vm2154 = vcmp.ne.s32.totalorder %v1954, 0
    %vm2155 = vcmp.ne.s32.totalorder %v1955, 0
    %vm2156 = vcmp.ne.s32.totalorder %v1956, 0
    %vm2157 = vcmp.ne.s32.totalorder %v1957, 0
    %vm2158 = vcmp.ne.s32.totalorder %v1958, 0
    %vm2159 = vcmp.ne.s32.totalorder %v1959, 0
    %vm2160 = vcmp.ne.s32.totalorder %v1960, 0
    %vm2161 = vcmp.ne.s32.totalorder %v1961, 0
    %vm2162 = vcmp.ne.s32.totalorder %v1962, 0
    %vm2163 = vcmp.ne.s32.totalorder %v1963, 0
    %vm2164 = vcmp.ne.s32.totalorder %v1964, 0
    %vm2165 = vcmp.ne.s32.totalorder %v1965, 0
    %vm2166 = vcmp.ne.s32.totalorder %v1966, 0
    %vm2167 = vcmp.ne.s32.totalorder %v1967, 0
    %vm2168 = vcmp.ne.s32.totalorder %v1968, 0
    %vm2169 = vcmp.ne.s32.totalorder %v1969, 0
    %vm2170 = vcmp.ne.s32.totalorder %v1970, 0
    %vm2171 = vcmp.ne.s32.totalorder %v1971, 0
    %vm2172 = vcmp.ne.s32.totalorder %v1972, 0
    %vm2173 = vcmp.ne.s32.totalorder %v1973, 0
    %vm2174 = vcmp.ne.s32.totalorder %v1974, 0
    %vm2175 = vcmp.ne.s32.totalorder %v1975, 0
    %vm2176 = vcmp.ne.s32.totalorder %v1976, 0
    %vm2177 = vcmp.ne.s32.totalorder %v1977, 0
    %vm2178 = vcmp.ne.s32.totalorder %v1978, 0
    %vm2179 = vcmp.ne.s32.totalorder %v1979, 0
    %vm2180 = vcmp.ne.s32.totalorder %v1980, 0
    %vm2181 = vcmp.ne.s32.totalorder %v1981, 0
    %vm2182 = vcmp.ne.s32.totalorder %v1982, 0
    %vm2183 = vcmp.ne.s32.totalorder %v1983, 0
    %vm2184 = vcmp.ne.s32.totalorder %v1984, 0
    %vm2185 = vcmp.ne.s32.totalorder %v1985, 0
    %vm2186 = vcmp.ne.s32.totalorder %v1986, 0
    %vm2187 = vcmp.ne.s32.totalorder %v1987, 0
    %vm2188 = vcmp.ne.s32.totalorder %v1988, 0
    %vm2189 = vcmp.ne.s32.totalorder %v1989, 0
    %vm2190 = vcmp.ne.s32.totalorder %v1990, 0
    %vm2191 = vcmp.ne.s32.totalorder %v1991, 0
    %vm2192 = vcmp.ne.s32.totalorder %v1992, 0
    %vm2193 = vcmp.ne.s32.totalorder %v1993, 0
    %vm2194 = vcmp.ne.s32.totalorder %v1994, 0
    %vm2195 = vcmp.ne.s32.totalorder %v1995, 0
    %vm2196 = vcmp.ne.s32.totalorder %v1996, 0
    %vm2197 = vcmp.ne.s32.totalorder %v1997, 0
    %vm2198 = vcmp.ne.s32.totalorder %v1998, 0
    %vm2199 = vcmp.ne.s32.totalorder %v1999, 0
    %vm2200 = vcmp.ne.s32.totalorder %v2000, 0
    %vm2201 = vcmp.ne.s32.totalorder %v2001, 0
    %vm2202 = vcmp.ne.s32.totalorder %v2002, 0
    %vm2203 = vcmp.ne.s32.totalorder %v2003, 0
    %vm2204 = vcmp.ne.s32.totalorder %v2004, 0
    %vm2205 = vcmp.ne.s32.totalorder %v2005, 0
    %vm2206 = vcmp.ne.s32.totalorder %v2006, 0
    %vm2207 = vcmp.ne.s32.totalorder %v2007, 0
    %vm2208 = vcmp.ne.s32.totalorder %v2008, 0
    %vm2209 = vcmp.ne.s32.totalorder %v2009, 0
    %vm2210 = vcmp.ne.s32.totalorder %v2010, 0
    %vm2211 = vcmp.ne.s32.totalorder %v2011, 0
    %vm2212 = vcmp.ne.s32.totalorder %v2012, 0
    %vm2213 = vcmp.ne.s32.totalorder %v2013, 0
    %vm2214 = vcmp.ne.s32.totalorder %v2014, 0
    %vm2215 = vcmp.ne.s32.totalorder %v2015, 0
    %vm2216 = vcmp.ne.s32.totalorder %v2016, 0
    %vm2217 = vcmp.ne.s32.totalorder %v2017, 0
    %vm2218 = vcmp.ne.s32.totalorder %v2018, 0
    %vm2219 = vcmp.ne.s32.totalorder %v2019, 0
    %vm2220 = vcmp.ne.s32.totalorder %v2020, 0
    %vm2221 = vcmp.ne.s32.totalorder %v2021, 0
    %vm2222 = vcmp.ne.s32.totalorder %v2022, 0
    %vm2223 = vcmp.ne.s32.totalorder %v2023, 0
    %vm2224 = vcmp.ne.s32.totalorder %v2024, 0
    %vm2225 = vcmp.ne.s32.totalorder %v2025, 0
    %vm2226 = vcmp.ne.s32.totalorder %v2026, 0
    %vm2227 = vcmp.ne.s32.totalorder %v2027, 0
    %vm2228 = vcmp.ne.s32.totalorder %v2028, 0
    %vm2229 = vcmp.ne.s32.totalorder %v2029, 0
    %vm2230 = vcmp.ne.s32.totalorder %v2030, 0
    %vm2231 = vcmp.ne.s32.totalorder %v2031, 0
    %vm2232 = vcmp.ne.s32.totalorder %v2032, 0
    %vm2233 = vcmp.ne.s32.totalorder %v2033, 0
    %vm2234 = vcmp.ne.s32.totalorder %v2034, 0
    %vm2235 = vcmp.ne.s32.totalorder %v2035, 0
    %vm2236 = vcmp.ne.s32.totalorder %v2036, 0
    %vm2237 = vcmp.ne.s32.totalorder %v2037, 0
    %vm2238 = vcmp.ne.s32.totalorder %v2038, 0
    %vm2239 = vcmp.ne.s32.totalorder %v2039, 0
    %vm2240 = vcmp.ne.s32.totalorder %v2040, 0
    %vm2241 = vcmp.ne.s32.totalorder %v2041, 0
    %vm2242 = vcmp.ne.s32.totalorder %v2042, 0
    %vm2243 = vcmp.ne.s32.totalorder %v2043, 0
    %vm2244 = vcmp.ne.s32.totalorder %v2044, 0
    %vm2245 = vcmp.ne.s32.totalorder %v2045, 0
    %vm2246 = vcmp.ne.s32.totalorder %v2046, 0
    %vm2247 = vcmp.ne.s32.totalorder %v2047, 0
    %vm2248 = vcmp.ne.s32.totalorder %v2048, 0
    %vm2249 = vcmp.ne.s32.totalorder %v2049, 0
    %vm2250 = vcmp.ne.s32.totalorder %v2050, 0
    %vm2251 = vcmp.ne.s32.totalorder %v2051, 0
    %vm2252 = vcmp.ne.s32.totalorder %v2052, 0
    %vm2253 = vcmp.ne.s32.totalorder %v2053, 0
    %vm2254 = vcmp.ne.s32.totalorder %v2054, 0
    %vm2255 = vcmp.ne.s32.totalorder %v2055, 0
    %vm2256 = vcmp.ne.s32.totalorder %v2056, 0
    %vm2257 = vcmp.ne.s32.totalorder %v2057, 0
    %vm2258 = vcmp.ne.s32.totalorder %v2058, 0
    %vm2259 = vcmp.ne.s32.totalorder %v2059, 0
    %vm2260 = vcmp.ne.s32.totalorder %v2060, 0
    %vm2261 = vcmp.ne.s32.totalorder %v2061, 0
    %vm2262 = vcmp.ne.s32.totalorder %v2062, 0
    %vm2263 = vcmp.ne.s32.totalorder %v2063, 0
    %vm2264 = vcmp.ne.s32.totalorder %v2064, 0
    %vm2265 = vcmp.ne.s32.totalorder %v2065, 0
    %vm2266 = vcmp.ne.s32.totalorder %v2066, 0
    %vm2267 = vcmp.ne.s32.totalorder %v2067, 0
    %vm2268 = vcmp.ne.s32.totalorder %v2068, 0
    %vm2269 = vcmp.ne.s32.totalorder %v2069, 0
    %vm2270 = vcmp.ne.s32.totalorder %v2070, 0
    %vm2271 = vcmp.ne.s32.totalorder %v2071, 0
    %vm2272 = vcmp.ne.s32.totalorder %v2072, 0
    %vm2273 = vcmp.ne.s32.totalorder %v2073, 0
    %vm2274 = vcmp.ne.s32.totalorder %v2074, 0
    %vm2275 = vcmp.ne.s32.totalorder %v2075, 0
    %vm2276 = vcmp.ne.s32.totalorder %v2076, 0
    %vm2277 = vcmp.ne.s32.totalorder %v2077, 0
    %vm2278 = vcmp.ne.s32.totalorder %v2078, 0
    %vm2279 = vcmp.ne.s32.totalorder %v2079, 0
    %vm2280 = vcmp.ne.s32.totalorder %v2080, 0
    %vm2281 = vcmp.ne.s32.totalorder %v2081, 0
    %vm2282 = vcmp.ne.s32.totalorder %v2082, 0
    %vm2283 = vcmp.ne.s32.totalorder %v2083, 0
    %vm2284 = vcmp.ne.s32.totalorder %v2084, 0
    %vm2285 = vcmp.ne.s32.totalorder %v2085, 0
    %vm2286 = vcmp.ne.s32.totalorder %v2086, 0
    %vm2287 = vcmp.ne.s32.totalorder %v2087, 0
    %vm2288 = vcmp.ne.s32.totalorder %v2088, 0
    %vm2289 = vcmp.ne.s32.totalorder %v2089, 0
    %vm2290 = vcmp.ne.s32.totalorder %v2090, 0
    %vm2291 = vcmp.ne.s32.totalorder %v2091, 0
    %vm2292 = vcmp.ne.s32.totalorder %v2092, 0
    %vm2293 = vcmp.ne.s32.totalorder %v2093, 0
    %vm2294 = vcmp.ne.s32.totalorder %v2094, 0
    %vm2295 = vcmp.ne.s32.totalorder %v2095, 0
    %vm2296 = vcmp.ne.s32.totalorder %v2096, 0
    %vm2297 = vcmp.ne.s32.totalorder %v2097, 0
    %vm2298 = vcmp.ne.s32.totalorder %v2098, 0
    %vm2299 = vcmp.ne.s32.totalorder %v2099, 0
    %vm2300 = vcmp.ne.s32.totalorder %v2100, 0
    %vm2301 = vcmp.ne.s32.totalorder %v2101, 0
    %vm2302 = vcmp.ne.s32.totalorder %v2102, 0
    %vm2303 = vcmp.ne.s32.totalorder %v2103, 0
    %vm2304 = vcmp.ne.s32.totalorder %v2104, 0
    %vm2305 = vcmp.ne.s32.totalorder %v2105, 0
    %vm2306 = vcmp.ne.s32.totalorder %v2106, 0
    %vm2307 = vcmp.ne.s32.totalorder %v2107, 0
    %vm2308 = vcmp.ne.s32.totalorder %v2108, 0
    %vm2309 = vcmp.ne.s32.totalorder %v2109, 0
    %vm2310 = vcmp.ne.s32.totalorder %v2110, 0
    %vm2311 = vcmp.ne.s32.totalorder %v2111, 0
    %vm2312 = vcmp.ne.s32.totalorder %v2112, 0
    %vm2313 = vcmp.ne.s32.totalorder %v2113, 0
    %vm2314 = vcmp.ne.s32.totalorder %v2114, 0
    %v2315 = vsel %vm2115, %v1005, 0.0
    %v2316 = vsel %vm2116, %v1006, 0.0
    %v2317 = vsel %vm2117, %v1007, 0.0
    %v2318 = vsel %vm2118, %v1008, 0.0
    %v2319 = vsel %vm2119, %v1009, 0.0
    %v2320 = vsel %vm2120, %v1010, 0.0
    %v2321 = vsel %vm2121, %v1011, 0.0
    %v2322 = vsel %vm2122, %v1012, 0.0
    %v2323 = vsel %vm2123, %v1013, 0.0
    %v2324 = vsel %vm2124, %v1014, 0.0
    %v2325 = vsel %vm2125, %v1015, 0.0
    %v2326 = vsel %vm2126, %v1016, 0.0
    %v2327 = vsel %vm2127, %v1017, 0.0
    %v2328 = vsel %vm2128, %v1018, 0.0
    %v2329 = vsel %vm2129, %v1019, 0.0
    %v2330 = vsel %vm2130, %v1020, 0.0
    %v2331 = vsel %vm2131, %v1021, 0.0
    %v2332 = vsel %vm2132, %v1022, 0.0
    %v2333 = vsel %vm2133, %v1023, 0.0
    %v2334 = vsel %vm2134, %v1024, 0.0
    %v2335 = vsel %vm2135, %v1025, 0.0
    %v2336 = vsel %vm2136, %v1026, 0.0
    %v2337 = vsel %vm2137, %v1027, 0.0
    %v2338 = vsel %vm2138, %v1028, 0.0
    %v2339 = vsel %vm2139, %v1029, 0.0
    %v2340 = vsel %vm2140, %v1030, 0.0
    %v2341 = vsel %vm2141, %v1031, 0.0
    %v2342 = vsel %vm2142, %v1032, 0.0
    %v2343 = vsel %vm2143, %v1033, 0.0
    %v2344 = vsel %vm2144, %v1034, 0.0
    %v2345 = vsel %vm2145, %v1035, 0.0
    %v2346 = vsel %vm2146, %v1036, 0.0
    %v2347 = vsel %vm2147, %v1037, 0.0
    %v2348 = vsel %vm2148, %v1038, 0.0
    %v2349 = vsel %vm2149, %v1039, 0.0
    %v2350 = vsel %vm2150, %v1040, 0.0
    %v2351 = vsel %vm2151, %v1041, 0.0
    %v2352 = vsel %vm2152, %v1042, 0.0
    %v2353 = vsel %vm2153, %v1043, 0.0
    %v2354 = vsel %vm2154, %v1044, 0.0
    %v2355 = vsel %vm2155, %v1045, 0.0
    %v2356 = vsel %vm2156, %v1046, 0.0
    %v2357 = vsel %vm2157, %v1047, 0.0
    %v2358 = vsel %vm2158, %v1048, 0.0
    %v2359 = vsel %vm2159, %v1049, 0.0
    %v2360 = vsel %vm2160, %v1050, 0.0
    %v2361 = vsel %vm2161, %v1051, 0.0
    %v2362 = vsel %vm2162, %v1052, 0.0
    %v2363 = vsel %vm2163, %v1053, 0.0
    %v2364 = vsel %vm2164, %v1054, 0.0
    %v2365 = vsel %vm2165, %v1055, 0.0
    %v2366 = vsel %vm2166, %v1056, 0.0
    %v2367 = vsel %vm2167, %v1057, 0.0
    %v2368 = vsel %vm2168, %v1058, 0.0
    %v2369 = vsel %vm2169, %v1059, 0.0
    %v2370 = vsel %vm2170, %v1060, 0.0
    %v2371 = vsel %vm2171, %v1061, 0.0
    %v2372 = vsel %vm2172, %v1062, 0.0
    %v2373 = vsel %vm2173, %v1063, 0.0
    %v2374 = vsel %vm2174, %v1064, 0.0
    %v2375 = vsel %vm2175, %v1065, 0.0
    %v2376 = vsel %vm2176, %v1066, 0.0
    %v2377 = vsel %vm2177, %v1067, 0.0
    %v2378 = vsel %vm2178, %v1068, 0.0
    %v2379 = vsel %vm2179, %v1069, 0.0
    %v2380 = vsel %vm2180, %v1070, 0.0
    %v2381 = vsel %vm2181, %v1071, 0.0
    %v2382 = vsel %vm2182, %v1072, 0.0
    %v2383 = vsel %vm2183, %v1073, 0.0
    %v2384 = vsel %vm2184, %v1074, 0.0
    %v2385 = vsel %vm2185, %v1075, 0.0
    %v2386 = vsel %vm2186, %v1076, 0.0
    %v2387 = vsel %vm2187, %v1077, 0.0
    %v2388 = vsel %vm2188, %v1078, 0.0
    %v2389 = vsel %vm2189, %v1079, 0.0
    %v2390 = vsel %vm2190, %v1080, 0.0
    %v2391 = vsel %vm2191, %v1081, 0.0
    %v2392 = vsel %vm2192, %v1082, 0.0
    %v2393 = vsel %vm2193, %v1083, 0.0
    %v2394 = vsel %vm2194, %v1084, 0.0
    %v2395 = vsel %vm2195, %v1085, 0.0
    %v2396 = vsel %vm2196, %v1086, 0.0
    %v2397 = vsel %vm2197, %v1087, 0.0
    %v2398 = vsel %vm2198, %v1088, 0.0
    %v2399 = vsel %vm2199, %v1089, 0.0
    %v2400 = vsel %vm2200, %v1090, 0.0
    %v2401 = vsel %vm2201, %v1091, 0.0
    %v2402 = vsel %vm2202, %v1092, 0.0
    %v2403 = vsel %vm2203, %v1093, 0.0
    %v2404 = vsel %vm2204, %v1094, 0.0
    %v2405 = vsel %vm2205, %v1095, 0.0
    %v2406 = vsel %vm2206, %v1096, 0.0
    %v2407 = vsel %vm2207, %v1097, 0.0
    %v2408 = vsel %vm2208, %v1098, 0.0
    %v2409 = vsel %vm2209, %v1099, 0.0
    %v2410 = vsel %vm2210, %v1100, 0.0
    %v2411 = vsel %vm2211, %v1101, 0.0
    %v2412 = vsel %vm2212, %v1102, 0.0
    %v2413 = vsel %vm2213, %v1103, 0.0
    %v2414 = vsel %vm2214, %v1104, 0.0
    %v2415 = vsel %vm2215, %v1105, 0.0
    %v2416 = vsel %vm2216, %v1106, 0.0
    %v2417 = vsel %vm2217, %v1107, 0.0
    %v2418 = vsel %vm2218, %v1108, 0.0
    %v2419 = vsel %vm2219, %v1109, 0.0
    %v2420 = vsel %vm2220, %v1110, 0.0
    %v2421 = vsel %vm2221, %v1111, 0.0
    %v2422 = vsel %vm2222, %v1112, 0.0
    %v2423 = vsel %vm2223, %v1113, 0.0
    %v2424 = vsel %vm2224, %v1114, 0.0
    %v2425 = vsel %vm2225, %v1115, 0.0
    %v2426 = vsel %vm2226, %v1116, 0.0
    %v2427 = vsel %vm2227, %v1117, 0.0
    %v2428 = vsel %vm2228, %v1118, 0.0
    %v2429 = vsel %vm2229, %v1119, 0.0
    %v2430 = vsel %vm2230, %v1120, 0.0
    %v2431 = vsel %vm2231, %v1121, 0.0
    %v2432 = vsel %vm2232, %v1122, 0.0
    %v2433 = vsel %vm2233, %v1123, 0.0
    %v2434 = vsel %vm2234, %v1124, 0.0
    %v2435 = vsel %vm2235, %v1125, 0.0
    %v2436 = vsel %vm2236, %v1126, 0.0
    %v2437 = vsel %vm2237, %v1127, 0.0
    %v2438 = vsel %vm2238, %v1128, 0.0
    %v2439 = vsel %vm2239, %v1129, 0.0
    %v2440 = vsel %vm2240, %v1130, 0.0
    %v2441 = vsel %vm2241, %v1131, 0.0
    %v2442 = vsel %vm2242, %v1132, 0.0
    %v2443 = vsel %vm2243, %v1133, 0.0
    %v2444 = vsel %vm2244, %v1134, 0.0
    %v2445 = vsel %vm2245, %v1135, 0.0
    %v2446 = vsel %vm2246, %v1136, 0.0
    %v2447 = vsel %vm2247, %v1137, 0.0
    %v2448 = vsel %vm2248, %v1138, 0.0
    %v2449 = vsel %vm2249, %v1139, 0.0
    %v2450 = vsel %vm2250, %v1140, 0.0
    %v2451 = vsel %vm2251, %v1141, 0.0
    %v2452 = vsel %vm2252, %v1142, 0.0
    %v2453 = vsel %vm2253, %v1143, 0.0
    %v2454 = vsel %vm2254, %v1144, 0.0
    %v2455 = vsel %vm2255, %v1145, 0.0
    %v2456 = vsel %vm2256, %v1146, 0.0
    %v2457 = vsel %vm2257, %v1147, 0.0
    %v2458 = vsel %vm2258, %v1148, 0.0
    %v2459 = vsel %vm2259, %v1149, 0.0
    %v2460 = vsel %vm2260, %v1150, 0.0
    %v2461 = vsel %vm2261, %v1151, 0.0
    %v2462 = vsel %vm2262, %v1152, 0.0
    %v2463 = vsel %vm2263, %v1153, 0.0
    %v2464 = vsel %vm2264, %v1154, 0.0
    %v2465 = vsel %vm2265, %v1155, 0.0
    %v2466 = vsel %vm2266, %v1156, 0.0
    %v2467 = vsel %vm2267, %v1157, 0.0
    %v2468 = vsel %vm2268, %v1158, 0.0
    %v2469 = vsel %vm2269, %v1159, 0.0
    %v2470 = vsel %vm2270, %v1160, 0.0
    %v2471 = vsel %vm2271, %v1161, 0.0
    %v2472 = vsel %vm2272, %v1162, 0.0
    %v2473 = vsel %vm2273, %v1163, 0.0
    %v2474 = vsel %vm2274, %v1164, 0.0
    %v2475 = vsel %vm2275, %v1165, 0.0
    %v2476 = vsel %vm2276, %v1166, 0.0
    %v2477 = vsel %vm2277, %v1167, 0.0
    %v2478 = vsel %vm2278, %v1168, 0.0
    %v2479 = vsel %vm2279, %v1169, 0.0
    %v2480 = vsel %vm2280, %v1170, 0.0
    %v2481 = vsel %vm2281, %v1171, 0.0
    %v2482 = vsel %vm2282, %v1172, 0.0
    %v2483 = vsel %vm2283, %v1173, 0.0
    %v2484 = vsel %vm2284, %v1174, 0.0
    %v2485 = vsel %vm2285, %v1175, 0.0
    %v2486 = vsel %vm2286, %v1176, 0.0
    %v2487 = vsel %vm2287, %v1177, 0.0
    %v2488 = vsel %vm2288, %v1178, 0.0
    %v2489 = vsel %vm2289, %v1179, 0.0
    %v2490 = vsel %vm2290, %v1180, 0.0
    %v2491 = vsel %vm2291, %v1181, 0.0
    %v2492 = vsel %vm2292, %v1182, 0.0
    %v2493 = vsel %vm2293, %v1183, 0.0
    %v2494 = vsel %vm2294, %v1184, 0.0
    %v2495 = vsel %vm2295, %v1185, 0.0
    %v2496 = vsel %vm2296, %v1186, 0.0
    %v2497 = vsel %vm2297, %v1187, 0.0
    %v2498 = vsel %vm2298, %v1188, 0.0
    %v2499 = vsel %vm2299, %v1189, 0.0
    %v2500 = vsel %vm2300, %v1190, 0.0
    %v2501 = vsel %vm2301, %v1191, 0.0
    %v2502 = vsel %vm2302, %v1192, 0.0
    %v2503 = vsel %vm2303, %v1193, 0.0
    %v2504 = vsel %vm2304, %v1194, 0.0
    %v2505 = vsel %vm2305, %v1195, 0.0
    %v2506 = vsel %vm2306, %v1196, 0.0
    %v2507 = vsel %vm2307, %v1197, 0.0
    %v2508 = vsel %vm2308, %v1198, 0.0
    %v2509 = vsel %vm2309, %v1199, 0.0
    %v2510 = vsel %vm2310, %v1200, 0.0
    %v2511 = vsel %vm2311, %v1201, 0.0
    %v2512 = vsel %vm2312, %v1202, 0.0
    %v2513 = vsel %vm2313, %v1203, 0.0
    %v2514 = vsel %vm2314, %v1204, 0.0
    %v2515 = vpack.c.bf16 %v2320, %v2315
    %v2516 = vpack.c.bf16 %v2321, %v2316
    %v2517 = vpack.c.bf16 %v2322, %v2317
    %v2518 = vpack.c.bf16 %v2323, %v2318
    %v2519 = vpack.c.bf16 %v2324, %v2319
    %v2520 = vpack.c.bf16 %v2330, %v2325
    %v2521 = vpack.c.bf16 %v2331, %v2326
    %v2522 = vpack.c.bf16 %v2332, %v2327
    %v2523 = vpack.c.bf16 %v2333, %v2328
    %v2524 = vpack.c.bf16 %v2334, %v2329
    %v2525 = vpack.c.bf16 %v2340, %v2335
    %v2526 = vpack.c.bf16 %v2341, %v2336
    %v2527 = vpack.c.bf16 %v2342, %v2337
    %v2528 = vpack.c.bf16 %v2343, %v2338
    %v2529 = vpack.c.bf16 %v2344, %v2339
    %v2530 = vpack.c.bf16 %v2350, %v2345
    %v2531 = vpack.c.bf16 %v2351, %v2346
    %v2532 = vpack.c.bf16 %v2352, %v2347
    %v2533 = vpack.c.bf16 %v2353, %v2348
    %v2534 = vpack.c.bf16 %v2354, %v2349
    %v2535 = vpack.c.bf16 %v2360, %v2355
    %v2536 = vpack.c.bf16 %v2361, %v2356
    %v2537 = vpack.c.bf16 %v2362, %v2357
    %v2538 = vpack.c.bf16 %v2363, %v2358
    %v2539 = vpack.c.bf16 %v2364, %v2359
    %v2540 = vpack.c.bf16 %v2370, %v2365
    %v2541 = vpack.c.bf16 %v2371, %v2366
    %v2542 = vpack.c.bf16 %v2372, %v2367
    %v2543 = vpack.c.bf16 %v2373, %v2368
    %v2544 = vpack.c.bf16 %v2374, %v2369
    %v2545 = vpack.c.bf16 %v2380, %v2375
    %v2546 = vpack.c.bf16 %v2381, %v2376
    %v2547 = vpack.c.bf16 %v2382, %v2377
    %v2548 = vpack.c.bf16 %v2383, %v2378
    %v2549 = vpack.c.bf16 %v2384, %v2379
    %v2550 = vpack.c.bf16 %v2390, %v2385
    %v2551 = vpack.c.bf16 %v2391, %v2386
    %v2552 = vpack.c.bf16 %v2392, %v2387
    %v2553 = vpack.c.bf16 %v2393, %v2388
    %v2554 = vpack.c.bf16 %v2394, %v2389
    %v2555 = vpack.c.bf16 %v2400, %v2395
    %v2556 = vpack.c.bf16 %v2401, %v2396
    %v2557 = vpack.c.bf16 %v2402, %v2397
    %v2558 = vpack.c.bf16 %v2403, %v2398
    %v2559 = vpack.c.bf16 %v2404, %v2399
    %v2560 = vpack.c.bf16 %v2410, %v2405
    %v2561 = vpack.c.bf16 %v2411, %v2406
    %v2562 = vpack.c.bf16 %v2412, %v2407
    %v2563 = vpack.c.bf16 %v2413, %v2408
    %v2564 = vpack.c.bf16 %v2414, %v2409
    %v2565 = vpack.c.bf16 %v2420, %v2415
    %v2566 = vpack.c.bf16 %v2421, %v2416
    %v2567 = vpack.c.bf16 %v2422, %v2417
    %v2568 = vpack.c.bf16 %v2423, %v2418
    %v2569 = vpack.c.bf16 %v2424, %v2419
    %v2570 = vpack.c.bf16 %v2430, %v2425
    %v2571 = vpack.c.bf16 %v2431, %v2426
    %v2572 = vpack.c.bf16 %v2432, %v2427
    %v2573 = vpack.c.bf16 %v2433, %v2428
    %v2574 = vpack.c.bf16 %v2434, %v2429
    %v2575 = vpack.c.bf16 %v2440, %v2435
    %v2576 = vpack.c.bf16 %v2441, %v2436
    %v2577 = vpack.c.bf16 %v2442, %v2437
    %v2578 = vpack.c.bf16 %v2443, %v2438
    %v2579 = vpack.c.bf16 %v2444, %v2439
    %v2580 = vpack.c.bf16 %v2450, %v2445
    %v2581 = vpack.c.bf16 %v2451, %v2446
    %v2582 = vpack.c.bf16 %v2452, %v2447
    %v2583 = vpack.c.bf16 %v2453, %v2448
    %v2584 = vpack.c.bf16 %v2454, %v2449
    %v2585 = vpack.c.bf16 %v2460, %v2455
    %v2586 = vpack.c.bf16 %v2461, %v2456
    %v2587 = vpack.c.bf16 %v2462, %v2457
    %v2588 = vpack.c.bf16 %v2463, %v2458
    %v2589 = vpack.c.bf16 %v2464, %v2459
    %v2590 = vpack.c.bf16 %v2470, %v2465
    %v2591 = vpack.c.bf16 %v2471, %v2466
    %v2592 = vpack.c.bf16 %v2472, %v2467
    %v2593 = vpack.c.bf16 %v2473, %v2468
    %v2594 = vpack.c.bf16 %v2474, %v2469
    %v2595 = vpack.c.bf16 %v2480, %v2475
    %v2596 = vpack.c.bf16 %v2481, %v2476
    %v2597 = vpack.c.bf16 %v2482, %v2477
    %v2598 = vpack.c.bf16 %v2483, %v2478
    %v2599 = vpack.c.bf16 %v2484, %v2479
    %v2600 = vpack.c.bf16 %v2490, %v2485
    %v2601 = vpack.c.bf16 %v2491, %v2486
    %v2602 = vpack.c.bf16 %v2492, %v2487
    %v2603 = vpack.c.bf16 %v2493, %v2488
    %v2604 = vpack.c.bf16 %v2494, %v2489
    %v2605 = vpack.c.bf16 %v2500, %v2495
    %v2606 = vpack.c.bf16 %v2501, %v2496
    %v2607 = vpack.c.bf16 %v2502, %v2497
    %v2608 = vpack.c.bf16 %v2503, %v2498
    %v2609 = vpack.c.bf16 %v2504, %v2499
    %v2610 = vpack.c.bf16 %v2510, %v2505
    %v2611 = vpack.c.bf16 %v2511, %v2506
    %v2612 = vpack.c.bf16 %v2512, %v2507
    %v2613 = vpack.c.bf16 %v2513, %v2508
    %v2614 = vpack.c.bf16 %v2514, %v2509
    %s2615 = smul.u32 0, 640
    %s2616 = sshra.s32 %s2615, 3
    %s2617 = sand.u32 %s2615, 7
    %s2618 = smul.addr %s2616, 4
    %s2619 = scalar_lea.vmem %s1, %s2618
    %v2620 = vld [vmem:[%s2619] sm:$0xf]
    %v2621 = vld [vmem:[%s2619 + $0x4] sm:$0xf]
    %v2622 = vld [vmem:[%s2619 + $0x8] sm:$0xf]
    %v2623 = vld [vmem:[%s2619 + $0xc] sm:$0xf]
    %v2624 = vld [vmem:[%s2619 + $0x10] sm:$0xf]
    %v2625 = vld [vmem:[%s2619 + $0x14] sm:$0xf]
    %v2626 = vld [vmem:[%s2619 + $0x18] sm:$0xf]
    %v2627 = vld [vmem:[%s2619 + $0x1c] sm:$0xf]
    %v2628 = vld [vmem:[%s2619 + $0x20] sm:$0xf]
    %v2629 = vld [vmem:[%s2619 + $0x24] sm:$0xf]
    %v2630 = vld [vmem:[%s2619 + $0x28] sm:$0xf]
    %v2631 = vld [vmem:[%s2619 + $0x2c] sm:$0xf]
    %v2632 = vld [vmem:[%s2619 + $0x30] sm:$0xf]
    %v2633 = vld [vmem:[%s2619 + $0x34] sm:$0xf]
    %v2634 = vld [vmem:[%s2619 + $0x38] sm:$0xf]
    %v2635 = vld [vmem:[%s2619 + $0x3c] sm:$0xf]
    %v2636 = vld [vmem:[%s2619 + $0x40] sm:$0xf]
    %v2637 = vld [vmem:[%s2619 + $0x44] sm:$0xf]
    %v2638 = vld [vmem:[%s2619 + $0x48] sm:$0xf]
    %v2639 = vld [vmem:[%s2619 + $0x4c] sm:$0xf]
    %v2640 = vld [vmem:[%s2619 + $0x50] sm:$0xf]
    %v2641 = vld [vmem:[%s2619 + $0x54] sm:$0xf]
    %v2642 = vld [vmem:[%s2619 + $0x58] sm:$0xf]
    %v2643 = vld [vmem:[%s2619 + $0x5c] sm:$0xf]
    %v2644 = vld [vmem:[%s2619 + $0x60] sm:$0xf]
    %v2645 = vld [vmem:[%s2619 + $0x64] sm:$0xf]
    %v2646 = vld [vmem:[%s2619 + $0x68] sm:$0xf]
    %v2647 = vld [vmem:[%s2619 + $0x6c] sm:$0xf]
    %v2648 = vld [vmem:[%s2619 + $0x70] sm:$0xf]
    %v2649 = vld [vmem:[%s2619 + $0x74] sm:$0xf]
    %v2650 = vld [vmem:[%s2619 + $0x78] sm:$0xf]
    %v2651 = vld [vmem:[%s2619 + $0x7c] sm:$0xf]
    %v2652 = vld [vmem:[%s2619 + $0x80] sm:$0xf]
    %v2653 = vld [vmem:[%s2619 + $0x84] sm:$0xf]
    %v2654 = vld [vmem:[%s2619 + $0x88] sm:$0xf]
    %v2655 = vld [vmem:[%s2619 + $0x8c] sm:$0xf]
    %v2656 = vld [vmem:[%s2619 + $0x90] sm:$0xf]
    %v2657 = vld [vmem:[%s2619 + $0x94] sm:$0xf]
    %v2658 = vld [vmem:[%s2619 + $0x98] sm:$0xf]
    %v2659 = vld [vmem:[%s2619 + $0x9c] sm:$0xf]
    %v2660 = vld [vmem:[%s2619 + $0xa0] sm:$0xf]
    %v2661 = vld [vmem:[%s2619 + $0xa4] sm:$0xf]
    %v2662 = vld [vmem:[%s2619 + $0xa8] sm:$0xf]
    %v2663 = vld [vmem:[%s2619 + $0xac] sm:$0xf]
    %v2664 = vld [vmem:[%s2619 + $0xb0] sm:$0xf]
    %v2665 = vld [vmem:[%s2619 + $0xb4] sm:$0xf]
    %v2666 = vld [vmem:[%s2619 + $0xb8] sm:$0xf]
    %v2667 = vld [vmem:[%s2619 + $0xbc] sm:$0xf]
    %v2668 = vld [vmem:[%s2619 + $0xc0] sm:$0xf]
    %v2669 = vld [vmem:[%s2619 + $0xc4] sm:$0xf]
    %v2670 = vld [vmem:[%s2619 + $0xc8] sm:$0xf]
    %v2671 = vld [vmem:[%s2619 + $0xcc] sm:$0xf]
    %v2672 = vld [vmem:[%s2619 + $0xd0] sm:$0xf]
    %v2673 = vld [vmem:[%s2619 + $0xd4] sm:$0xf]
    %v2674 = vld [vmem:[%s2619 + $0xd8] sm:$0xf]
    %v2675 = vld [vmem:[%s2619 + $0xdc] sm:$0xf]
    %v2676 = vld [vmem:[%s2619 + $0xe0] sm:$0xf]
    %v2677 = vld [vmem:[%s2619 + $0xe4] sm:$0xf]
    %v2678 = vld [vmem:[%s2619 + $0xe8] sm:$0xf]
    %v2679 = vld [vmem:[%s2619 + $0xec] sm:$0xf]
    %v2680 = vld [vmem:[%s2619 + $0xf0] sm:$0xf]
    %v2681 = vld [vmem:[%s2619 + $0xf4] sm:$0xf]
    %v2682 = vld [vmem:[%s2619 + $0xf8] sm:$0xf]
    %v2683 = vld [vmem:[%s2619 + $0xfc] sm:$0xf]
    %v2684 = vld [vmem:[%s2619 + $0x100] sm:$0xf]
    %v2685 = vld [vmem:[%s2619 + $0x104] sm:$0xf]
    %v2686 = vld [vmem:[%s2619 + $0x108] sm:$0xf]
    %v2687 = vld [vmem:[%s2619 + $0x10c] sm:$0xf]
    %v2688 = vld [vmem:[%s2619 + $0x110] sm:$0xf]
    %v2689 = vld [vmem:[%s2619 + $0x114] sm:$0xf]
    %v2690 = vld [vmem:[%s2619 + $0x118] sm:$0xf]
    %v2691 = vld [vmem:[%s2619 + $0x11c] sm:$0xf]
    %v2692 = vld [vmem:[%s2619 + $0x120] sm:$0xf]
    %v2693 = vld [vmem:[%s2619 + $0x124] sm:$0xf]
    %v2694 = vld [vmem:[%s2619 + $0x128] sm:$0xf]
    %v2695 = vld [vmem:[%s2619 + $0x12c] sm:$0xf]
    %v2696 = vld [vmem:[%s2619 + $0x130] sm:$0xf]
    %v2697 = vld [vmem:[%s2619 + $0x134] sm:$0xf]
    %v2698 = vld [vmem:[%s2619 + $0x138] sm:$0xf]
    %v2699 = vld [vmem:[%s2619 + $0x13c] sm:$0xf]
    %v2700 = vld [vmem:[#allocation2] sm:$0xff]
    %v2701 = vld [vmem:[#allocation2 + $0x8] sm:$0xff]
    %v2702 = vld [vmem:[#allocation2 + $0x10] sm:$0xff]
    %v2703 = vld [vmem:[#allocation2 + $0x18] sm:$0xff]
    %v2704 = vld [vmem:[#allocation2 + $0x20] sm:$0xff]
    %v2705 = vld [vmem:[#allocation2 + $0x28] sm:$0xff]
    %v2706 = vld [vmem:[#allocation2 + $0x30] sm:$0xff]
    %v2707 = vld [vmem:[#allocation2 + $0x38] sm:$0xff]
    %v2708 = vld [vmem:[#allocation2 + $0x40] sm:$0xff]
    %v2709 = vld [vmem:[#allocation2 + $0x48] sm:$0xff]
    %v2710 = vld [vmem:[#allocation2 + $0x50] sm:$0xff]
    %v2711 = vld [vmem:[#allocation2 + $0x58] sm:$0xff]
    %v2712 = vld [vmem:[#allocation2 + $0x60] sm:$0xff]
    %v2713 = vld [vmem:[#allocation2 + $0x68] sm:$0xff]
    %v2714 = vld [vmem:[#allocation2 + $0x70] sm:$0xff]
    %v2715 = vld [vmem:[#allocation2 + $0x78] sm:$0xff]
    %v2716 = vld [vmem:[#allocation2 + $0x80] sm:$0xff]
    %v2717 = vld [vmem:[#allocation2 + $0x88] sm:$0xff]
    %v2718 = vld [vmem:[#allocation2 + $0x90] sm:$0xff]
    %v2719 = vld [vmem:[#allocation2 + $0x98] sm:$0xff]
    %v2720 = vld [vmem:[#allocation2 + $0xa0] sm:$0xff]
    %v2721 = vld [vmem:[#allocation2 + $0xa8] sm:$0xff]
    %v2722 = vld [vmem:[#allocation2 + $0xb0] sm:$0xff]
    %v2723 = vld [vmem:[#allocation2 + $0xb8] sm:$0xff]
    %v2724 = vld [vmem:[#allocation2 + $0xc0] sm:$0xff]
    %v2725 = vld [vmem:[#allocation2 + $0xc8] sm:$0xff]
    %v2726 = vld [vmem:[#allocation2 + $0xd0] sm:$0xff]
    %v2727 = vld [vmem:[#allocation2 + $0xd8] sm:$0xff]
    %v2728 = vld [vmem:[#allocation2 + $0xe0] sm:$0xff]
    %v2729 = vld [vmem:[#allocation2 + $0xe8] sm:$0xff]
    %v2730 = vld [vmem:[#allocation2 + $0xf0] sm:$0xff]
    %v2731 = vld [vmem:[#allocation2 + $0xf8] sm:$0xff]
    %v2732 = vld [vmem:[#allocation2 + $0x100] sm:$0xff]
    %v2733 = vld [vmem:[#allocation2 + $0x108] sm:$0xff]
    %v2734 = vld [vmem:[#allocation2 + $0x110] sm:$0xff]
    %v2735 = vld [vmem:[#allocation2 + $0x118] sm:$0xff]
    %v2736 = vld [vmem:[#allocation2 + $0x120] sm:$0xff]
    %v2737 = vld [vmem:[#allocation2 + $0x128] sm:$0xff]
    %v2738 = vld [vmem:[#allocation2 + $0x130] sm:$0xff]
    %v2739 = vld [vmem:[#allocation2 + $0x138] sm:$0xff]
    %v2820 = vunpack.c.l.b16 %v2620
    %v2821 = vunpack.c.l.b16 %v2621
    %v2822 = vunpack.c.l.b16 %v2622
    %v2823 = vunpack.c.l.b16 %v2623
    %v2824 = vunpack.c.l.b16 %v2624
    %v2825 = vunpack.c.l.b16 %v2625
    %v2826 = vunpack.c.l.b16 %v2626
    %v2827 = vunpack.c.l.b16 %v2627
    %v2828 = vunpack.c.l.b16 %v2628
    %v2829 = vunpack.c.l.b16 %v2629
    %v2830 = vunpack.c.l.b16 %v2630
    %v2831 = vunpack.c.l.b16 %v2631
    %v2832 = vunpack.c.l.b16 %v2632
    %v2833 = vunpack.c.l.b16 %v2633
    %v2834 = vunpack.c.l.b16 %v2634
    %v2835 = vunpack.c.l.b16 %v2635
    %v2836 = vunpack.c.l.b16 %v2636
    %v2837 = vunpack.c.l.b16 %v2637
    %v2838 = vunpack.c.l.b16 %v2638
    %v2839 = vunpack.c.l.b16 %v2639
    %v2840 = vunpack.c.l.b16 %v2640
    %v2841 = vunpack.c.l.b16 %v2641
    %v2842 = vunpack.c.l.b16 %v2642
    %v2843 = vunpack.c.l.b16 %v2643
    %v2844 = vunpack.c.l.b16 %v2644
    %v2845 = vunpack.c.l.b16 %v2645
    %v2846 = vunpack.c.l.b16 %v2646
    %v2847 = vunpack.c.l.b16 %v2647
    %v2848 = vunpack.c.l.b16 %v2648
    %v2849 = vunpack.c.l.b16 %v2649
    %v2850 = vunpack.c.l.b16 %v2650
    %v2851 = vunpack.c.l.b16 %v2651
    %v2852 = vunpack.c.l.b16 %v2652
    %v2853 = vunpack.c.l.b16 %v2653
    %v2854 = vunpack.c.l.b16 %v2654
    %v2855 = vunpack.c.l.b16 %v2655
    %v2856 = vunpack.c.l.b16 %v2656
    %v2857 = vunpack.c.l.b16 %v2657
    %v2858 = vunpack.c.l.b16 %v2658
    %v2859 = vunpack.c.l.b16 %v2659
    %v2860 = vunpack.c.l.b16 %v2660
    %v2861 = vunpack.c.l.b16 %v2661
    %v2862 = vunpack.c.l.b16 %v2662
    %v2863 = vunpack.c.l.b16 %v2663
    %v2864 = vunpack.c.l.b16 %v2664
    %v2865 = vunpack.c.l.b16 %v2665
    %v2866 = vunpack.c.l.b16 %v2666
    %v2867 = vunpack.c.l.b16 %v2667
    %v2868 = vunpack.c.l.b16 %v2668
    %v2869 = vunpack.c.l.b16 %v2669
    %v2870 = vunpack.c.l.b16 %v2670
    %v2871 = vunpack.c.l.b16 %v2671
    %v2872 = vunpack.c.l.b16 %v2672
    %v2873 = vunpack.c.l.b16 %v2673
    %v2874 = vunpack.c.l.b16 %v2674
    %v2875 = vunpack.c.l.b16 %v2675
    %v2876 = vunpack.c.l.b16 %v2676
    %v2877 = vunpack.c.l.b16 %v2677
    %v2878 = vunpack.c.l.b16 %v2678
    %v2879 = vunpack.c.l.b16 %v2679
    %v2880 = vunpack.c.l.b16 %v2680
    %v2881 = vunpack.c.l.b16 %v2681
    %v2882 = vunpack.c.l.b16 %v2682
    %v2883 = vunpack.c.l.b16 %v2683
    %v2884 = vunpack.c.l.b16 %v2684
    %v2885 = vunpack.c.l.b16 %v2685
    %v2886 = vunpack.c.l.b16 %v2686
    %v2887 = vunpack.c.l.b16 %v2687
    %v2888 = vunpack.c.l.b16 %v2688
    %v2889 = vunpack.c.l.b16 %v2689
    %v2890 = vunpack.c.l.b16 %v2690
    %v2891 = vunpack.c.l.b16 %v2691
    %v2892 = vunpack.c.l.b16 %v2692
    %v2893 = vunpack.c.l.b16 %v2693
    %v2894 = vunpack.c.l.b16 %v2694
    %v2895 = vunpack.c.l.b16 %v2695
    %v2896 = vunpack.c.l.b16 %v2696
    %v2897 = vunpack.c.l.b16 %v2697
    %v2898 = vunpack.c.l.b16 %v2698
    %v2899 = vunpack.c.l.b16 %v2699
    %v2900 = vpack.c.b16 %v2821, %v2820
    %v2901 = vpack.c.b16 %v2823, %v2822
    %v2902 = vpack.c.b16 %v2825, %v2824
    %v2903 = vpack.c.b16 %v2827, %v2826
    %v2904 = vpack.c.b16 %v2829, %v2828
    %v2905 = vpack.c.b16 %v2831, %v2830
    %v2906 = vpack.c.b16 %v2833, %v2832
    %v2907 = vpack.c.b16 %v2835, %v2834
    %v2908 = vpack.c.b16 %v2837, %v2836
    %v2909 = vpack.c.b16 %v2839, %v2838
    %v2910 = vpack.c.b16 %v2841, %v2840
    %v2911 = vpack.c.b16 %v2843, %v2842
    %v2912 = vpack.c.b16 %v2845, %v2844
    %v2913 = vpack.c.b16 %v2847, %v2846
    %v2914 = vpack.c.b16 %v2849, %v2848
    %v2915 = vpack.c.b16 %v2851, %v2850
    %v2916 = vpack.c.b16 %v2853, %v2852
    %v2917 = vpack.c.b16 %v2855, %v2854
    %v2918 = vpack.c.b16 %v2857, %v2856
    %v2919 = vpack.c.b16 %v2859, %v2858
    %v2920 = vpack.c.b16 %v2861, %v2860
    %v2921 = vpack.c.b16 %v2863, %v2862
    %v2922 = vpack.c.b16 %v2865, %v2864
    %v2923 = vpack.c.b16 %v2867, %v2866
    %v2924 = vpack.c.b16 %v2869, %v2868
    %v2925 = vpack.c.b16 %v2871, %v2870
    %v2926 = vpack.c.b16 %v2873, %v2872
    %v2927 = vpack.c.b16 %v2875, %v2874
    %v2928 = vpack.c.b16 %v2877, %v2876
    %v2929 = vpack.c.b16 %v2879, %v2878
    %v2930 = vpack.c.b16 %v2881, %v2880
    %v2931 = vpack.c.b16 %v2883, %v2882
    %v2932 = vpack.c.b16 %v2885, %v2884
    %v2933 = vpack.c.b16 %v2887, %v2886
    %v2934 = vpack.c.b16 %v2889, %v2888
    %v2935 = vpack.c.b16 %v2891, %v2890
    %v2936 = vpack.c.b16 %v2893, %v2892
    %v2937 = vpack.c.b16 %v2895, %v2894
    %v2938 = vpack.c.b16 %v2897, %v2896
    %v2939 = vpack.c.b16 %v2899, %v2898
    %2980 = vmatprep.subr.bf16.mxu0 0
    %2981 = vmatpush1.bf16.msra.mxu0 %v2900
    %2982 = vmatprep.subr.bf16.mxu0 0
    %2983 = vmatpush1.bf16.msra.mxu0 %v2901
    %2984 = vmatprep.subr.bf16.mxu0 0
    %2985 = vmatpush1.bf16.msra.mxu0 %v2902
    %2986 = vmatprep.subr.bf16.mxu0 0
    %2987 = vmatpush1.bf16.msra.mxu0 %v2903
    %2988 = vmatprep.subr.bf16.mxu0 0
    %2989 = vmatpush1.bf16.msra.mxu0 %v2904
    %2990 = vmatprep.subr.bf16.mxu0 0
    %2991 = vmatpush1.bf16.msra.mxu0 %v2905
    %2992 = vmatprep.subr.bf16.mxu0 0
    %2993 = vmatpush1.bf16.msra.mxu0 %v2906
    %2994 = vmatprep.subr.bf16.mxu0 0
    %2995 = vmatpush1.bf16.msra.mxu0 %v2907
    %2996 = vmatprep.subr.bf16.mxu0 0
    %2997 = vmatpush1.bf16.msra.mxu0 %v2908
    %2998 = vmatprep.subr.bf16.mxu0 0
    %2999 = vmatpush1.bf16.msra.mxu0 %v2909
    %3000 = vmatprep.subr.bf16.mxu0 0
    %3001 = vmatpush1.bf16.msra.mxu0 %v2910
    %3002 = vmatprep.subr.bf16.mxu0 0
    %3003 = vmatpush1.bf16.msra.mxu0 %v2911
    %3004 = vmatprep.subr.bf16.mxu0 0
    %3005 = vmatpush1.bf16.msra.mxu0 %v2912
    %3006 = vmatprep.subr.bf16.mxu0 0
    %3007 = vmatpush1.bf16.msra.mxu0 %v2913
    %3008 = vmatprep.subr.bf16.mxu0 0
    %3009 = vmatpush1.bf16.msra.mxu0 %v2914
    %3010 = vmatprep.subr.bf16.mxu0 0
    %3011 = vmatpush1.bf16.msra.mxu0 %v2915
    %3012 = vmatprep.mubr.bf16.mxu0 %v2516
    %3013 = vmatmul.mubr.bf16.gmra.mrb[0].mxu0 %v2515
    %v3014 = vpop.f32.mrb[0].mxu0
    %v3015 = vadd.f32 0.0, %v3014
    %v3016 = vpop.f32.mrb[0].mxu0
    %v3017 = vpop.f32.mrb[0].mxu0
    %v3018 = vadd.f32 0.0, %v3017
    %v3019 = vpop.f32.mrb[0].mxu0
    %3020 = vmatprep.mubr.bf16.mxu0 %v2521
    %3021 = vmatmul.mubr.bf16.gmra.mrb[0].mxu0 %v2520
    %v3022 = vpop.f32.mrb[0].mxu0
    %v3023 = vadd.f32 0.0, %v3022
    %v3024 = vpop.f32.mrb[0].mxu0
    %v3025 = vpop.f32.mrb[0].mxu0
    %v3026 = vadd.f32 0.0, %v3025
    %v3027 = vpop.f32.mrb[0].mxu0
    %3028 = vmatprep.mubr.bf16.mxu0 %v2526
    %3029 = vmatmul.mubr.bf16.gmra.mrb[0].mxu0 %v2525
    %v3030 = vpop.f32.mrb[0].mxu0
    %v3031 = vadd.f32 0.0, %v3030
    %v3032 = vpop.f32.mrb[0].mxu0
    %v3033 = vpop.f32.mrb[0].mxu0
    %v3034 = vadd.f32 0.0, %v3033
    %v3035 = vpop.f32.mrb[0].mxu0
    %3036 = vmatprep.mubr.bf16.mxu0 %v2531
    %3037 = vmatmul.mubr.bf16.gmra.mrb[0].mxu0 %v2530
    %v3038 = vpop.f32.mrb[0].mxu0
    %v3039 = vadd.f32 0.0, %v3038
    %v3040 = vpop.f32.mrb[0].mxu0
    %v3041 = vpop.f32.mrb[0].mxu0
    %v3042 = vadd.f32 0.0, %v3041
    %v3043 = vpop.f32.mrb[0].mxu0
    %3044 = vmatprep.mubr.bf16.mxu0 %v2536
    %3045 = vmatmul.mubr.bf16.gmra.mrb[0].mxu0 %v2535
    %v3046 = vpop.f32.mrb[0].mxu0
    %v3047 = vadd.f32 0.0, %v3046
    %v3048 = vpop.f32.mrb[0].mxu0
    %v3049 = vpop.f32.mrb[0].mxu0
    %v3050 = vadd.f32 0.0, %v3049
    %v3051 = vpop.f32.mrb[0].mxu0
    %3052 = vmatprep.mubr.bf16.mxu0 %v2541
    %3053 = vmatmul.mubr.bf16.gmra.mrb[0].mxu0 %v2540
    %v3054 = vpop.f32.mrb[0].mxu0
    %v3055 = vadd.f32 0.0, %v3054
    %v3056 = vpop.f32.mrb[0].mxu0
    %v3057 = vpop.f32.mrb[0].mxu0
    %v3058 = vadd.f32 0.0, %v3057
    %v3059 = vpop.f32.mrb[0].mxu0
    %3060 = vmatprep.mubr.bf16.mxu0 %v2546
    %3061 = vmatmul.mubr.bf16.gmra.mrb[0].mxu0 %v2545
    %v3062 = vpop.f32.mrb[0].mxu0
    %v3063 = vadd.f32 0.0, %v3062
    %v3064 = vpop.f32.mrb[0].mxu0
    %v3065 = vpop.f32.mrb[0].mxu0
    %v3066 = vadd.f32 0.0, %v3065
    %v3067 = vpop.f32.mrb[0].mxu0
    %3068 = vmatprep.mubr.bf16.mxu0 %v2551
    %3069 = vmatmul.mubr.bf16.gmra.mrb[0].mxu0 %v2550
    %v3070 = vpop.f32.mrb[0].mxu0
    %v3071 = vadd.f32 0.0, %v3070
    %v3072 = vpop.f32.mrb[0].mxu0
    %v3073 = vpop.f32.mrb[0].mxu0
    %v3074 = vadd.f32 0.0, %v3073
    %v3075 = vpop.f32.mrb[0].mxu0
    %3076 = vmatprep.mubr.bf16.mxu0 %v2556
    %3077 = vmatmul.mubr.bf16.gmra.mrb[0].mxu0 %v2555
    %v3078 = vpop.f32.mrb[0].mxu0
    %v3079 = vadd.f32 0.0, %v3078
    %v3080 = vpop.f32.mrb[0].mxu0
    %v3081 = vpop.f32.mrb[0].mxu0
    %v3082 = vadd.f32 0.0, %v3081
    %v3083 = vpop.f32.mrb[0].mxu0
    %3084 = vmatprep.mubr.bf16.mxu0 %v2561
    %3085 = vmatmul.mubr.bf16.gmra.mrb[0].mxu0 %v2560
    %v3086 = vpop.f32.mrb[0].mxu0
    %v3087 = vadd.f32 0.0, %v3086
    %v3088 = vpop.f32.mrb[0].mxu0
    %v3089 = vpop.f32.mrb[0].mxu0
    %v3090 = vadd.f32 0.0, %v3089
    %v3091 = vpop.f32.mrb[0].mxu0
    %3092 = vmatprep.mubr.bf16.mxu0 %v2566
    %3093 = vmatmul.mubr.bf16.gmra.mrb[0].mxu0 %v2565
    %v3094 = vpop.f32.mrb[0].mxu0
    %v3095 = vadd.f32 0.0, %v3094
    %v3096 = vpop.f32.mrb[0].mxu0
    %v3097 = vpop.f32.mrb[0].mxu0
    %v3098 = vadd.f32 0.0, %v3097
    %v3099 = vpop.f32.mrb[0].mxu0
    %3100 = vmatprep.mubr.bf16.mxu0 %v2571
    %3101 = vmatmul.mubr.bf16.gmra.mrb[0].mxu0 %v2570
    %v3102 = vpop.f32.mrb[0].mxu0
    %v3103 = vadd.f32 0.0, %v3102
    %v3104 = vpop.f32.mrb[0].mxu0
    %v3105 = vpop.f32.mrb[0].mxu0
    %v3106 = vadd.f32 0.0, %v3105
    %v3107 = vpop.f32.mrb[0].mxu0
    %3108 = vmatprep.mubr.bf16.mxu0 %v2576
    %3109 = vmatmul.mubr.bf16.gmra.mrb[0].mxu0 %v2575
    %v3110 = vpop.f32.mrb[0].mxu0
    %v3111 = vadd.f32 0.0, %v3110
    %v3112 = vpop.f32.mrb[0].mxu0
    %v3113 = vpop.f32.mrb[0].mxu0
    %v3114 = vadd.f32 0.0, %v3113
    %v3115 = vpop.f32.mrb[0].mxu0
    %3116 = vmatprep.mubr.bf16.mxu0 %v2581
    %3117 = vmatmul.mubr.bf16.gmra.mrb[0].mxu0 %v2580
    %v3118 = vpop.f32.mrb[0].mxu0
    %v3119 = vadd.f32 0.0, %v3118
    %v3120 = vpop.f32.mrb[0].mxu0
    %v3121 = vpop.f32.mrb[0].mxu0
    %v3122 = vadd.f32 0.0, %v3121
    %v3123 = vpop.f32.mrb[0].mxu0
    %3124 = vmatprep.mubr.bf16.mxu0 %v2586
    %3125 = vmatmul.mubr.bf16.gmra.mrb[0].mxu0 %v2585
    %v3126 = vpop.f32.mrb[0].mxu0
    %v3127 = vadd.f32 0.0, %v3126
    %v3128 = vpop.f32.mrb[0].mxu0
    %v3129 = vpop.f32.mrb[0].mxu0
    %v3130 = vadd.f32 0.0, %v3129
    %v3131 = vpop.f32.mrb[0].mxu0
    %3132 = vmatprep.mubr.bf16.mxu0 %v2591
    %3133 = vmatmul.mubr.bf16.gmra.mrb[0].mxu0 %v2590
    %v3134 = vpop.f32.mrb[0].mxu0
    %v3135 = vadd.f32 0.0, %v3134
    %v3136 = vpop.f32.mrb[0].mxu0
    %v3137 = vpop.f32.mrb[0].mxu0
    %v3138 = vadd.f32 0.0, %v3137
    %v3139 = vpop.f32.mrb[0].mxu0
    %3140 = vmatprep.mubr.bf16.mxu0 %v2596
    %3141 = vmatmul.mubr.bf16.gmra.mrb[0].mxu0 %v2595
    %v3142 = vpop.f32.mrb[0].mxu0
    %v3143 = vadd.f32 0.0, %v3142
    %v3144 = vpop.f32.mrb[0].mxu0
    %v3145 = vpop.f32.mrb[0].mxu0
    %v3146 = vadd.f32 0.0, %v3145
    %v3147 = vpop.f32.mrb[0].mxu0
    %3148 = vmatprep.mubr.bf16.mxu0 %v2601
    %3149 = vmatmul.mubr.bf16.gmra.mrb[0].mxu0 %v2600
    %v3150 = vpop.f32.mrb[0].mxu0
    %v3151 = vadd.f32 0.0, %v3150
    %v3152 = vpop.f32.mrb[0].mxu0
    %v3153 = vpop.f32.mrb[0].mxu0
    %v3154 = vadd.f32 0.0, %v3153
    %v3155 = vpop.f32.mrb[0].mxu0
    %3156 = vmatprep.mubr.bf16.mxu0 %v2606
    %3157 = vmatmul.mubr.bf16.gmra.mrb[0].mxu0 %v2605
    %v3158 = vpop.f32.mrb[0].mxu0
    %v3159 = vadd.f32 0.0, %v3158
    %v3160 = vpop.f32.mrb[0].mxu0
    %v3161 = vpop.f32.mrb[0].mxu0
    %v3162 = vadd.f32 0.0, %v3161
    %v3163 = vpop.f32.mrb[0].mxu0
    %3164 = vmatprep.mubr.bf16.mxu0 %v2611
    %3165 = vmatmul.mubr.bf16.gmra.mrb[0].mxu0 %v2610
    %v3166 = vpop.f32.mrb[0].mxu0
    %v3167 = vadd.f32 0.0, %v3166
    %v3168 = vpop.f32.mrb[0].mxu0
    %v3169 = vpop.f32.mrb[0].mxu0
    %v3170 = vadd.f32 0.0, %v3169
    %v3171 = vpop.f32.mrb[0].mxu0
    %3172 = vdwg.mxu0
    %3173 = vmatprep.subr.bf16.mxu0 0
    %3174 = vmatpush1.bf16.msra.mxu0 %v2916
    %3175 = vmatprep.subr.bf16.mxu0 0
    %3176 = vmatpush1.bf16.msra.mxu0 %v2917
    %3177 = vmatprep.subr.bf16.mxu0 0
    %3178 = vmatpush1.bf16.msra.mxu0 %v2918
    %3179 = vmatprep.subr.bf16.mxu0 0
    %3180 = vmatpush1.bf16.msra.mxu0 %v2919
    %3181 = vmatprep.subr.bf16.mxu0 0
    %3182 = vmatpush1.bf16.msra.mxu0 %v2920
    %3183 = vmatprep.subr.bf16.mxu0 0
    %3184 = vmatpush1.bf16.msra.mxu0 %v2921
    %3185 = vmatprep.subr.bf16.mxu0 0
    %3186 = vmatpush1.bf16.msra.mxu0 %v2922
    %3187 = vmatprep.subr.bf16.mxu0 0
    %3188 = vmatpush1.bf16.msra.mxu0 %v2923
    %3189 = vmatprep.subr.bf16.mxu0 0
    %3190 = vmatpush1.bf16.msra.mxu0 %v2924
    %3191 = vmatprep.subr.bf16.mxu0 0
    %3192 = vmatpush1.bf16.msra.mxu0 %v2925
    %3193 = vmatprep.subr.bf16.mxu0 0
    %3194 = vmatpush1.bf16.msra.mxu0 %v2926
    %3195 = vmatprep.subr.bf16.mxu0 0
    %3196 = vmatpush1.bf16.msra.mxu0 %v2927
    %3197 = vmatprep.subr.bf16.mxu0 0
    %3198 = vmatpush1.bf16.msra.mxu0 %v2928
    %3199 = vmatprep.subr.bf16.mxu0 0
    %3200 = vmatpush1.bf16.msra.mxu0 %v2929
    %3201 = vmatprep.subr.bf16.mxu0 0
    %3202 = vmatpush1.bf16.msra.mxu0 %v2930
    %3203 = vmatprep.subr.bf16.mxu0 0
    %3204 = vmatpush1.bf16.msra.mxu0 %v2931
    %3205 = vmatprep.mubr.bf16.mxu0 %v2518
    %3206 = vmatmul.mubr.bf16.gmra.mrb[0].mxu0 %v2517
    %v3207 = vpop.f32.mrb[0].mxu0
    %v3208 = vadd.f32 %v3015, %v3207
    %v3209 = vpop.f32.mrb[0].mxu0
    %v3210 = vpop.f32.mrb[0].mxu0
    %v3211 = vadd.f32 %v3018, %v3210
    %v3212 = vpop.f32.mrb[0].mxu0
    %3213 = vmatprep.mubr.bf16.mxu0 %v2523
    %3214 = vmatmul.mubr.bf16.gmra.mrb[0].mxu0 %v2522
    %v3215 = vpop.f32.mrb[0].mxu0
    %v3216 = vadd.f32 %v3023, %v3215
    %v3217 = vpop.f32.mrb[0].mxu0
    %v3218 = vpop.f32.mrb[0].mxu0
    %v3219 = vadd.f32 %v3026, %v3218
    %v3220 = vpop.f32.mrb[0].mxu0
    %3221 = vmatprep.mubr.bf16.mxu0 %v2528
    %3222 = vmatmul.mubr.bf16.gmra.mrb[0].mxu0 %v2527
    %v3223 = vpop.f32.mrb[0].mxu0
    %v3224 = vadd.f32 %v3031, %v3223
    %v3225 = vpop.f32.mrb[0].mxu0
    %v3226 = vpop.f32.mrb[0].mxu0
    %v3227 = vadd.f32 %v3034, %v3226
    %v3228 = vpop.f32.mrb[0].mxu0
    %3229 = vmatprep.mubr.bf16.mxu0 %v2533
    %3230 = vmatmul.mubr.bf16.gmra.mrb[0].mxu0 %v2532
    %v3231 = vpop.f32.mrb[0].mxu0
    %v3232 = vadd.f32 %v3039, %v3231
    %v3233 = vpop.f32.mrb[0].mxu0
    %v3234 = vpop.f32.mrb[0].mxu0
    %v3235 = vadd.f32 %v3042, %v3234
    %v3236 = vpop.f32.mrb[0].mxu0
    %3237 = vmatprep.mubr.bf16.mxu0 %v2538
    %3238 = vmatmul.mubr.bf16.gmra.mrb[0].mxu0 %v2537
    %v3239 = vpop.f32.mrb[0].mxu0
    %v3240 = vadd.f32 %v3047, %v3239
    %v3241 = vpop.f32.mrb[0].mxu0
    %v3242 = vpop.f32.mrb[0].mxu0
    %v3243 = vadd.f32 %v3050, %v3242
    %v3244 = vpop.f32.mrb[0].mxu0
    %3245 = vmatprep.mubr.bf16.mxu0 %v2543
    %3246 = vmatmul.mubr.bf16.gmra.mrb[0].mxu0 %v2542
    %v3247 = vpop.f32.mrb[0].mxu0
    %v3248 = vadd.f32 %v3055, %v3247
    %v3249 = vpop.f32.mrb[0].mxu0
    %v3250 = vpop.f32.mrb[0].mxu0
    %v3251 = vadd.f32 %v3058, %v3250
    %v3252 = vpop.f32.mrb[0].mxu0
    %3253 = vmatprep.mubr.bf16.mxu0 %v2548
    %3254 = vmatmul.mubr.bf16.gmra.mrb[0].mxu0 %v2547
    %v3255 = vpop.f32.mrb[0].mxu0
    %v3256 = vadd.f32 %v3063, %v3255
    %v3257 = vpop.f32.mrb[0].mxu0
    %v3258 = vpop.f32.mrb[0].mxu0
    %v3259 = vadd.f32 %v3066, %v3258
    %v3260 = vpop.f32.mrb[0].mxu0
    %3261 = vmatprep.mubr.bf16.mxu0 %v2553
    %3262 = vmatmul.mubr.bf16.gmra.mrb[0].mxu0 %v2552
    %v3263 = vpop.f32.mrb[0].mxu0
    %v3264 = vadd.f32 %v3071, %v3263
    %v3265 = vpop.f32.mrb[0].mxu0
    %v3266 = vpop.f32.mrb[0].mxu0
    %v3267 = vadd.f32 %v3074, %v3266
    %v3268 = vpop.f32.mrb[0].mxu0
    %3269 = vmatprep.mubr.bf16.mxu0 %v2558
    %3270 = vmatmul.mubr.bf16.gmra.mrb[0].mxu0 %v2557
    %v3271 = vpop.f32.mrb[0].mxu0
    %v3272 = vadd.f32 %v3079, %v3271
    %v3273 = vpop.f32.mrb[0].mxu0
    %v3274 = vpop.f32.mrb[0].mxu0
    %v3275 = vadd.f32 %v3082, %v3274
    %v3276 = vpop.f32.mrb[0].mxu0
    %3277 = vmatprep.mubr.bf16.mxu0 %v2563
    %3278 = vmatmul.mubr.bf16.gmra.mrb[0].mxu0 %v2562
    %v3279 = vpop.f32.mrb[0].mxu0
    %v3280 = vadd.f32 %v3087, %v3279
    %v3281 = vpop.f32.mrb[0].mxu0
    %v3282 = vpop.f32.mrb[0].mxu0
    %v3283 = vadd.f32 %v3090, %v3282
    %v3284 = vpop.f32.mrb[0].mxu0
    %3285 = vmatprep.mubr.bf16.mxu0 %v2568
    %3286 = vmatmul.mubr.bf16.gmra.mrb[0].mxu0 %v2567
    %v3287 = vpop.f32.mrb[0].mxu0
    %v3288 = vadd.f32 %v3095, %v3287
    %v3289 = vpop.f32.mrb[0].mxu0
    %v3290 = vpop.f32.mrb[0].mxu0
    %v3291 = vadd.f32 %v3098, %v3290
    %v3292 = vpop.f32.mrb[0].mxu0
    %3293 = vmatprep.mubr.bf16.mxu0 %v2573
    %3294 = vmatmul.mubr.bf16.gmra.mrb[0].mxu0 %v2572
    %v3295 = vpop.f32.mrb[0].mxu0
    %v3296 = vadd.f32 %v3103, %v3295
    %v3297 = vpop.f32.mrb[0].mxu0
    %v3298 = vpop.f32.mrb[0].mxu0
    %v3299 = vadd.f32 %v3106, %v3298
    %v3300 = vpop.f32.mrb[0].mxu0
    %3301 = vmatprep.mubr.bf16.mxu0 %v2578
    %3302 = vmatmul.mubr.bf16.gmra.mrb[0].mxu0 %v2577
    %v3303 = vpop.f32.mrb[0].mxu0
    %v3304 = vadd.f32 %v3111, %v3303
    %v3305 = vpop.f32.mrb[0].mxu0
    %v3306 = vpop.f32.mrb[0].mxu0
    %v3307 = vadd.f32 %v3114, %v3306
    %v3308 = vpop.f32.mrb[0].mxu0
    %3309 = vmatprep.mubr.bf16.mxu0 %v2583
    %3310 = vmatmul.mubr.bf16.gmra.mrb[0].mxu0 %v2582
    %v3311 = vpop.f32.mrb[0].mxu0
    %v3312 = vadd.f32 %v3119, %v3311
    %v3313 = vpop.f32.mrb[0].mxu0
    %v3314 = vpop.f32.mrb[0].mxu0
    %v3315 = vadd.f32 %v3122, %v3314
    %v3316 = vpop.f32.mrb[0].mxu0
    %3317 = vmatprep.mubr.bf16.mxu0 %v2588
    %3318 = vmatmul.mubr.bf16.gmra.mrb[0].mxu0 %v2587
    %v3319 = vpop.f32.mrb[0].mxu0
    %v3320 = vadd.f32 %v3127, %v3319
    %v3321 = vpop.f32.mrb[0].mxu0
    %v3322 = vpop.f32.mrb[0].mxu0
    %v3323 = vadd.f32 %v3130, %v3322
    %v3324 = vpop.f32.mrb[0].mxu0
    %3325 = vmatprep.mubr.bf16.mxu0 %v2593
    %3326 = vmatmul.mubr.bf16.gmra.mrb[0].mxu0 %v2592
    %v3327 = vpop.f32.mrb[0].mxu0
    %v3328 = vadd.f32 %v3135, %v3327
    %v3329 = vpop.f32.mrb[0].mxu0
    %v3330 = vpop.f32.mrb[0].mxu0
    %v3331 = vadd.f32 %v3138, %v3330
    %v3332 = vpop.f32.mrb[0].mxu0
    %3333 = vmatprep.mubr.bf16.mxu0 %v2598
    %3334 = vmatmul.mubr.bf16.gmra.mrb[0].mxu0 %v2597
    %v3335 = vpop.f32.mrb[0].mxu0
    %v3336 = vadd.f32 %v3143, %v3335
    %v3337 = vpop.f32.mrb[0].mxu0
    %v3338 = vpop.f32.mrb[0].mxu0
    %v3339 = vadd.f32 %v3146, %v3338
    %v3340 = vpop.f32.mrb[0].mxu0
    %3341 = vmatprep.mubr.bf16.mxu0 %v2603
    %3342 = vmatmul.mubr.bf16.gmra.mrb[0].mxu0 %v2602
    %v3343 = vpop.f32.mrb[0].mxu0
    %v3344 = vadd.f32 %v3151, %v3343
    %v3345 = vpop.f32.mrb[0].mxu0
    %v3346 = vpop.f32.mrb[0].mxu0
    %v3347 = vadd.f32 %v3154, %v3346
    %v3348 = vpop.f32.mrb[0].mxu0
    %3349 = vmatprep.mubr.bf16.mxu0 %v2608
    %3350 = vmatmul.mubr.bf16.gmra.mrb[0].mxu0 %v2607
    %v3351 = vpop.f32.mrb[0].mxu0
    %v3352 = vadd.f32 %v3159, %v3351
    %v3353 = vpop.f32.mrb[0].mxu0
    %v3354 = vpop.f32.mrb[0].mxu0
    %v3355 = vadd.f32 %v3162, %v3354
    %v3356 = vpop.f32.mrb[0].mxu0
    %3357 = vmatprep.mubr.bf16.mxu0 %v2613
    %3358 = vmatmul.mubr.bf16.gmra.mrb[0].mxu0 %v2612
    %v3359 = vpop.f32.mrb[0].mxu0
    %v3360 = vadd.f32 %v3167, %v3359
    %v3361 = vpop.f32.mrb[0].mxu0
    %v3362 = vpop.f32.mrb[0].mxu0
    %v3363 = vadd.f32 %v3170, %v3362
    %v3364 = vpop.f32.mrb[0].mxu0
    %3365 = vdwg.mxu0
    %3366 = vmatprep.subr.bf16.mxu0 0
    %3367 = vmatpush1.bf16.msra.mxu0 %v2932
    %3368 = vmatprep.subr.bf16.mxu0 0
    %3369 = vmatpush1.bf16.msra.mxu0 %v2933
    %3370 = vmatprep.subr.bf16.mxu0 0
    %3371 = vmatpush1.bf16.msra.mxu0 %v2934
    %3372 = vmatprep.subr.bf16.mxu0 0
    %3373 = vmatpush1.bf16.msra.mxu0 %v2935
    %3374 = vmatprep.subr.bf16.mxu0 0
    %3375 = vmatpush1.bf16.msra.mxu0 %v2936
    %3376 = vmatprep.subr.bf16.mxu0 0
    %3377 = vmatpush1.bf16.msra.mxu0 %v2937
    %3378 = vmatprep.subr.bf16.mxu0 0
    %3379 = vmatpush1.bf16.msra.mxu0 %v2938
    %3380 = vmatprep.subr.bf16.mxu0 0
    %3381 = vmatpush1.bf16.msra.mxu0 %v2939
    %3382 = vmatprep.subr.bf16.mxu0 0
    %3383 = vmatpush1.bf16.msra.mxu0 0
    %3384 = vmatprep.subr.bf16.mxu0 0
    %3385 = vmatpush1.bf16.msra.mxu0 0
    %3386 = vmatprep.subr.bf16.mxu0 0
    %3387 = vmatpush1.bf16.msra.mxu0 0
    %3388 = vmatprep.subr.bf16.mxu0 0
    %3389 = vmatpush1.bf16.msra.mxu0 0
    %3390 = vmatprep.subr.bf16.mxu0 0
    %3391 = vmatpush1.bf16.msra.mxu0 0
    %3392 = vmatprep.subr.bf16.mxu0 0
    %3393 = vmatpush1.bf16.msra.mxu0 0
    %3394 = vmatprep.subr.bf16.mxu0 0
    %3395 = vmatpush1.bf16.msra.mxu0 0
    %3396 = vmatprep.subr.bf16.mxu0 0
    %3397 = vmatpush1.bf16.msra.mxu0 0
    %3398 = vmatprep.mubr.bf16.mxu0 0
    %3399 = vmatmul.mubr.bf16.gmra.mrb[0].mxu0 %v2519
    %v3400 = vpop.f32.mrb[0].mxu0
    %v3401 = vadd.f32 %v3208, %v3400
    %v3402 = vpop.f32.mrb[0].mxu0
    %v3403 = vpop.f32.mrb[0].mxu0
    %v3404 = vadd.f32 %v3211, %v3403
    %v3405 = vpop.f32.mrb[0].mxu0
    %3406 = vmatprep.mubr.bf16.mxu0 0
    %3407 = vmatmul.mubr.bf16.gmra.mrb[0].mxu0 %v2524
    %v3408 = vpop.f32.mrb[0].mxu0
    %v3409 = vadd.f32 %v3216, %v3408
    %v3410 = vpop.f32.mrb[0].mxu0
    %v3411 = vpop.f32.mrb[0].mxu0
    %v3412 = vadd.f32 %v3219, %v3411
    %v3413 = vpop.f32.mrb[0].mxu0
    %3414 = vmatprep.mubr.bf16.mxu0 0
    %3415 = vmatmul.mubr.bf16.gmra.mrb[0].mxu0 %v2529
    %v3416 = vpop.f32.mrb[0].mxu0
    %v3417 = vadd.f32 %v3224, %v3416
    %v3418 = vpop.f32.mrb[0].mxu0
    %v3419 = vpop.f32.mrb[0].mxu0
    %v3420 = vadd.f32 %v3227, %v3419
    %v3421 = vpop.f32.mrb[0].mxu0
    %3422 = vmatprep.mubr.bf16.mxu0 0
    %3423 = vmatmul.mubr.bf16.gmra.mrb[0].mxu0 %v2534
    %v3424 = vpop.f32.mrb[0].mxu0
    %v3425 = vadd.f32 %v3232, %v3424
    %v3426 = vpop.f32.mrb[0].mxu0
    %v3427 = vpop.f32.mrb[0].mxu0
    %v3428 = vadd.f32 %v3235, %v3427
    %v3429 = vpop.f32.mrb[0].mxu0
    %3430 = vmatprep.mubr.bf16.mxu0 0
    %3431 = vmatmul.mubr.bf16.gmra.mrb[0].mxu0 %v2539
    %v3432 = vpop.f32.mrb[0].mxu0
    %v3433 = vadd.f32 %v3240, %v3432
    %v3434 = vpop.f32.mrb[0].mxu0
    %v3435 = vpop.f32.mrb[0].mxu0
    %v3436 = vadd.f32 %v3243, %v3435
    %v3437 = vpop.f32.mrb[0].mxu0
    %3438 = vmatprep.mubr.bf16.mxu0 0
    %3439 = vmatmul.mubr.bf16.gmra.mrb[0].mxu0 %v2544
    %v3440 = vpop.f32.mrb[0].mxu0
    %v3441 = vadd.f32 %v3248, %v3440
    %v3442 = vpop.f32.mrb[0].mxu0
    %v3443 = vpop.f32.mrb[0].mxu0
    %v3444 = vadd.f32 %v3251, %v3443
    %v3445 = vpop.f32.mrb[0].mxu0
    %3446 = vmatprep.mubr.bf16.mxu0 0
    %3447 = vmatmul.mubr.bf16.gmra.mrb[0].mxu0 %v2549
    %v3448 = vpop.f32.mrb[0].mxu0
    %v3449 = vadd.f32 %v3256, %v3448
    %v3450 = vpop.f32.mrb[0].mxu0
    %v3451 = vpop.f32.mrb[0].mxu0
    %v3452 = vadd.f32 %v3259, %v3451
    %v3453 = vpop.f32.mrb[0].mxu0
    %3454 = vmatprep.mubr.bf16.mxu0 0
    %3455 = vmatmul.mubr.bf16.gmra.mrb[0].mxu0 %v2554
    %v3456 = vpop.f32.mrb[0].mxu0
    %v3457 = vadd.f32 %v3264, %v3456
    %v3458 = vpop.f32.mrb[0].mxu0
    %v3459 = vpop.f32.mrb[0].mxu0
    %v3460 = vadd.f32 %v3267, %v3459
    %v3461 = vpop.f32.mrb[0].mxu0
    %3462 = vmatprep.mubr.bf16.mxu0 0
    %3463 = vmatmul.mubr.bf16.gmra.mrb[0].mxu0 %v2559
    %v3464 = vpop.f32.mrb[0].mxu0
    %v3465 = vadd.f32 %v3272, %v3464
    %v3466 = vpop.f32.mrb[0].mxu0
    %v3467 = vpop.f32.mrb[0].mxu0
    %v3468 = vadd.f32 %v3275, %v3467
    %v3469 = vpop.f32.mrb[0].mxu0
    %3470 = vmatprep.mubr.bf16.mxu0 0
    %3471 = vmatmul.mubr.bf16.gmra.mrb[0].mxu0 %v2564
    %v3472 = vpop.f32.mrb[0].mxu0
    %v3473 = vadd.f32 %v3280, %v3472
    %v3474 = vpop.f32.mrb[0].mxu0
    %v3475 = vpop.f32.mrb[0].mxu0
    %v3476 = vadd.f32 %v3283, %v3475
    %v3477 = vpop.f32.mrb[0].mxu0
    %3478 = vmatprep.mubr.bf16.mxu0 0
    %3479 = vmatmul.mubr.bf16.gmra.mrb[0].mxu0 %v2569
    %v3480 = vpop.f32.mrb[0].mxu0
    %v3481 = vadd.f32 %v3288, %v3480
    %v3482 = vpop.f32.mrb[0].mxu0
    %v3483 = vpop.f32.mrb[0].mxu0
    %v3484 = vadd.f32 %v3291, %v3483
    %v3485 = vpop.f32.mrb[0].mxu0
    %3486 = vmatprep.mubr.bf16.mxu0 0
    %3487 = vmatmul.mubr.bf16.gmra.mrb[0].mxu0 %v2574
    %v3488 = vpop.f32.mrb[0].mxu0
    %v3489 = vadd.f32 %v3296, %v3488
    %v3490 = vpop.f32.mrb[0].mxu0
    %v3491 = vpop.f32.mrb[0].mxu0
    %v3492 = vadd.f32 %v3299, %v3491
    %v3493 = vpop.f32.mrb[0].mxu0
    %3494 = vmatprep.mubr.bf16.mxu0 0
    %3495 = vmatmul.mubr.bf16.gmra.mrb[0].mxu0 %v2579
    %v3496 = vpop.f32.mrb[0].mxu0
    %v3497 = vadd.f32 %v3304, %v3496
    %v3498 = vpop.f32.mrb[0].mxu0
    %v3499 = vpop.f32.mrb[0].mxu0
    %v3500 = vadd.f32 %v3307, %v3499
    %v3501 = vpop.f32.mrb[0].mxu0
    %3502 = vmatprep.mubr.bf16.mxu0 0
    %3503 = vmatmul.mubr.bf16.gmra.mrb[0].mxu0 %v2584
    %v3504 = vpop.f32.mrb[0].mxu0
    %v3505 = vadd.f32 %v3312, %v3504
    %v3506 = vpop.f32.mrb[0].mxu0
    %v3507 = vpop.f32.mrb[0].mxu0
    %v3508 = vadd.f32 %v3315, %v3507
    %v3509 = vpop.f32.mrb[0].mxu0
    %3510 = vmatprep.mubr.bf16.mxu0 0
    %3511 = vmatmul.mubr.bf16.gmra.mrb[0].mxu0 %v2589
    %v3512 = vpop.f32.mrb[0].mxu0
    %v3513 = vadd.f32 %v3320, %v3512
    %v3514 = vpop.f32.mrb[0].mxu0
    %v3515 = vpop.f32.mrb[0].mxu0
    %v3516 = vadd.f32 %v3323, %v3515
    %v3517 = vpop.f32.mrb[0].mxu0
    %3518 = vmatprep.mubr.bf16.mxu0 0
    %3519 = vmatmul.mubr.bf16.gmra.mrb[0].mxu0 %v2594
    %v3520 = vpop.f32.mrb[0].mxu0
    %v3521 = vadd.f32 %v3328, %v3520
    %v3522 = vpop.f32.mrb[0].mxu0
    %v3523 = vpop.f32.mrb[0].mxu0
    %v3524 = vadd.f32 %v3331, %v3523
    %v3525 = vpop.f32.mrb[0].mxu0
    %3526 = vmatprep.mubr.bf16.mxu0 0
    %3527 = vmatmul.mubr.bf16.gmra.mrb[0].mxu0 %v2599
    %v3528 = vpop.f32.mrb[0].mxu0
    %v3529 = vadd.f32 %v3336, %v3528
    %v3530 = vpop.f32.mrb[0].mxu0
    %v3531 = vpop.f32.mrb[0].mxu0
    %v3532 = vadd.f32 %v3339, %v3531
    %v3533 = vpop.f32.mrb[0].mxu0
    %3534 = vmatprep.mubr.bf16.mxu0 0
    %3535 = vmatmul.mubr.bf16.gmra.mrb[0].mxu0 %v2604
    %v3536 = vpop.f32.mrb[0].mxu0
    %v3537 = vadd.f32 %v3344, %v3536
    %v3538 = vpop.f32.mrb[0].mxu0
    %v3539 = vpop.f32.mrb[0].mxu0
    %v3540 = vadd.f32 %v3347, %v3539
    %v3541 = vpop.f32.mrb[0].mxu0
    %3542 = vmatprep.mubr.bf16.mxu0 0
    %3543 = vmatmul.mubr.bf16.gmra.mrb[0].mxu0 %v2609
    %v3544 = vpop.f32.mrb[0].mxu0
    %v3545 = vadd.f32 %v3352, %v3544
    %v3546 = vpop.f32.mrb[0].mxu0
    %v3547 = vpop.f32.mrb[0].mxu0
    %v3548 = vadd.f32 %v3355, %v3547
    %v3549 = vpop.f32.mrb[0].mxu0
    %3550 = vmatprep.mubr.bf16.mxu0 0
    %3551 = vmatmul.mubr.bf16.gmra.mrb[0].mxu0 %v2614
    %v3552 = vpop.f32.mrb[0].mxu0
    %v3553 = vadd.f32 %v3360, %v3552
    %v3554 = vpop.f32.mrb[0].mxu0
    %v3555 = vpop.f32.mrb[0].mxu0
    %v3556 = vadd.f32 %v3363, %v3555
    %v3557 = vpop.f32.mrb[0].mxu0
    %3558 = vdwg.mxu0
    %v3559 = vadd.f32 %v2700, %v3401
    %v3560 = vadd.f32 %v2701, %v3404
    %v3561 = vadd.f32 %v2702, %v3409
    %v3562 = vadd.f32 %v2703, %v3412
    %v3563 = vadd.f32 %v2704, %v3417
    %v3564 = vadd.f32 %v2705, %v3420
    %v3565 = vadd.f32 %v2706, %v3425
    %v3566 = vadd.f32 %v2707, %v3428
    %v3567 = vadd.f32 %v2708, %v3433
    %v3568 = vadd.f32 %v2709, %v3436
    %v3569 = vadd.f32 %v2710, %v3441
    %v3570 = vadd.f32 %v2711, %v3444
    %v3571 = vadd.f32 %v2712, %v3449
    %v3572 = vadd.f32 %v2713, %v3452
    %v3573 = vadd.f32 %v2714, %v3457
    %v3574 = vadd.f32 %v2715, %v3460
    %v3575 = vadd.f32 %v2716, %v3465
    %v3576 = vadd.f32 %v2717, %v3468
    %v3577 = vadd.f32 %v2718, %v3473
    %v3578 = vadd.f32 %v2719, %v3476
    %v3579 = vadd.f32 %v2720, %v3481
    %v3580 = vadd.f32 %v2721, %v3484
    %v3581 = vadd.f32 %v2722, %v3489
    %v3582 = vadd.f32 %v2723, %v3492
    %v3583 = vadd.f32 %v2724, %v3497
    %v3584 = vadd.f32 %v2725, %v3500
    %v3585 = vadd.f32 %v2726, %v3505
    %v3586 = vadd.f32 %v2727, %v3508
    %v3587 = vadd.f32 %v2728, %v3513
    %v3588 = vadd.f32 %v2729, %v3516
    %v3589 = vadd.f32 %v2730, %v3521
    %v3590 = vadd.f32 %v2731, %v3524
    %v3591 = vadd.f32 %v2732, %v3529
    %v3592 = vadd.f32 %v2733, %v3532
    %v3593 = vadd.f32 %v2734, %v3537
    %v3594 = vadd.f32 %v2735, %v3540
    %v3595 = vadd.f32 %v2736, %v3545
    %v3596 = vadd.f32 %v2737, %v3548
    %v3597 = vadd.f32 %v2738, %v3553
    %v3598 = vadd.f32 %v2739, %v3556
    %3599 = vst [vmem:[#allocation2] sm:$0xff] %v3559
    %3600 = vst [vmem:[#allocation2 + $0x8] sm:$0xff] %v3560
    %3601 = vst [vmem:[#allocation2 + $0x10] sm:$0xff] %v3561
    %3602 = vst [vmem:[#allocation2 + $0x18] sm:$0xff] %v3562
    %3603 = vst [vmem:[#allocation2 + $0x20] sm:$0xff] %v3563
    %3604 = vst [vmem:[#allocation2 + $0x28] sm:$0xff] %v3564
    %3605 = vst [vmem:[#allocation2 + $0x30] sm:$0xff] %v3565
    %3606 = vst [vmem:[#allocation2 + $0x38] sm:$0xff] %v3566
    %3607 = vst [vmem:[#allocation2 + $0x40] sm:$0xff] %v3567
    %3608 = vst [vmem:[#allocation2 + $0x48] sm:$0xff] %v3568
    %3609 = vst [vmem:[#allocation2 + $0x50] sm:$0xff] %v3569
    %3610 = vst [vmem:[#allocation2 + $0x58] sm:$0xff] %v3570
    %3611 = vst [vmem:[#allocation2 + $0x60] sm:$0xff] %v3571
    %3612 = vst [vmem:[#allocation2 + $0x68] sm:$0xff] %v3572
    %3613 = vst [vmem:[#allocation2 + $0x70] sm:$0xff] %v3573
    %3614 = vst [vmem:[#allocation2 + $0x78] sm:$0xff] %v3574
    %3615 = vst [vmem:[#allocation2 + $0x80] sm:$0xff] %v3575
    %3616 = vst [vmem:[#allocation2 + $0x88] sm:$0xff] %v3576
    %3617 = vst [vmem:[#allocation2 + $0x90] sm:$0xff] %v3577
    %3618 = vst [vmem:[#allocation2 + $0x98] sm:$0xff] %v3578
    %3619 = vst [vmem:[#allocation2 + $0xa0] sm:$0xff] %v3579
    %3620 = vst [vmem:[#allocation2 + $0xa8] sm:$0xff] %v3580
    %3621 = vst [vmem:[#allocation2 + $0xb0] sm:$0xff] %v3581
    %3622 = vst [vmem:[#allocation2 + $0xb8] sm:$0xff] %v3582
    %3623 = vst [vmem:[#allocation2 + $0xc0] sm:$0xff] %v3583
    %3624 = vst [vmem:[#allocation2 + $0xc8] sm:$0xff] %v3584
    %3625 = vst [vmem:[#allocation2 + $0xd0] sm:$0xff] %v3585
    %3626 = vst [vmem:[#allocation2 + $0xd8] sm:$0xff] %v3586
    %3627 = vst [vmem:[#allocation2 + $0xe0] sm:$0xff] %v3587
    %3628 = vst [vmem:[#allocation2 + $0xe8] sm:$0xff] %v3588
    %3629 = vst [vmem:[#allocation2 + $0xf0] sm:$0xff] %v3589
    %3630 = vst [vmem:[#allocation2 + $0xf8] sm:$0xff] %v3590
    %3631 = vst [vmem:[#allocation2 + $0x100] sm:$0xff] %v3591
    %3632 = vst [vmem:[#allocation2 + $0x108] sm:$0xff] %v3592
    %3633 = vst [vmem:[#allocation2 + $0x110] sm:$0xff] %v3593
    %3634 = vst [vmem:[#allocation2 + $0x118] sm:$0xff] %v3594
    %3635 = vst [vmem:[#allocation2 + $0x120] sm:$0xff] %v3595
    %3636 = vst [vmem:[#allocation2 + $0x128] sm:$0xff] %v3596
    %3637 = vst [vmem:[#allocation2 + $0x130] sm:$0xff] %v3597
    %3638 = vst [vmem:[#allocation2 + $0x138] sm:$0xff] %v3598
    // Predicated region
    $region30: #{adapt_sage_conv.1} parent=1 // pred_check
      %p3639 = pneg %p27
    $region31: #{adapt_sage_conv.1} parent=1 // pred_check_branch
      %3641 = sbr.rel (%p3639) target = $region33
    $region32: #{adapt_sage_conv.1} parent=1 // pred_region
      %v3642 = vld [vmem:[%s3] sm:$0xff]
      %v3643 = vld [vmem:[%s3 + $0x8] sm:$0xff]
      %v3644 = vld [vmem:[%s3 + $0x10] sm:$0xff]
      %v3645 = vld [vmem:[%s3 + $0x18] sm:$0xff]
      %v3646 = vld [vmem:[%s3 + $0x20] sm:$0xff]
      %v3647 = vld [vmem:[%s3 + $0x28] sm:$0xff]
      %v3648 = vld [vmem:[%s3 + $0x30] sm:$0xff]
      %v3649 = vld [vmem:[%s3 + $0x38] sm:$0xff]
      %v3650 = vld [vmem:[%s3 + $0x40] sm:$0xff]
      %v3651 = vld [vmem:[%s3 + $0x48] sm:$0xff]
      %v3652 = vld [vmem:[%s3 + $0x50] sm:$0xff]
      %v3653 = vld [vmem:[%s3 + $0x58] sm:$0xff]
      %v3654 = vld [vmem:[%s3 + $0x60] sm:$0xff]
      %v3655 = vld [vmem:[%s3 + $0x68] sm:$0xff]
      %v3656 = vld [vmem:[%s3 + $0x70] sm:$0xff]
      %v3657 = vld [vmem:[%s3 + $0x78] sm:$0xff]
      %v3658 = vld [vmem:[%s3 + $0x80] sm:$0xff]
      %v3659 = vld [vmem:[%s3 + $0x88] sm:$0xff]
      %v3660 = vld [vmem:[%s3 + $0x90] sm:$0xff]
      %v3661 = vld [vmem:[%s3 + $0x98] sm:$0xff]
      %v3662 = vld [vmem:[%s3 + $0xa0] sm:$0xff]
      %v3663 = vld [vmem:[%s3 + $0xa8] sm:$0xff]
      %v3664 = vld [vmem:[%s3 + $0xb0] sm:$0xff]
      %v3665 = vld [vmem:[%s3 + $0xb8] sm:$0xff]
      %v3666 = vld [vmem:[%s3 + $0xc0] sm:$0xff]
      %v3667 = vld [vmem:[%s3 + $0xc8] sm:$0xff]
      %v3668 = vld [vmem:[%s3 + $0xd0] sm:$0xff]
      %v3669 = vld [vmem:[%s3 + $0xd8] sm:$0xff]
      %v3670 = vld [vmem:[%s3 + $0xe0] sm:$0xff]
      %v3671 = vld [vmem:[%s3 + $0xe8] sm:$0xff]
      %v3672 = vld [vmem:[%s3 + $0xf0] sm:$0xff]
      %v3673 = vld [vmem:[%s3 + $0xf8] sm:$0xff]
      %v3674 = vld [vmem:[%s3 + $0x100] sm:$0xff]
      %v3675 = vld [vmem:[%s3 + $0x108] sm:$0xff]
      %v3676 = vld [vmem:[%s3 + $0x110] sm:$0xff]
      %v3677 = vld [vmem:[%s3 + $0x118] sm:$0xff]
      %v3678 = vld [vmem:[%s3 + $0x120] sm:$0xff]
      %v3679 = vld [vmem:[%s3 + $0x128] sm:$0xff]
      %v3680 = vld [vmem:[%s3 + $0x130] sm:$0xff]
      %v3681 = vld [vmem:[%s3 + $0x138] sm:$0xff]
      %v3682 = vld [vmem:[#allocation2] sm:$0xff]
      %v3683 = vld [vmem:[#allocation2 + $0x8] sm:$0xff]
      %v3684 = vld [vmem:[#allocation2 + $0x10] sm:$0xff]
      %v3685 = vld [vmem:[#allocation2 + $0x18] sm:$0xff]
      %v3686 = vld [vmem:[#allocation2 + $0x20] sm:$0xff]
      %v3687 = vld [vmem:[#allocation2 + $0x28] sm:$0xff]
      %v3688 = vld [vmem:[#allocation2 + $0x30] sm:$0xff]
      %v3689 = vld [vmem:[#allocation2 + $0x38] sm:$0xff]
      %v3690 = vld [vmem:[#allocation2 + $0x40] sm:$0xff]
      %v3691 = vld [vmem:[#allocation2 + $0x48] sm:$0xff]
      %v3692 = vld [vmem:[#allocation2 + $0x50] sm:$0xff]
      %v3693 = vld [vmem:[#allocation2 + $0x58] sm:$0xff]
      %v3694 = vld [vmem:[#allocation2 + $0x60] sm:$0xff]
      %v3695 = vld [vmem:[#allocation2 + $0x68] sm:$0xff]
      %v3696 = vld [vmem:[#allocation2 + $0x70] sm:$0xff]
      %v3697 = vld [vmem:[#allocation2 + $0x78] sm:$0xff]
      %v3698 = vld [vmem:[#allocation2 + $0x80] sm:$0xff]
      %v3699 = vld [vmem:[#allocation2 + $0x88] sm:$0xff]
      %v3700 = vld [vmem:[#allocation2 + $0x90] sm:$0xff]
      %v3701 = vld [vmem:[#allocation2 + $0x98] sm:$0xff]
      %v3702 = vld [vmem:[#allocation2 + $0xa0] sm:$0xff]
      %v3703 = vld [vmem:[#allocation2 + $0xa8] sm:$0xff]
      %v3704 = vld [vmem:[#allocation2 + $0xb0] sm:$0xff]
      %v3705 = vld [vmem:[#allocation2 + $0xb8] sm:$0xff]
      %v3706 = vld [vmem:[#allocation2 + $0xc0] sm:$0xff]
      %v3707 = vld [vmem:[#allocation2 + $0xc8] sm:$0xff]
      %v3708 = vld [vmem:[#allocation2 + $0xd0] sm:$0xff]
      %v3709 = vld [vmem:[#allocation2 + $0xd8] sm:$0xff]
      %v3710 = vld [vmem:[#allocation2 + $0xe0] sm:$0xff]
      %v3711 = vld [vmem:[#allocation2 + $0xe8] sm:$0xff]
      %v3712 = vld [vmem:[#allocation2 + $0xf0] sm:$0xff]
      %v3713 = vld [vmem:[#allocation2 + $0xf8] sm:$0xff]
      %v3714 = vld [vmem:[#allocation2 + $0x100] sm:$0xff]
      %v3715 = vld [vmem:[#allocation2 + $0x108] sm:$0xff]
      %v3716 = vld [vmem:[#allocation2 + $0x110] sm:$0xff]
      %v3717 = vld [vmem:[#allocation2 + $0x118] sm:$0xff]
      %v3718 = vld [vmem:[#allocation2 + $0x120] sm:$0xff]
      %v3719 = vld [vmem:[#allocation2 + $0x128] sm:$0xff]
      %v3720 = vld [vmem:[#allocation2 + $0x130] sm:$0xff]
      %v3721 = vld [vmem:[#allocation2 + $0x138] sm:$0xff]
      %3723 = vset.pattern.permute.xlu0 1
      %3724 = vperm.xlu0 %3723, %v3642
      %v3725 = vpop.permute.xlu0 %3724
      %3728 = vset.pattern.permute.xlu0 1
      %3729 = vperm.xlu0 %3728, %v3643
      %v3730 = vpop.permute.xlu0 %3729
      %3733 = vset.pattern.permute.xlu0 1
      %3734 = vperm.xlu0 %3733, %v3644
      %v3735 = vpop.permute.xlu0 %3734
      %3738 = vset.pattern.permute.xlu0 1
      %3739 = vperm.xlu0 %3738, %v3645
      %v3740 = vpop.permute.xlu0 %3739
      %3743 = vset.pattern.permute.xlu0 1
      %3744 = vperm.xlu0 %3743, %v3646
      %v3745 = vpop.permute.xlu0 %3744
      %3748 = vset.pattern.permute.xlu0 1
      %3749 = vperm.xlu0 %3748, %v3647
      %v3750 = vpop.permute.xlu0 %3749
      %3753 = vset.pattern.permute.xlu0 1
      %3754 = vperm.xlu0 %3753, %v3648
      %v3755 = vpop.permute.xlu0 %3754
      %3758 = vset.pattern.permute.xlu0 1
      %3759 = vperm.xlu0 %3758, %v3649
      %v3760 = vpop.permute.xlu0 %3759
      %3763 = vset.pattern.permute.xlu0 1
      %3764 = vperm.xlu0 %3763, %v3650
      %v3765 = vpop.permute.xlu0 %3764
      %3768 = vset.pattern.permute.xlu0 1
      %3769 = vperm.xlu0 %3768, %v3651
      %v3770 = vpop.permute.xlu0 %3769
      %3773 = vset.pattern.permute.xlu0 1
      %3774 = vperm.xlu0 %3773, %v3652
      %v3775 = vpop.permute.xlu0 %3774
      %3778 = vset.pattern.permute.xlu0 1
      %3779 = vperm.xlu0 %3778, %v3653
      %v3780 = vpop.permute.xlu0 %3779
      %3783 = vset.pattern.permute.xlu0 1
      %3784 = vperm.xlu0 %3783, %v3654
      %v3785 = vpop.permute.xlu0 %3784
      %3788 = vset.pattern.permute.xlu0 1
      %3789 = vperm.xlu0 %3788, %v3655
      %v3790 = vpop.permute.xlu0 %3789
      %3793 = vset.pattern.permute.xlu0 1
      %3794 = vperm.xlu0 %3793, %v3656
      %v3795 = vpop.permute.xlu0 %3794
      %3798 = vset.pattern.permute.xlu0 1
      %3799 = vperm.xlu0 %3798, %v3657
      %v3800 = vpop.permute.xlu0 %3799
      %3803 = vset.pattern.permute.xlu0 1
      %3804 = vperm.xlu0 %3803, %v3658
      %v3805 = vpop.permute.xlu0 %3804
      %3808 = vset.pattern.permute.xlu0 1
      %3809 = vperm.xlu0 %3808, %v3659
      %v3810 = vpop.permute.xlu0 %3809
      %3813 = vset.pattern.permute.xlu0 1
      %3814 = vperm.xlu0 %3813, %v3660
      %v3815 = vpop.permute.xlu0 %3814
      %3818 = vset.pattern.permute.xlu0 1
      %3819 = vperm.xlu0 %3818, %v3661
      %v3820 = vpop.permute.xlu0 %3819
      %3823 = vset.pattern.permute.xlu0 1
      %3824 = vperm.xlu0 %3823, %v3662
      %v3825 = vpop.permute.xlu0 %3824
      %3828 = vset.pattern.permute.xlu0 1
      %3829 = vperm.xlu0 %3828, %v3663
      %v3830 = vpop.permute.xlu0 %3829
      %3833 = vset.pattern.permute.xlu0 1
      %3834 = vperm.xlu0 %3833, %v3664
      %v3835 = vpop.permute.xlu0 %3834
      %3838 = vset.pattern.permute.xlu0 1
      %3839 = vperm.xlu0 %3838, %v3665
      %v3840 = vpop.permute.xlu0 %3839
      %3843 = vset.pattern.permute.xlu0 1
      %3844 = vperm.xlu0 %3843, %v3666
      %v3845 = vpop.permute.xlu0 %3844
      %3848 = vset.pattern.permute.xlu0 1
      %3849 = vperm.xlu0 %3848, %v3667
      %v3850 = vpop.permute.xlu0 %3849
      %3853 = vset.pattern.permute.xlu0 1
      %3854 = vperm.xlu0 %3853, %v3668
      %v3855 = vpop.permute.xlu0 %3854
      %3858 = vset.pattern.permute.xlu0 1
      %3859 = vperm.xlu0 %3858, %v3669
      %v3860 = vpop.permute.xlu0 %3859
      %3863 = vset.pattern.permute.xlu0 1
      %3864 = vperm.xlu0 %3863, %v3670
      %v3865 = vpop.permute.xlu0 %3864
      %3868 = vset.pattern.permute.xlu0 1
      %3869 = vperm.xlu0 %3868, %v3671
      %v3870 = vpop.permute.xlu0 %3869
      %3873 = vset.pattern.permute.xlu0 1
      %3874 = vperm.xlu0 %3873, %v3672
      %v3875 = vpop.permute.xlu0 %3874
      %3878 = vset.pattern.permute.xlu0 1
      %3879 = vperm.xlu0 %3878, %v3673
      %v3880 = vpop.permute.xlu0 %3879
      %3883 = vset.pattern.permute.xlu0 1
      %3884 = vperm.xlu0 %3883, %v3674
      %v3885 = vpop.permute.xlu0 %3884
      %3888 = vset.pattern.permute.xlu0 1
      %3889 = vperm.xlu0 %3888, %v3675
      %v3890 = vpop.permute.xlu0 %3889
      %3893 = vset.pattern.permute.xlu0 1
      %3894 = vperm.xlu0 %3893, %v3676
      %v3895 = vpop.permute.xlu0 %3894
      %3898 = vset.pattern.permute.xlu0 1
      %3899 = vperm.xlu0 %3898, %v3677
      %v3900 = vpop.permute.xlu0 %3899
      %3903 = vset.pattern.permute.xlu0 1
      %3904 = vperm.xlu0 %3903, %v3678
      %v3905 = vpop.permute.xlu0 %3904
      %3908 = vset.pattern.permute.xlu0 1
      %3909 = vperm.xlu0 %3908, %v3679
      %v3910 = vpop.permute.xlu0 %3909
      %3913 = vset.pattern.permute.xlu0 1
      %3914 = vperm.xlu0 %3913, %v3680
      %v3915 = vpop.permute.xlu0 %3914
      %3918 = vset.pattern.permute.xlu0 1
      %3919 = vperm.xlu0 %3918, %v3681
      %v3920 = vpop.permute.xlu0 %3919
      %v3922 = vmul.f32 %v3725, %v3682
      %v3923 = vmul.f32 %v3730, %v3683
      %v3924 = vmul.f32 %v3735, %v3684
      %v3925 = vmul.f32 %v3740, %v3685
      %v3926 = vmul.f32 %v3745, %v3686
      %v3927 = vmul.f32 %v3750, %v3687
      %v3928 = vmul.f32 %v3755, %v3688
      %v3929 = vmul.f32 %v3760, %v3689
      %v3930 = vmul.f32 %v3765, %v3690
      %v3931 = vmul.f32 %v3770, %v3691
      %v3932 = vmul.f32 %v3775, %v3692
      %v3933 = vmul.f32 %v3780, %v3693
      %v3934 = vmul.f32 %v3785, %v3694
      %v3935 = vmul.f32 %v3790, %v3695
      %v3936 = vmul.f32 %v3795, %v3696
      %v3937 = vmul.f32 %v3800, %v3697
      %v3938 = vmul.f32 %v3805, %v3698
      %v3939 = vmul.f32 %v3810, %v3699
      %v3940 = vmul.f32 %v3815, %v3700
      %v3941 = vmul.f32 %v3820, %v3701
      %v3942 = vmul.f32 %v3825, %v3702
      %v3943 = vmul.f32 %v3830, %v3703
      %v3944 = vmul.f32 %v3835, %v3704
      %v3945 = vmul.f32 %v3840, %v3705
      %v3946 = vmul.f32 %v3845, %v3706
      %v3947 = vmul.f32 %v3850, %v3707
      %v3948 = vmul.f32 %v3855, %v3708
      %v3949 = vmul.f32 %v3860, %v3709
      %v3950 = vmul.f32 %v3865, %v3710
      %v3951 = vmul.f32 %v3870, %v3711
      %v3952 = vmul.f32 %v3875, %v3712
      %v3953 = vmul.f32 %v3880, %v3713
      %v3954 = vmul.f32 %v3885, %v3714
      %v3955 = vmul.f32 %v3890, %v3715
      %v3956 = vmul.f32 %v3895, %v3716
      %v3957 = vmul.f32 %v3900, %v3717
      %v3958 = vmul.f32 %v3905, %v3718
      %v3959 = vmul.f32 %v3910, %v3719
      %v3960 = vmul.f32 %v3915, %v3720
      %v3961 = vmul.f32 %v3920, %v3721
      %v3962 = vpack.c.bf16 %v3923, %v3922
      %v3963 = vpack.c.bf16 %v3925, %v3924
      %v3964 = vpack.c.bf16 %v3927, %v3926
      %v3965 = vpack.c.bf16 %v3929, %v3928
      %v3966 = vpack.c.bf16 %v3931, %v3930
      %v3967 = vpack.c.bf16 %v3933, %v3932
      %v3968 = vpack.c.bf16 %v3935, %v3934
      %v3969 = vpack.c.bf16 %v3937, %v3936
      %v3970 = vpack.c.bf16 %v3939, %v3938
      %v3971 = vpack.c.bf16 %v3941, %v3940
      %v3972 = vpack.c.bf16 %v3943, %v3942
      %v3973 = vpack.c.bf16 %v3945, %v3944
      %v3974 = vpack.c.bf16 %v3947, %v3946
      %v3975 = vpack.c.bf16 %v3949, %v3948
      %v3976 = vpack.c.bf16 %v3951, %v3950
      %v3977 = vpack.c.bf16 %v3953, %v3952
      %v3978 = vpack.c.bf16 %v3955, %v3954
      %v3979 = vpack.c.bf16 %v3957, %v3956
      %v3980 = vpack.c.bf16 %v3959, %v3958
      %v3981 = vpack.c.bf16 %v3961, %v3960
      %v3982 = vld [vmem:[%s4] sm:$0xf]
      %v3983 = vld [vmem:[%s4 + $0x4] sm:$0xf]
      %v3984 = vld [vmem:[%s4 + $0x8] sm:$0xf]
      %v3985 = vld [vmem:[%s4 + $0xc] sm:$0xf]
      %v3986 = vld [vmem:[%s4 + $0x10] sm:$0xf]
      %v3987 = vld [vmem:[%s4 + $0x14] sm:$0xf]
      %v3988 = vld [vmem:[%s4 + $0x18] sm:$0xf]
      %v3989 = vld [vmem:[%s4 + $0x1c] sm:$0xf]
      %v3990 = vld [vmem:[%s4 + $0x20] sm:$0xf]
      %v3991 = vld [vmem:[%s4 + $0x24] sm:$0xf]
      %v3992 = vld [vmem:[%s4 + $0x28] sm:$0xf]
      %v3993 = vld [vmem:[%s4 + $0x2c] sm:$0xf]
      %v3994 = vld [vmem:[%s4 + $0x30] sm:$0xf]
      %v3995 = vld [vmem:[%s4 + $0x34] sm:$0xf]
      %v3996 = vld [vmem:[%s4 + $0x38] sm:$0xf]
      %v3997 = vld [vmem:[%s4 + $0x3c] sm:$0xf]
      %v3998 = vld [vmem:[%s5] sm:$0x1]
      %v4000 = vlaneseq
      %v4001 = vshrl.u32 %v4000, 7
      %v4002 = vsub.s32 0, %v4001
      %v4003 = vrot.slane %v3998, %v4002
      %v4021 = vunpack.c.l.b16 %v3982
      %v4022 = vunpack.c.l.b16 %v3983
      %v4023 = vunpack.c.l.b16 %v3984
      %v4024 = vunpack.c.l.b16 %v3985
      %v4025 = vunpack.c.l.b16 %v3986
      %v4026 = vunpack.c.l.b16 %v3987
      %v4027 = vunpack.c.l.b16 %v3988
      %v4028 = vunpack.c.l.b16 %v3989
      %v4029 = vunpack.c.l.b16 %v3990
      %v4030 = vunpack.c.l.b16 %v3991
      %v4031 = vunpack.c.l.b16 %v3992
      %v4032 = vunpack.c.l.b16 %v3993
      %v4033 = vunpack.c.l.b16 %v3994
      %v4034 = vunpack.c.l.b16 %v3995
      %v4035 = vunpack.c.l.b16 %v3996
      %v4036 = vunpack.c.l.b16 %v3997
      %v4037 = vpack.c.b16 %v4022, %v4021
      %v4038 = vpack.c.b16 %v4024, %v4023
      %v4039 = vpack.c.b16 %v4026, %v4025
      %v4040 = vpack.c.b16 %v4028, %v4027
      %v4041 = vpack.c.b16 %v4030, %v4029
      %v4042 = vpack.c.b16 %v4032, %v4031
      %v4043 = vpack.c.b16 %v4034, %v4033
      %v4044 = vpack.c.b16 %v4036, %v4035
      %4053 = vmatprep.subr.bf16.mxu0 0
      %4054 = vmatpush1.bf16.msra.mxu0 %v4037
      %4055 = vmatprep.subr.bf16.mxu0 0
      %4056 = vmatpush1.bf16.msra.mxu0 %v4038
      %4057 = vmatprep.subr.bf16.mxu0 0
      %4058 = vmatpush1.bf16.msra.mxu0 %v4039
      %4059 = vmatprep.subr.bf16.mxu0 0
      %4060 = vmatpush1.bf16.msra.mxu0 %v4040
      %4061 = vmatprep.subr.bf16.mxu0 0
      %4062 = vmatpush1.bf16.msra.mxu0 %v4041
      %4063 = vmatprep.subr.bf16.mxu0 0
      %4064 = vmatpush1.bf16.msra.mxu0 %v4042
      %4065 = vmatprep.subr.bf16.mxu0 0
      %4066 = vmatpush1.bf16.msra.mxu0 %v4043
      %4067 = vmatprep.subr.bf16.mxu0 0
      %4068 = vmatpush1.bf16.msra.mxu0 %v4044
      %4069 = vmatprep.subr.bf16.mxu0 0
      %4070 = vmatpush1.bf16.msra.mxu0 0
      %4071 = vmatprep.subr.bf16.mxu0 0
      %4072 = vmatpush1.bf16.msra.mxu0 0
      %4073 = vmatprep.subr.bf16.mxu0 0
      %4074 = vmatpush1.bf16.msra.mxu0 0
      %4075 = vmatprep.subr.bf16.mxu0 0
      %4076 = vmatpush1.bf16.msra.mxu0 0
      %4077 = vmatprep.subr.bf16.mxu0 0
      %4078 = vmatpush1.bf16.msra.mxu0 0
      %4079 = vmatprep.subr.bf16.mxu0 0
      %4080 = vmatpush1.bf16.msra.mxu0 0
      %4081 = vmatprep.subr.bf16.mxu0 0
      %4082 = vmatpush1.bf16.msra.mxu0 0
      %4083 = vmatprep.subr.bf16.mxu0 0
      %4084 = vmatpush1.bf16.msra.mxu0 0
      %4085 = vmatprep.mubr.bf16.mxu0 0
      %4086 = vmatmul.mubr.bf16.gmra.mrb[0].mxu0 %v3962
      %v4087 = vpop.f32.mrb[0].mxu0
      %v4088 = vadd.f32 %v4003, %v4087
      %v4089 = vpop.f32.mrb[0].mxu0
      %v4090 = vpop.f32.mrb[0].mxu0
      %v4091 = vadd.f32 %v4003, %v4090
      %v4092 = vpop.f32.mrb[0].mxu0
      %4093 = vmatprep.mubr.bf16.mxu0 0
      %4094 = vmatmul.mubr.bf16.gmra.mrb[0].mxu0 %v3963
      %v4095 = vpop.f32.mrb[0].mxu0
      %v4096 = vadd.f32 %v4003, %v4095
      %v4097 = vpop.f32.mrb[0].mxu0
      %v4098 = vpop.f32.mrb[0].mxu0
      %v4099 = vadd.f32 %v4003, %v4098
      %v4100 = vpop.f32.mrb[0].mxu0
      %4101 = vmatprep.mubr.bf16.mxu0 0
      %4102 = vmatmul.mubr.bf16.gmra.mrb[0].mxu0 %v3964
      %v4103 = vpop.f32.mrb[0].mxu0
      %v4104 = vadd.f32 %v4003, %v4103
      %v4105 = vpop.f32.mrb[0].mxu0
      %v4106 = vpop.f32.mrb[0].mxu0
      %v4107 = vadd.f32 %v4003, %v4106
      %v4108 = vpop.f32.mrb[0].mxu0
      %4109 = vmatprep.mubr.bf16.mxu0 0
      %4110 = vmatmul.mubr.bf16.gmra.mrb[0].mxu0 %v3965
      %v4111 = vpop.f32.mrb[0].mxu0
      %v4112 = vadd.f32 %v4003, %v4111
      %v4113 = vpop.f32.mrb[0].mxu0
      %v4114 = vpop.f32.mrb[0].mxu0
      %v4115 = vadd.f32 %v4003, %v4114
      %v4116 = vpop.f32.mrb[0].mxu0
      %4117 = vmatprep.mubr.bf16.mxu0 0
      %4118 = vmatmul.mubr.bf16.gmra.mrb[0].mxu0 %v3966
      %v4119 = vpop.f32.mrb[0].mxu0
      %v4120 = vadd.f32 %v4003, %v4119
      %v4121 = vpop.f32.mrb[0].mxu0
      %v4122 = vpop.f32.mrb[0].mxu0
      %v4123 = vadd.f32 %v4003, %v4122
      %v4124 = vpop.f32.mrb[0].mxu0
      %4125 = vmatprep.mubr.bf16.mxu0 0
      %4126 = vmatmul.mubr.bf16.gmra.mrb[0].mxu0 %v3967
      %v4127 = vpop.f32.mrb[0].mxu0
      %v4128 = vadd.f32 %v4003, %v4127
      %v4129 = vpop.f32.mrb[0].mxu0
      %v4130 = vpop.f32.mrb[0].mxu0
      %v4131 = vadd.f32 %v4003, %v4130
      %v4132 = vpop.f32.mrb[0].mxu0
      %4133 = vmatprep.mubr.bf16.mxu0 0
      %4134 = vmatmul.mubr.bf16.gmra.mrb[0].mxu0 %v3968
      %v4135 = vpop.f32.mrb[0].mxu0
      %v4136 = vadd.f32 %v4003, %v4135
      %v4137 = vpop.f32.mrb[0].mxu0
      %v4138 = vpop.f32.mrb[0].mxu0
      %v4139 = vadd.f32 %v4003, %v4138
      %v4140 = vpop.f32.mrb[0].mxu0
      %4141 = vmatprep.mubr.bf16.mxu0 0
      %4142 = vmatmul.mubr.bf16.gmra.mrb[0].mxu0 %v3969
      %v4143 = vpop.f32.mrb[0].mxu0
      %v4144 = vadd.f32 %v4003, %v4143
      %v4145 = vpop.f32.mrb[0].mxu0
      %v4146 = vpop.f32.mrb[0].mxu0
      %v4147 = vadd.f32 %v4003, %v4146
      %v4148 = vpop.f32.mrb[0].mxu0
      %4149 = vmatprep.mubr.bf16.mxu0 0
      %4150 = vmatmul.mubr.bf16.gmra.mrb[0].mxu0 %v3970
      %v4151 = vpop.f32.mrb[0].mxu0
      %v4152 = vadd.f32 %v4003, %v4151
      %v4153 = vpop.f32.mrb[0].mxu0
      %v4154 = vpop.f32.mrb[0].mxu0
      %v4155 = vadd.f32 %v4003, %v4154
      %v4156 = vpop.f32.mrb[0].mxu0
      %4157 = vmatprep.mubr.bf16.mxu0 0
      %4158 = vmatmul.mubr.bf16.gmra.mrb[0].mxu0 %v3971
      %v4159 = vpop.f32.mrb[0].mxu0
      %v4160 = vadd.f32 %v4003, %v4159
      %v4161 = vpop.f32.mrb[0].mxu0
      %v4162 = vpop.f32.mrb[0].mxu0
      %v4163 = vadd.f32 %v4003, %v4162
      %v4164 = vpop.f32.mrb[0].mxu0
      %4165 = vmatprep.mubr.bf16.mxu0 0
      %4166 = vmatmul.mubr.bf16.gmra.mrb[0].mxu0 %v3972
      %v4167 = vpop.f32.mrb[0].mxu0
      %v4168 = vadd.f32 %v4003, %v4167
      %v4169 = vpop.f32.mrb[0].mxu0
      %v4170 = vpop.f32.mrb[0].mxu0
      %v4171 = vadd.f32 %v4003, %v4170
      %v4172 = vpop.f32.mrb[0].mxu0
      %4173 = vmatprep.mubr.bf16.mxu0 0
      %4174 = vmatmul.mubr.bf16.gmra.mrb[0].mxu0 %v3973
      %v4175 = vpop.f32.mrb[0].mxu0
      %v4176 = vadd.f32 %v4003, %v4175
      %v4177 = vpop.f32.mrb[0].mxu0
      %v4178 = vpop.f32.mrb[0].mxu0
      %v4179 = vadd.f32 %v4003, %v4178
      %v4180 = vpop.f32.mrb[0].mxu0
      %4181 = vmatprep.mubr.bf16.mxu0 0
      %4182 = vmatmul.mubr.bf16.gmra.mrb[0].mxu0 %v3974
      %v4183 = vpop.f32.mrb[0].mxu0
      %v4184 = vadd.f32 %v4003, %v4183
      %v4185 = vpop.f32.mrb[0].mxu0
      %v4186 = vpop.f32.mrb[0].mxu0
      %v4187 = vadd.f32 %v4003, %v4186
      %v4188 = vpop.f32.mrb[0].mxu0
      %4189 = vmatprep.mubr.bf16.mxu0 0
      %4190 = vmatmul.mubr.bf16.gmra.mrb[0].mxu0 %v3975
      %v4191 = vpop.f32.mrb[0].mxu0
      %v4192 = vadd.f32 %v4003, %v4191
      %v4193 = vpop.f32.mrb[0].mxu0
      %v4194 = vpop.f32.mrb[0].mxu0
      %v4195 = vadd.f32 %v4003, %v4194
      %v4196 = vpop.f32.mrb[0].mxu0
      %4197 = vmatprep.mubr.bf16.mxu0 0
      %4198 = vmatmul.mubr.bf16.gmra.mrb[0].mxu0 %v3976
      %v4199 = vpop.f32.mrb[0].mxu0
      %v4200 = vadd.f32 %v4003, %v4199
      %v4201 = vpop.f32.mrb[0].mxu0
      %v4202 = vpop.f32.mrb[0].mxu0
      %v4203 = vadd.f32 %v4003, %v4202
      %v4204 = vpop.f32.mrb[0].mxu0
      %4205 = vmatprep.mubr.bf16.mxu0 0
      %4206 = vmatmul.mubr.bf16.gmra.mrb[0].mxu0 %v3977
      %v4207 = vpop.f32.mrb[0].mxu0
      %v4208 = vadd.f32 %v4003, %v4207
      %v4209 = vpop.f32.mrb[0].mxu0
      %v4210 = vpop.f32.mrb[0].mxu0
      %v4211 = vadd.f32 %v4003, %v4210
      %v4212 = vpop.f32.mrb[0].mxu0
      %4213 = vmatprep.mubr.bf16.mxu0 0
      %4214 = vmatmul.mubr.bf16.gmra.mrb[0].mxu0 %v3978
      %v4215 = vpop.f32.mrb[0].mxu0
      %v4216 = vadd.f32 %v4003, %v4215
      %v4217 = vpop.f32.mrb[0].mxu0
      %v4218 = vpop.f32.mrb[0].mxu0
      %v4219 = vadd.f32 %v4003, %v4218
      %v4220 = vpop.f32.mrb[0].mxu0
      %4221 = vmatprep.mubr.bf16.mxu0 0
      %4222 = vmatmul.mubr.bf16.gmra.mrb[0].mxu0 %v3979
      %v4223 = vpop.f32.mrb[0].mxu0
      %v4224 = vadd.f32 %v4003, %v4223
      %v4225 = vpop.f32.mrb[0].mxu0
      %v4226 = vpop.f32.mrb[0].mxu0
      %v4227 = vadd.f32 %v4003, %v4226
      %v4228 = vpop.f32.mrb[0].mxu0
      %4229 = vmatprep.mubr.bf16.mxu0 0
      %4230 = vmatmul.mubr.bf16.gmra.mrb[0].mxu0 %v3980
      %v4231 = vpop.f32.mrb[0].mxu0
      %v4232 = vadd.f32 %v4003, %v4231
      %v4233 = vpop.f32.mrb[0].mxu0
      %v4234 = vpop.f32.mrb[0].mxu0
      %v4235 = vadd.f32 %v4003, %v4234
      %v4236 = vpop.f32.mrb[0].mxu0
      %4237 = vmatprep.mubr.bf16.mxu0 0
      %4238 = vmatmul.mubr.bf16.gmra.mrb[0].mxu0 %v3981
      %v4239 = vpop.f32.mrb[0].mxu0
      %v4240 = vadd.f32 %v4003, %v4239
      %v4241 = vpop.f32.mrb[0].mxu0
      %v4242 = vpop.f32.mrb[0].mxu0
      %v4243 = vadd.f32 %v4003, %v4242
      %v4244 = vpop.f32.mrb[0].mxu0
      %4245 = vdwg.mxu0
      %4246 = vst [vmem:[#allocation2] sm:$0xff] %v4088
      %4247 = vst [vmem:[#allocation2 + $0x8] sm:$0xff] %v4091
      %4248 = vst [vmem:[#allocation2 + $0x10] sm:$0xff] %v4096
      %4249 = vst [vmem:[#allocation2 + $0x18] sm:$0xff] %v4099
      %4250 = vst [vmem:[#allocation2 + $0x20] sm:$0xff] %v4104
      %4251 = vst [vmem:[#allocation2 + $0x28] sm:$0xff] %v4107
      %4252 = vst [vmem:[#allocation2 + $0x30] sm:$0xff] %v4112
      %4253 = vst [vmem:[#allocation2 + $0x38] sm:$0xff] %v4115
      %4254 = vst [vmem:[#allocation2 + $0x40] sm:$0xff] %v4120
      %4255 = vst [vmem:[#allocation2 + $0x48] sm:$0xff] %v4123
      %4256 = vst [vmem:[#allocation2 + $0x50] sm:$0xff] %v4128
      %4257 = vst [vmem:[#allocation2 + $0x58] sm:$0xff] %v4131
      %4258 = vst [vmem:[#allocation2 + $0x60] sm:$0xff] %v4136
      %4259 = vst [vmem:[#allocation2 + $0x68] sm:$0xff] %v4139
      %4260 = vst [vmem:[#allocation2 + $0x70] sm:$0xff] %v4144
      %4261 = vst [vmem:[#allocation2 + $0x78] sm:$0xff] %v4147
      %4262 = vst [vmem:[#allocation2 + $0x80] sm:$0xff] %v4152
      %4263 = vst [vmem:[#allocation2 + $0x88] sm:$0xff] %v4155
      %4264 = vst [vmem:[#allocation2 + $0x90] sm:$0xff] %v4160
      %4265 = vst [vmem:[#allocation2 + $0x98] sm:$0xff] %v4163
      %4266 = vst [vmem:[#allocation2 + $0xa0] sm:$0xff] %v4168
      %4267 = vst [vmem:[#allocation2 + $0xa8] sm:$0xff] %v4171
      %4268 = vst [vmem:[#allocation2 + $0xb0] sm:$0xff] %v4176
      %4269 = vst [vmem:[#allocation2 + $0xb8] sm:$0xff] %v4179
      %4270 = vst [vmem:[#allocation2 + $0xc0] sm:$0xff] %v4184
      %4271 = vst [vmem:[#allocation2 + $0xc8] sm:$0xff] %v4187
      %4272 = vst [vmem:[#allocation2 + $0xd0] sm:$0xff] %v4192
      %4273 = vst [vmem:[#allocation2 + $0xd8] sm:$0xff] %v4195
      %4274 = vst [vmem:[#allocation2 + $0xe0] sm:$0xff] %v4200
      %4275 = vst [vmem:[#allocation2 + $0xe8] sm:$0xff] %v4203
      %4276 = vst [vmem:[#allocation2 + $0xf0] sm:$0xff] %v4208
      %4277 = vst [vmem:[#allocation2 + $0xf8] sm:$0xff] %v4211
      %4278 = vst [vmem:[#allocation2 + $0x100] sm:$0xff] %v4216
      %4279 = vst [vmem:[#allocation2 + $0x108] sm:$0xff] %v4219
      %4280 = vst [vmem:[#allocation2 + $0x110] sm:$0xff] %v4224
      %4281 = vst [vmem:[#allocation2 + $0x118] sm:$0xff] %v4227
      %4282 = vst [vmem:[#allocation2 + $0x120] sm:$0xff] %v4232
      %4283 = vst [vmem:[#allocation2 + $0x128] sm:$0xff] %v4235
      %4284 = vst [vmem:[#allocation2 + $0x130] sm:$0xff] %v4240
      %4285 = vst [vmem:[#allocation2 + $0x138] sm:$0xff] %v4243
    $region33: #{adapt_sage_conv.1} parent=1 // pred_fallthru
      _
    // Predicated region
    $region34: #{adapt_sage_conv.1} parent=1 // pred_check
      _
    $region35: #{adapt_sage_conv.1} parent=1 // pred_check_branch
      %4287 = sbr.rel (0) target = $region37
    $region36: #{adapt_sage_conv.1} parent=1 // pred_region
      %s4289 = ssub.s32 5120, 5120
      %4290 = vsyncadd [#allocation3], %s4289
      %s4291 = sshll.u32 [#allocation2], 4
      %s4292 = int_to_ptr.vmem [resolvable:$true] %s4291
      %4297 = dma.vmem_to_hbm [thread:$0]  %s4292, 5120, %s6, [#allocation3], 128, 128, 8
    $region37: #{adapt_sage_conv.1} parent=1 // pred_fallthru
      _
    // Predicated region
    $region38: #{adapt_sage_conv.1} parent=1 // pred_check
      _
    $region39: #{adapt_sage_conv.1} parent=1 // pred_check_branch
      %4299 = sbr.rel (0) target = $region41
    $region40: #{adapt_sage_conv.1} parent=1 // pred_region
      %4300 = dma.done [#allocation3], 5120
    $region41: #{adapt_sage_conv.1} parent=1 // pred_fallthru
      _
    %4301 = vsyncpa [#allocation3], 1

</llo_original>
